<compile_context>
chip_gen: v6e
topology: v6e:2x2x1
jax: 0.10.0
libtpu: 0.0.40
codegen_flags: <defaults>
</compile_context>

<pallas_src>
import numpy as np

import jax
import jax.numpy as jnp
from jax import lax
from jax.experimental import pallas as pl
from jax.experimental.pallas import tpu as pltpu

EPS = 1e-5


# ----------------------------------------------------------------------------
# Fused FishBlock kernel (channel-first (C, L) layout, L = NB*H*W on lanes)
# ----------------------------------------------------------------------------
def _make_fish_block_kernel(W, L, mid, resize_identity, pool):

  def kernel(*refs):
    (x_ref, s1_ref, b1_ref, w1_ref, s2_ref, b2_ref, w2c_ref,
     s3_ref, b3_ref, masks_ref) = refs[:10]
    i = 10
    if resize_identity:
      sid_ref, bid_ref, wm_ref = refs[i:i + 3]
      i += 3
    else:
      w3_ref = refs[i]
      i += 1
    if pool:
      sel_ref = refs[i]
      i += 1
    o_ref = refs[i]
    cols_ref = refs[i + 1]            # VMEM scratch (9*mid, L) bf16

    x = x_ref[0]                                              # (Cin, L) f32

    # ---- conv1: BN1 -> ReLU -> 1x1 (bf16 operands, f32 accumulate) ----
    a1 = jnp.maximum(x * s1_ref[...] + b1_ref[...], 0.0)
    y1 = jnp.dot(w1_ref[...], a1.astype(jnp.bfloat16),
                 preferred_element_type=jnp.float32)          # (mid, L)

    # ---- conv2: BN2 -> ReLU -> 3x3 (pad=1) as im2col + ONE matmul ----
    # Taps are written straight into the cols scratch (no list + concat copy);
    # the center tap has an all-ones mask, so its multiply is skipped.
    y1 = jnp.maximum(y1 * s2_ref[...] + b2_ref[...], 0.0)
    masks = masks_ref[...]                                    # (9, L) 0/1 f32
    for kh in range(3):
      for kw in range(3):
        t = kh * 3 + kw
        d = (kh - 1) * W + (kw - 1)            # flat offset of this tap
        if d == 0:
          tap = y1
        else:
          tap = pltpu.roll(y1, shift=(-d) % L, axis=1) * masks[t:t + 1, :]
        cols_ref[t * mid:(t + 1) * mid, :] = tap.astype(jnp.bfloat16)
    y2 = jnp.dot(w2c_ref[...], cols_ref[...],
                 preferred_element_type=jnp.float32)          # (mid, L)

    # ---- conv3 (+ identity conv) fused into one GEMM / GEMM + VPU add ----
    a3 = jnp.maximum(y2 * s3_ref[...] + b3_ref[...], 0.0)
    if resize_identity:
      aid = jnp.maximum(x * sid_ref[...] + bid_ref[...], 0.0)
      a_cat = jnp.concatenate(
          [a3.astype(jnp.bfloat16), aid.astype(jnp.bfloat16)], axis=0)
      out = jnp.dot(wm_ref[...], a_cat,
                    preferred_element_type=jnp.float32)       # body + identity
    else:
      out = jnp.dot(w3_ref[...], a3.astype(jnp.bfloat16),
                    preferred_element_type=jnp.float32) + x   # Cin == Cout

    if pool:
      # Fused MaxPool2d(2,2): neighbour maxima via cyclic lane rolls; the bf16
      # 0/1 selection matmul keeps only even-(h,w) window corners, so wrapped
      # or cross-sample lanes are never selected.
      r1 = pltpu.roll(out, shift=L - 1, axis=1)               # out[i + 1]
      rw = pltpu.roll(out, shift=L - W, axis=1)               # out[i + W]
      rw1 = pltpu.roll(out, shift=L - W - 1, axis=1)          # out[i + W + 1]
      m = jnp.maximum(jnp.maximum(out, r1), jnp.maximum(rw, rw1))
      o_ref[0] = jnp.dot(m.astype(jnp.bfloat16), sel_ref[...],
                         preferred_element_type=jnp.float32)  # (Cout, Lo)
    else:
      o_ref[0] = out

  return kernel


# ----------------------------------------------------------------------------
# Host-side helpers
# ----------------------------------------------------------------------------
def _fold_bn(p):
  s = p["gamma"] / jnp.sqrt(p["var"] + EPS)
  b = p["beta"] - p["mean"] * s
  return (s.reshape(-1, 1).astype(jnp.float32),
          b.reshape(-1, 1).astype(jnp.float32))


def _const_spec(shape):
  zeros = (0,) * len(shape)
  return pl.BlockSpec(shape, lambda g, _z=zeros: _z)


def _tap_masks(H, W, NB):
  """Per-tap validity masks of the zero-padded 3x3 window, tiled per sample."""
  P = H * W
  hh, ww = np.meshgrid(np.arange(H), np.arange(W), indexing="ij")
  hh, ww = hh.reshape(-1), ww.reshape(-1)
  masks = np.zeros((9, P), np.float32)
  for kh in range(3):
    for kw in range(3):
      dh, dw = kh - 1, kw - 1
      ok = (hh + dh >= 0) & (hh + dh < H) & (ww + dw >= 0) & (ww + dw < W)
      masks[kh * 3 + kw] = ok.astype(np.float32)
  return jnp.asarray(np.tile(masks, (1, NB)))                 # (9, NB*P)


def _pool_selector(H, W, NB):
  """Block-diagonal 0/1 selector picking each 2x2 window's top-left corner."""
  P, Ho, Wo = H * W, H // 2, W // 2
  Po = Ho * Wo
  sel = np.zeros((NB * P, NB * Po), np.float32)
  j = np.arange(Po)
  rows = 2 * (j // Wo) * W + 2 * (j % Wo)
  for s in range(NB):
    sel[s * P + rows, s * Po + j] = 1.0
  return jnp.asarray(sel, dtype=jnp.bfloat16)                 # 0/1 exact in bf16


# ----------------------------------------------------------------------------
# pallas_call wrapper for one FishBlock (optionally with fused 2x2 max-pool)
# ----------------------------------------------------------------------------
def fish_block_fused(x_cl, p, H, W, NB, pool):
  """x_cl: (G, Cin, NB*H*W) f32 -> (G, Cout, NB*H*W) or (G, Cout, NB*Po)."""
  G, cin, L = x_cl.shape
  P = H * W
  assert L == NB * P
  out_ch = p["w3"].shape[0]
  mid = out_ch // 4
  resize = cin != out_ch

  s1, b1 = _fold_bn(p["bn1"])
  s2, b2 = _fold_bn(p["bn2"])
  s3, b3 = _fold_bn(p["bn3"])
  w1 = p["w1"].astype(jnp.bfloat16)                                # (mid, cin)
  # (O, I, 3, 3) -> (O, 9*I) with contraction order [tap, channel]
  w2c = jnp.transpose(p["w2"], (0, 2, 3, 1)).reshape(
      mid, 9 * mid).astype(jnp.bfloat16)
  masks = _tap_masks(H, W, NB)

  args = [x_cl, s1, b1, w1, s2, b2, w2c, s3, b3, masks]
  in_specs = [
      pl.BlockSpec((1, cin, L), lambda g: (g, 0, 0)),
      _const_spec((cin, 1)), _const_spec((cin, 1)),
      _const_spec((mid, cin)),
      _const_spec((mid, 1)), _const_spec((mid, 1)),
      _const_spec((mid, 9 * mid)),
      _const_spec((mid, 1)), _const_spec((mid, 1)),
      _const_spec((9, L)),
  ]

  if resize:
    sid, bid = _fold_bn(p["bnid"])
    # conv3 and identity-conv merged into one (out, mid+cin) GEMM; the
    # residual add folds into the MXU accumulation.
    wm = jnp.concatenate([p["w3"], p["wid"]], axis=1).astype(jnp.bfloat16)
    args += [sid, bid, wm]
    in_specs += [_const_spec((cin, 1)), _const_spec((cin, 1)),
                 _const_spec((out_ch, mid + cin))]
  else:
    args.append(p["w3"].astype(jnp.bfloat16))
    in_specs.append(_const_spec((out_ch, mid)))

  if pool:
    l_out = NB * (H // 2) * (W // 2)
    args.append(_pool_selector(H, W, NB))
    in_specs.append(_const_spec((L, l_out)))
  else:
    l_out = L

  kernel = _make_fish_block_kernel(W, L, mid, resize, pool)
  return pl.pallas_call(
      kernel,
      out_shape=jax.ShapeDtypeStruct((G, out_ch, l_out), jnp.float32),
      grid_spec=pltpu.PrefetchScalarGridSpec(
          num_scalar_prefetch=0,
          grid=(G,),
          in_specs=in_specs,
          out_specs=pl.BlockSpec((1, out_ch, l_out), lambda g: (g, 0, 0)),
          scratch_shapes=[pltpu.VMEM((9 * mid, L), jnp.bfloat16)],
      ),
      compiler_params=pltpu.CompilerParams(
          dimension_semantics=("parallel",),
          vmem_limit_bytes=32 * 1024 * 1024),
  )(*args)


# ----------------------------------------------------------------------------
# DownUnit forward (NCHW in / NCHW out)
# ----------------------------------------------------------------------------
def _samples_per_block(n, p_out):
  # Smallest group of samples that makes the pooled output lane-dense
  # (last dim a multiple of 128); also widens every GEMM's N dimension.
  for d in range(1, n + 1):
    if n % d == 0 and (d * p_out) % 128 == 0:
      return d
  return n


def down_unit_forward(x_nchw, params_list):
  x = x_nchw.astype(jnp.float32)
  N, C, H, W = x.shape
  assert H % 2 == 0 and W % 2 == 0
  P = H * W
  Ho, Wo = H // 2, W // 2
  NB = _samples_per_block(N, Ho * Wo)
  G = N // NB
  # Channel-first slabs with NB samples batched along the lane axis:
  # (N,C,H,W) -> (G, C, NB*H*W). Per-tap masks are tiled per sample, so the
  # in-kernel lane rolls never leak data across sample boundaries.
  x = x.reshape(G, NB, C, P).transpose(0, 2, 1, 3).reshape(G, C, NB * P)
  n_blocks = len(params_list)
  for i, p in enumerate(params_list):
    pool = (i == n_blocks - 1)        # fuse MaxPool2d(2,2) into the last block
    x = fish_block_fused(x, p, H, W, NB, pool)
  out_ch = x.shape[1]
  return (x.reshape(G, out_ch, NB, Ho * Wo)
            .transpose(0, 2, 1, 3)
            .reshape(N, out_ch, Ho, Wo))


# ----------------------------------------------------------------------------
# Pure-JAX reference (mirrors the PyTorch module, eval-mode BN).
# matmul_dtype=bfloat16 mirrors the kernel's bf16-operand / f32-acc matmuls so
# the check isolates kernel logic.
# ----------------------------------------------------------------------------
def _ref_bn_relu(v, p):
  s = p["gamma"] / jnp.sqrt(p["var"] + EPS)
  sh = p["beta"] - p["mean"] * s
  return jnp.maximum(v * s[None, :, None, None] + sh[None, :, None, None], 0.0)


def _ref_conv(v, w, padding=0, matmul_dtype=jnp.float32):
  return lax.conv_general_dilated(
      v.astype(matmul_dtype), w.astype(matmul_dtype),
      (1, 1), ((padding, padding), (padding, padding)),
      dimension_numbers=("NCHW", "OIHW", "NCHW"),
      preferred_element_type=jnp.float32,
      precision=lax.Precision.HIGHEST)


def ref_fish_block(x, p, matmul_dtype):
  in_ch = x.shape[1]
  out_ch = p["w3"].shape[0]
  if in_ch != out_ch:
    identity = _ref_conv(_ref_bn_relu(x, p["bnid"]), p["wid"][:, :, None, None],
                         matmul_dtype=matmul_dtype)
  else:
    identity = x
  y = _ref_conv(_ref_bn_relu(x, p["bn1"]), p["w1"][:, :, None, None],
                matmul_dtype=matmul_dtype)
  y = _ref_conv(_ref_bn_relu(y, p["bn2"]), p["w2"], padding=1,
                matmul_dtype=matmul_dtype)
  y = _ref_conv(_ref_bn_relu(y, p["bn3"]), p["w3"][:, :, None, None],
                matmul_dtype=matmul_dtype)
  return y + identity


def ref_down_unit(x, params_list, matmul_dtype=jnp.float32):
  y = x.astype(jnp.float32)
  for p in params_list:
    y = ref_fish_block(y, p, matmul_dtype)
  return lax.reduce_window(y, -jnp.inf, lax.max,
                           (1, 1, 2, 2), (1, 1, 2, 2), "VALID")


# ----------------------------------------------------------------------------
# Deterministic parameter init
# ----------------------------------------------------------------------------
def init_block_params(key, in_channels, out_channels):
  mid = out_channels // 4
  resize = in_channels != out_channels
  keys = jax.random.split(key, 8)

  def bn(k, c):
    k1, k2, k3, k4 = jax.random.split(k, 4)
    return {"gamma": jax.random.uniform(k1, (c,), jnp.float32, 0.5, 1.5),
            "beta": 0.1 * jax.random.normal(k2, (c,), jnp.float32),
            "mean": 0.1 * jax.random.normal(k3, (c,), jnp.float32),
            "var": jax.random.uniform(k4, (c,), jnp.float32, 0.5, 1.5)}

  p = {
      "bn1": bn(keys[0], in_channels),
      "w1": 0.2 * jax.random.normal(keys[1], (mid, in_channels), jnp.float32),
      "bn2": bn(keys[2], mid),
      "w2": 0.2 * jax.random.normal(keys[3], (mid, mid, 3, 3), jnp.float32),
      "bn3": bn(keys[4], mid),
      "w3": 0.2 * jax.random.normal(keys[5], (out_channels, mid), jnp.float32),
  }
  if resize:
    p["bnid"] = bn(keys[6], in_channels)
    p["wid"] = 0.2 * jax.random.normal(keys[7], (out_channels, in_channels),
                                       jnp.float32)
  return p


# ----------------------------------------------------------------------------
if __name__ == "__main__":
  key = jax.random.PRNGKey(0)
  N, H, W = 2, 16, 16
  in_channels = 32
  out_channels_list = [64, 64]   # first block resizes identity, second passthrough

  params_list = []
  cin = in_channels
  for oc in out_channels_list:
    key, kp = jax.random.split(key)
    params_list.append(init_block_params(kp, cin, oc))
    cin = oc
  key, kx = jax.random.split(key)
  x = jax.random.normal(kx, (N, in_channels, H, W), jnp.float32)

  out = jax.jit(down_unit_forward)(x, params_list)
  out = jax.block_until_ready(out)

  ref = ref_down_unit(x, params_list, matmul_dtype=jnp.bfloat16)
  # atol slightly above 1e-2 to cover the bf16 rounding of the fused pooling.
  np.testing.assert_allclose(np.asarray(out), np.asarray(ref),
                             rtol=1e-2, atol=2e-2)
  print("KERNEL_OK")
</pallas_src>

<mosaic_0001>
module attributes {stable_mosaic.version = 11 : i64} {
  func.func @kernel(%arg0: i32, %arg1: memref<1x64x512xf32, #tpu.memory_space<vmem>>, %arg2: memref<64x1xf32, #tpu.memory_space<vmem>>, %arg3: memref<64x1xf32, #tpu.memory_space<vmem>>, %arg4: memref<16x64xbf16, #tpu.memory_space<vmem>>, %arg5: memref<16x1xf32, #tpu.memory_space<vmem>>, %arg6: memref<16x1xf32, #tpu.memory_space<vmem>>, %arg7: memref<16x144xbf16, #tpu.memory_space<vmem>>, %arg8: memref<16x1xf32, #tpu.memory_space<vmem>>, %arg9: memref<16x1xf32, #tpu.memory_space<vmem>>, %arg10: memref<9x512xf32, #tpu.memory_space<vmem>>, %arg11: memref<64x16xbf16, #tpu.memory_space<vmem>>, %arg12: memref<512x128xbf16, #tpu.memory_space<vmem>>, %arg13: memref<1x64x128xf32, #tpu.memory_space<vmem>>, %arg14: memref<144x512xbf16, #tpu.memory_space<vmem>>) attributes {dimension_semantics = [#tpu.dimension_semantics<parallel>], iteration_bounds = array<i64: 1>, scalar_prefetch = 0 : i64, scratch_operands = 1 : i64, tpu.core_type = #tpu.core_type<tc>, window_params = [{transform_indices = @transform_0, window_bounds = array<i64: 1, 64, 512>}, {pipeline_mode = #tpu.pipeline_mode<synchronous>, transform_indices = @transform_1, window_bounds = array<i64: 64, 1>}, {pipeline_mode = #tpu.pipeline_mode<synchronous>, transform_indices = @transform_2, window_bounds = array<i64: 64, 1>}, {pipeline_mode = #tpu.pipeline_mode<synchronous>, transform_indices = @transform_3, window_bounds = array<i64: 16, 64>}, {pipeline_mode = #tpu.pipeline_mode<synchronous>, transform_indices = @transform_4, window_bounds = array<i64: 16, 1>}, {pipeline_mode = #tpu.pipeline_mode<synchronous>, transform_indices = @transform_5, window_bounds = array<i64: 16, 1>}, {pipeline_mode = #tpu.pipeline_mode<synchronous>, transform_indices = @transform_6, window_bounds = array<i64: 16, 144>}, {pipeline_mode = #tpu.pipeline_mode<synchronous>, transform_indices = @transform_7, window_bounds = array<i64: 16, 1>}, {pipeline_mode = #tpu.pipeline_mode<synchronous>, transform_indices = @transform_8, window_bounds = array<i64: 16, 1>}, {pipeline_mode = #tpu.pipeline_mode<synchronous>, transform_indices = @transform_9, window_bounds = array<i64: 9, 512>}, {pipeline_mode = #tpu.pipeline_mode<synchronous>, transform_indices = @transform_10, window_bounds = array<i64: 64, 16>}, {pipeline_mode = #tpu.pipeline_mode<synchronous>, transform_indices = @transform_11, window_bounds = array<i64: 512, 128>}, {transform_indices = @transform_12, window_bounds = array<i64: 1, 64, 128>}]} {
    %c0 = arith.constant 0 : index
    %c0_0 = arith.constant 0 : index
    %c0_1 = arith.constant 0 : index
    %0 = vector.load %arg1[%c0, %c0_0, %c0_1] : memref<1x64x512xf32, #tpu.memory_space<vmem>>, vector<1x64x512xf32>
    %1 = vector.shape_cast %0 : vector<1x64x512xf32> to vector<64x512xf32>
    %c0_2 = arith.constant 0 : index
    %c0_3 = arith.constant 0 : index
    %2 = vector.load %arg2[%c0_2, %c0_3] : memref<64x1xf32, #tpu.memory_space<vmem>>, vector<64x1xf32>
    %3 = vector.broadcast %2 : vector<64x1xf32> to vector<64x512xf32>
    %4 = arith.mulf %1, %3 : vector<64x512xf32>
    %c0_4 = arith.constant 0 : index
    %c0_5 = arith.constant 0 : index
    %5 = vector.load %arg3[%c0_4, %c0_5] : memref<64x1xf32, #tpu.memory_space<vmem>>, vector<64x1xf32>
    %6 = vector.broadcast %5 : vector<64x1xf32> to vector<64x512xf32>
    %7 = arith.addf %4, %6 : vector<64x512xf32>
    %cst = arith.constant 0.000000e+00 : f32
    %8 = vector.broadcast %cst : f32 to vector<64x512xf32>
    %9 = arith.maximumf %7, %8 : vector<64x512xf32>
    %c0_6 = arith.constant 0 : index
    %c0_7 = arith.constant 0 : index
    %10 = vector.load %arg4[%c0_6, %c0_7] : memref<16x64xbf16, #tpu.memory_space<vmem>>, vector<16x64xbf16>
    %11 = arith.truncf %9 : vector<64x512xf32> to vector<64x512xbf16>
    %cst_8 = arith.constant dense<0.000000e+00> : vector<16x512xf32>
    %12 = tpu.matmul %10, %11, %cst_8 {dimension_numbers = #tpu.dot_dimension_numbers<[1], [0], [0], [1], [0, 0, 1, 1], [], []>} : vector<16x64xbf16>, vector<64x512xbf16>, vector<16x512xf32> -> vector<16x512xf32>
    %c0_9 = arith.constant 0 : index
    %c0_10 = arith.constant 0 : index
    %13 = vector.load %arg5[%c0_9, %c0_10] : memref<16x1xf32, #tpu.memory_space<vmem>>, vector<16x1xf32>
    %14 = vector.broadcast %13 : vector<16x1xf32> to vector<16x512xf32>
    %15 = arith.mulf %12, %14 : vector<16x512xf32>
    %c0_11 = arith.constant 0 : index
    %c0_12 = arith.constant 0 : index
    %16 = vector.load %arg6[%c0_11, %c0_12] : memref<16x1xf32, #tpu.memory_space<vmem>>, vector<16x1xf32>
    %17 = vector.broadcast %16 : vector<16x1xf32> to vector<16x512xf32>
    %18 = arith.addf %15, %17 : vector<16x512xf32>
    %cst_13 = arith.constant 0.000000e+00 : f32
    %19 = vector.broadcast %cst_13 : f32 to vector<16x512xf32>
    %20 = arith.maximumf %18, %19 : vector<16x512xf32>
    %c0_14 = arith.constant 0 : index
    %c0_15 = arith.constant 0 : index
    %21 = vector.load %arg10[%c0_14, %c0_15] : memref<9x512xf32, #tpu.memory_space<vmem>>, vector<9x512xf32>
    %c17_i32 = arith.constant 17 : i32
    %22 = tpu.dynamic_rotate %20 by %c17_i32 dim 1 : vector<16x512xf32>, i32 -> vector<16x512xf32>
    %23 = vector.extract_strided_slice %21 {offsets = [0, 0], sizes = [1, 512], strides = [1, 1]} : vector<9x512xf32> to vector<1x512xf32>
    %24 = vector.broadcast %23 : vector<1x512xf32> to vector<16x512xf32>
    %25 = arith.mulf %22, %24 : vector<16x512xf32>
    %26 = arith.truncf %25 : vector<16x512xf32> to vector<16x512xbf16>
    %c0_16 = arith.constant 0 : index
    %c0_17 = arith.constant 0 : index
    %27 = vector.load %arg14[%c0_16, %c0_17] : memref<144x512xbf16, #tpu.memory_space<vmem>>, vector<16x512xbf16>
    tpu.vector_store %arg14[%c0_16, %c0_17], %26 {strides = array<i32>} : memref<144x512xbf16, #tpu.memory_space<vmem>>, vector<16x512xbf16>,
    %c16_i32 = arith.constant 16 : i32
    %28 = tpu.dynamic_rotate %20 by %c16_i32 dim 1 : vector<16x512xf32>, i32 -> vector<16x512xf32>
    %29 = vector.extract_strided_slice %21 {offsets = [1, 0], sizes = [1, 512], strides = [1, 1]} : vector<9x512xf32> to vector<1x512xf32>
    %30 = vector.broadcast %29 : vector<1x512xf32> to vector<16x512xf32>
    %31 = arith.mulf %28, %30 : vector<16x512xf32>
    %32 = arith.truncf %31 : vector<16x512xf32> to vector<16x512xbf16>
    %c16 = arith.constant 16 : index
    %c0_18 = arith.constant 0 : index
    %33 = vector.load %arg14[%c16, %c0_18] : memref<144x512xbf16, #tpu.memory_space<vmem>>, vector<16x512xbf16>
    tpu.vector_store %arg14[%c16, %c0_18], %32 {strides = array<i32>} : memref<144x512xbf16, #tpu.memory_space<vmem>>, vector<16x512xbf16>,
    %c15_i32 = arith.constant 15 : i32
    %34 = tpu.dynamic_rotate %20 by %c15_i32 dim 1 : vector<16x512xf32>, i32 -> vector<16x512xf32>
    %35 = vector.extract_strided_slice %21 {offsets = [2, 0], sizes = [1, 512], strides = [1, 1]} : vector<9x512xf32> to vector<1x512xf32>
    %36 = vector.broadcast %35 : vector<1x512xf32> to vector<16x512xf32>
    %37 = arith.mulf %34, %36 : vector<16x512xf32>
    %38 = arith.truncf %37 : vector<16x512xf32> to vector<16x512xbf16>
    %c32 = arith.constant 32 : index
    %c0_19 = arith.constant 0 : index
    %39 = vector.load %arg14[%c32, %c0_19] : memref<144x512xbf16, #tpu.memory_space<vmem>>, vector<16x512xbf16>
    tpu.vector_store %arg14[%c32, %c0_19], %38 {strides = array<i32>} : memref<144x512xbf16, #tpu.memory_space<vmem>>, vector<16x512xbf16>,
    %c1_i32 = arith.constant 1 : i32
    %40 = tpu.dynamic_rotate %20 by %c1_i32 dim 1 : vector<16x512xf32>, i32 -> vector<16x512xf32>
    %41 = vector.extract_strided_slice %21 {offsets = [3, 0], sizes = [1, 512], strides = [1, 1]} : vector<9x512xf32> to vector<1x512xf32>
    %42 = vector.broadcast %41 : vector<1x512xf32> to vector<16x512xf32>
    %43 = arith.mulf %40, %42 : vector<16x512xf32>
    %44 = arith.truncf %43 : vector<16x512xf32> to vector<16x512xbf16>
    %c48 = arith.constant 48 : index
    %c0_20 = arith.constant 0 : index
    %45 = vector.load %arg14[%c48, %c0_20] : memref<144x512xbf16, #tpu.memory_space<vmem>>, vector<16x512xbf16>
    tpu.vector_store %arg14[%c48, %c0_20], %44 {strides = array<i32>} : memref<144x512xbf16, #tpu.memory_space<vmem>>, vector<16x512xbf16>,
    %46 = arith.truncf %20 : vector<16x512xf32> to vector<16x512xbf16>
    %c64 = arith.constant 64 : index
    %c0_21 = arith.constant 0 : index
    %47 = vector.load %arg14[%c64, %c0_21] : memref<144x512xbf16, #tpu.memory_space<vmem>>, vector<16x512xbf16>
    tpu.vector_store %arg14[%c64, %c0_21], %46 {strides = array<i32>} : memref<144x512xbf16, #tpu.memory_space<vmem>>, vector<16x512xbf16>,
    %c511_i32 = arith.constant 511 : i32
    %48 = tpu.dynamic_rotate %20 by %c511_i32 dim 1 : vector<16x512xf32>, i32 -> vector<16x512xf32>
    %49 = vector.extract_strided_slice %21 {offsets = [5, 0], sizes = [1, 512], strides = [1, 1]} : vector<9x512xf32> to vector<1x512xf32>
    %50 = vector.broadcast %49 : vector<1x512xf32> to vector<16x512xf32>
    %51 = arith.mulf %48, %50 : vector<16x512xf32>
    %52 = arith.truncf %51 : vector<16x512xf32> to vector<16x512xbf16>
    %c80 = arith.constant 80 : index
    %c0_22 = arith.constant 0 : index
    %53 = vector.load %arg14[%c80, %c0_22] : memref<144x512xbf16, #tpu.memory_space<vmem>>, vector<16x512xbf16>
    tpu.vector_store %arg14[%c80, %c0_22], %52 {strides = array<i32>} : memref<144x512xbf16, #tpu.memory_space<vmem>>, vector<16x512xbf16>,
    %c497_i32 = arith.constant 497 : i32
    %54 = tpu.dynamic_rotate %20 by %c497_i32 dim 1 : vector<16x512xf32>, i32 -> vector<16x512xf32>
    %55 = vector.extract_strided_slice %21 {offsets = [6, 0], sizes = [1, 512], strides = [1, 1]} : vector<9x512xf32> to vector<1x512xf32>
    %56 = vector.broadcast %55 : vector<1x512xf32> to vector<16x512xf32>
    %57 = arith.mulf %54, %56 : vector<16x512xf32>
    %58 = arith.truncf %57 : vector<16x512xf32> to vector<16x512xbf16>
    %c96 = arith.constant 96 : index
    %c0_23 = arith.constant 0 : index
    %59 = vector.load %arg14[%c96, %c0_23] : memref<144x512xbf16, #tpu.memory_space<vmem>>, vector<16x512xbf16>
    tpu.vector_store %arg14[%c96, %c0_23], %58 {strides = array<i32>} : memref<144x512xbf16, #tpu.memory_space<vmem>>, vector<16x512xbf16>,
    %c496_i32 = arith.constant 496 : i32
    %60 = tpu.dynamic_rotate %20 by %c496_i32 dim 1 : vector<16x512xf32>, i32 -> vector<16x512xf32>
    %61 = vector.extract_strided_slice %21 {offsets = [7, 0], sizes = [1, 512], strides = [1, 1]} : vector<9x512xf32> to vector<1x512xf32>
    %62 = vector.broadcast %61 : vector<1x512xf32> to vector<16x512xf32>
    %63 = arith.mulf %60, %62 : vector<16x512xf32>
    %64 = arith.truncf %63 : vector<16x512xf32> to vector<16x512xbf16>
    %c112 = arith.constant 112 : index
    %c0_24 = arith.constant 0 : index
    %65 = vector.load %arg14[%c112, %c0_24] : memref<144x512xbf16, #tpu.memory_space<vmem>>, vector<16x512xbf16>
    tpu.vector_store %arg14[%c112, %c0_24], %64 {strides = array<i32>} : memref<144x512xbf16, #tpu.memory_space<vmem>>, vector<16x512xbf16>,
    %c495_i32 = arith.constant 495 : i32
    %66 = tpu.dynamic_rotate %20 by %c495_i32 dim 1 : vector<16x512xf32>, i32 -> vector<16x512xf32>
    %67 = vector.extract_strided_slice %21 {offsets = [8, 0], sizes = [1, 512], strides = [1, 1]} : vector<9x512xf32> to vector<1x512xf32>
    %68 = vector.broadcast %67 : vector<1x512xf32> to vector<16x512xf32>
    %69 = arith.mulf %66, %68 : vector<16x512xf32>
    %70 = arith.truncf %69 : vector<16x512xf32> to vector<16x512xbf16>
    %c128 = arith.constant 128 : index
    %c0_25 = arith.constant 0 : index
    %71 = vector.load %arg14[%c128, %c0_25] : memref<144x512xbf16, #tpu.memory_space<vmem>>, vector<16x512xbf16>
    tpu.vector_store %arg14[%c128, %c0_25], %70 {strides = array<i32>} : memref<144x512xbf16, #tpu.memory_space<vmem>>, vector<16x512xbf16>,
    %c0_26 = arith.constant 0 : index
    %c0_27 = arith.constant 0 : index
    %72 = vector.load %arg7[%c0_26, %c0_27] : memref<16x144xbf16, #tpu.memory_space<vmem>>, vector<16x144xbf16>
    %c0_28 = arith.constant 0 : index
    %c0_29 = arith.constant 0 : index
    %73 = vector.load %arg14[%c0_28, %c0_29] : memref<144x512xbf16, #tpu.memory_space<vmem>>, vector<144x512xbf16>
    %cst_30 = arith.constant dense<0.000000e+00> : vector<16x512xf32>
    %74 = tpu.matmul %72, %73, %cst_30 {dimension_numbers = #tpu.dot_dimension_numbers<[1], [0], [0], [1], [0, 0, 1, 1], [], []>} : vector<16x144xbf16>, vector<144x512xbf16>, vector<16x512xf32> -> vector<16x512xf32>
    %c0_31 = arith.constant 0 : index
    %c0_32 = arith.constant 0 : index
    %75 = vector.load %arg8[%c0_31, %c0_32] : memref<16x1xf32, #tpu.memory_space<vmem>>, vector<16x1xf32>
    %76 = vector.broadcast %75 : vector<16x1xf32> to vector<16x512xf32>
    %77 = arith.mulf %74, %76 : vector<16x512xf32>
    %c0_33 = arith.constant 0 : index
    %c0_34 = arith.constant 0 : index
    %78 = vector.load %arg9[%c0_33, %c0_34] : memref<16x1xf32, #tpu.memory_space<vmem>>, vector<16x1xf32>
    %79 = vector.broadcast %78 : vector<16x1xf32> to vector<16x512xf32>
    %80 = arith.addf %77, %79 : vector<16x512xf32>
    %cst_35 = arith.constant 0.000000e+00 : f32
    %81 = vector.broadcast %cst_35 : f32 to vector<16x512xf32>
    %82 = arith.maximumf %80, %81 : vector<16x512xf32>
    %c0_36 = arith.constant 0 : index
    %c0_37 = arith.constant 0 : index
    %83 = vector.load %arg11[%c0_36, %c0_37] : memref<64x16xbf16, #tpu.memory_space<vmem>>, vector<64x16xbf16>
    %84 = arith.truncf %82 : vector<16x512xf32> to vector<16x512xbf16>
    %cst_38 = arith.constant dense<0.000000e+00> : vector<64x512xf32>
    %85 = tpu.matmul %83, %84, %cst_38 {dimension_numbers = #tpu.dot_dimension_numbers<[1], [0], [0], [1], [0, 0, 1, 1], [], []>} : vector<64x16xbf16>, vector<16x512xbf16>, vector<64x512xf32> -> vector<64x512xf32>
    %86 = arith.addf %85, %1 : vector<64x512xf32>
    %c511_i32_39 = arith.constant 511 : i32
    %87 = tpu.dynamic_rotate %86 by %c511_i32_39 dim 1 : vector<64x512xf32>, i32 -> vector<64x512xf32>
    %c496_i32_40 = arith.constant 496 : i32
    %88 = tpu.dynamic_rotate %86 by %c496_i32_40 dim 1 : vector<64x512xf32>, i32 -> vector<64x512xf32>
    %c495_i32_41 = arith.constant 495 : i32
    %89 = tpu.dynamic_rotate %86 by %c495_i32_41 dim 1 : vector<64x512xf32>, i32 -> vector<64x512xf32>
    %90 = arith.maximumf %86, %87 : vector<64x512xf32>
    %91 = arith.maximumf %88, %89 : vector<64x512xf32>
    %92 = arith.maximumf %90, %91 : vector<64x512xf32>
    %93 = arith.truncf %92 : vector<64x512xf32> to vector<64x512xbf16>
    %c0_42 = arith.constant 0 : index
    %c0_43 = arith.constant 0 : index
    %94 = vector.load %arg12[%c0_42, %c0_43] : memref<512x128xbf16, #tpu.memory_space<vmem>>, vector<512x128xbf16>
    %cst_44 = arith.constant dense<0.000000e+00> : vector<64x128xf32>
    %95 = tpu.matmul %93, %94, %cst_44 {dimension_numbers = #tpu.dot_dimension_numbers<[1], [0], [0], [1], [0, 0, 1, 1], [], []>} : vector<64x512xbf16>, vector<512x128xbf16>, vector<64x128xf32> -> vector<64x128xf32>
    %c0_45 = arith.constant 0 : index
    %c0_46 = arith.constant 0 : index
    %c0_47 = arith.constant 0 : index
    %96 = vector.load %arg13[%c0_45, %c0_46, %c0_47] : memref<1x64x128xf32, #tpu.memory_space<vmem>>, vector<1x64x128xf32>
    %97 = vector.shape_cast %96 : vector<1x64x128xf32> to vector<64x128xf32>
    %98 = vector.shape_cast %95 : vector<64x128xf32> to vector<1x64x128xf32>
    tpu.vector_store %arg13[%c0_45, %c0_46, %c0_47], %98 {strides = array<i32>} : memref<1x64x128xf32, #tpu.memory_space<vmem>>, vector<1x64x128xf32>,
    return
  }
  func.func @transform_0(%arg0: i32) -> (i32, i32, i32) {
    %c0_i32 = arith.constant 0 : i32
    %c0_i32_0 = arith.constant 0 : i32
    %c0_i32_1 = arith.constant 0 : i32
    return %arg0, %c0_i32, %c0_i32_0 : i32, i32, i32
  }
  func.func @transform_1(%arg0: i32) -> (i32, i32) {
    %c0_i32 = arith.constant 0 : i32
    %c0_i32_0 = arith.constant 0 : i32
    %c0_i32_1 = arith.constant 0 : i32
    return %c0_i32, %c0_i32_0 : i32, i32
  }
  func.func @transform_2(%arg0: i32) -> (i32, i32) {
    %c0_i32 = arith.constant 0 : i32
    %c0_i32_0 = arith.constant 0 : i32
    %c0_i32_1 = arith.constant 0 : i32
    return %c0_i32, %c0_i32_0 : i32, i32
  }
  func.func @transform_3(%arg0: i32) -> (i32, i32) {
    %c0_i32 = arith.constant 0 : i32
    %c0_i32_0 = arith.constant 0 : i32
    %c0_i32_1 = arith.constant 0 : i32
    return %c0_i32, %c0_i32_0 : i32, i32
  }
  func.func @transform_4(%arg0: i32) -> (i32, i32) {
    %c0_i32 = arith.constant 0 : i32
    %c0_i32_0 = arith.constant 0 : i32
    %c0_i32_1 = arith.constant 0 : i32
    return %c0_i32, %c0_i32_0 : i32, i32
  }
  func.func @transform_5(%arg0: i32) -> (i32, i32) {
    %c0_i32 = arith.constant 0 : i32
    %c0_i32_0 = arith.constant 0 : i32
    %c0_i32_1 = arith.constant 0 : i32
    return %c0_i32, %c0_i32_0 : i32, i32
  }
  func.func @transform_6(%arg0: i32) -> (i32, i32) {
    %c0_i32 = arith.constant 0 : i32
    %c0_i32_0 = arith.constant 0 : i32
    %c0_i32_1 = arith.constant 0 : i32
    return %c0_i32, %c0_i32_0 : i32, i32
  }
  func.func @transform_7(%arg0: i32) -> (i32, i32) {
    %c0_i32 = arith.constant 0 : i32
    %c0_i32_0 = arith.constant 0 : i32
    %c0_i32_1 = arith.constant 0 : i32
    return %c0_i32, %c0_i32_0 : i32, i32
  }
  func.func @transform_8(%arg0: i32) -> (i32, i32) {
    %c0_i32 = arith.constant 0 : i32
    %c0_i32_0 = arith.constant 0 : i32
    %c0_i32_1 = arith.constant 0 : i32
    return %c0_i32, %c0_i32_0 : i32, i32
  }
  func.func @transform_9(%arg0: i32) -> (i32, i32) {
    %c0_i32 = arith.constant 0 : i32
    %c0_i32_0 = arith.constant 0 : i32
    %c0_i32_1 = arith.constant 0 : i32
    return %c0_i32, %c0_i32_0 : i32, i32
  }
  func.func @transform_10(%arg0: i32) -> (i32, i32) {
    %c0_i32 = arith.constant 0 : i32
    %c0_i32_0 = arith.constant 0 : i32
    %c0_i32_1 = arith.constant 0 : i32
    return %c0_i32, %c0_i32_0 : i32, i32
  }
  func.func @transform_11(%arg0: i32) -> (i32, i32) {
    %c0_i32 = arith.constant 0 : i32
    %c0_i32_0 = arith.constant 0 : i32
    %c0_i32_1 = arith.constant 0 : i32
    return %c0_i32, %c0_i32_0 : i32, i32
  }
  func.func @transform_12(%arg0: i32) -> (i32, i32, i32) {
    %c0_i32 = arith.constant 0 : i32
    %c0_i32_0 = arith.constant 0 : i32
    %c0_i32_1 = arith.constant 0 : i32
    return %arg0, %c0_i32, %c0_i32_0 : i32, i32, i32
  }
}

module attributes {stable_mosaic.version = 11 : i64} {
  func.func @kernel(%arg0: i32, %arg1: memref<1x32x512xf32, #tpu.memory_space<vmem>>, %arg2: memref<32x1xf32, #tpu.memory_space<vmem>>, %arg3: memref<32x1xf32, #tpu.memory_space<vmem>>, %arg4: memref<16x32xbf16, #tpu.memory_space<vmem>>, %arg5: memref<16x1xf32, #tpu.memory_space<vmem>>, %arg6: memref<16x1xf32, #tpu.memory_space<vmem>>, %arg7: memref<16x144xbf16, #tpu.memory_space<vmem>>, %arg8: memref<16x1xf32, #tpu.memory_space<vmem>>, %arg9: memref<16x1xf32, #tpu.memory_space<vmem>>, %arg10: memref<9x512xf32, #tpu.memory_space<vmem>>, %arg11: memref<32x1xf32, #tpu.memory_space<vmem>>, %arg12: memref<32x1xf32, #tpu.memory_space<vmem>>, %arg13: memref<64x48xbf16, #tpu.memory_space<vmem>>, %arg14: memref<1x64x512xf32, #tpu.memory_space<vmem>>, %arg15: memref<144x512xbf16, #tpu.memory_space<vmem>>) attributes {dimension_semantics = [#tpu.dimension_semantics<parallel>], iteration_bounds = array<i64: 1>, scalar_prefetch = 0 : i64, scratch_operands = 1 : i64, tpu.core_type = #tpu.core_type<tc>, window_params = [{transform_indices = @transform_0, window_bounds = array<i64: 1, 32, 512>}, {pipeline_mode = #tpu.pipeline_mode<synchronous>, transform_indices = @transform_1, window_bounds = array<i64: 32, 1>}, {pipeline_mode = #tpu.pipeline_mode<synchronous>, transform_indices = @transform_2, window_bounds = array<i64: 32, 1>}, {pipeline_mode = #tpu.pipeline_mode<synchronous>, transform_indices = @transform_3, window_bounds = array<i64: 16, 32>}, {pipeline_mode = #tpu.pipeline_mode<synchronous>, transform_indices = @transform_4, window_bounds = array<i64: 16, 1>}, {pipeline_mode = #tpu.pipeline_mode<synchronous>, transform_indices = @transform_5, window_bounds = array<i64: 16, 1>}, {pipeline_mode = #tpu.pipeline_mode<synchronous>, transform_indices = @transform_6, window_bounds = array<i64: 16, 144>}, {pipeline_mode = #tpu.pipeline_mode<synchronous>, transform_indices = @transform_7, window_bounds = array<i64: 16, 1>}, {pipeline_mode = #tpu.pipeline_mode<synchronous>, transform_indices = @transform_8, window_bounds = array<i64: 16, 1>}, {pipeline_mode = #tpu.pipeline_mode<synchronous>, transform_indices = @transform_9, window_bounds = array<i64: 9, 512>}, {pipeline_mode = #tpu.pipeline_mode<synchronous>, transform_indices = @transform_10, window_bounds = array<i64: 32, 1>}, {pipeline_mode = #tpu.pipeline_mode<synchronous>, transform_indices = @transform_11, window_bounds = array<i64: 32, 1>}, {pipeline_mode = #tpu.pipeline_mode<synchronous>, transform_indices = @transform_12, window_bounds = array<i64: 64, 48>}, {transform_indices = @transform_13, window_bounds = array<i64: 1, 64, 512>}]} {
    %c0 = arith.constant 0 : index
    %c0_0 = arith.constant 0 : index
    %c0_1 = arith.constant 0 : index
    %0 = vector.load %arg1[%c0, %c0_0, %c0_1] : memref<1x32x512xf32, #tpu.memory_space<vmem>>, vector<1x32x512xf32>
    %1 = vector.shape_cast %0 : vector<1x32x512xf32> to vector<32x512xf32>
    %c0_2 = arith.constant 0 : index
    %c0_3 = arith.constant 0 : index
    %2 = vector.load %arg2[%c0_2, %c0_3] : memref<32x1xf32, #tpu.memory_space<vmem>>, vector<32x1xf32>
    %3 = vector.broadcast %2 : vector<32x1xf32> to vector<32x512xf32>
    %4 = arith.mulf %1, %3 : vector<32x512xf32>
    %c0_4 = arith.constant 0 : index
    %c0_5 = arith.constant 0 : index
    %5 = vector.load %arg3[%c0_4, %c0_5] : memref<32x1xf32, #tpu.memory_space<vmem>>, vector<32x1xf32>
    %6 = vector.broadcast %5 : vector<32x1xf32> to vector<32x512xf32>
    %7 = arith.addf %4, %6 : vector<32x512xf32>
    %cst = arith.constant 0.000000e+00 : f32
    %8 = vector.broadcast %cst : f32 to vector<32x512xf32>
    %9 = arith.maximumf %7, %8 : vector<32x512xf32>
    %c0_6 = arith.constant 0 : index
    %c0_7 = arith.constant 0 : index
    %10 = vector.load %arg4[%c0_6, %c0_7] : memref<16x32xbf16, #tpu.memory_space<vmem>>, vector<16x32xbf16>
    %11 = arith.truncf %9 : vector<32x512xf32> to vector<32x512xbf16>
    %cst_8 = arith.constant dense<0.000000e+00> : vector<16x512xf32>
    %12 = tpu.matmul %10, %11, %cst_8 {dimension_numbers = #tpu.dot_dimension_numbers<[1], [0], [0], [1], [0, 0, 1, 1], [], []>} : vector<16x32xbf16>, vector<32x512xbf16>, vector<16x512xf32> -> vector<16x512xf32>
    %c0_9 = arith.constant 0 : index
    %c0_10 = arith.constant 0 : index
    %13 = vector.load %arg5[%c0_9, %c0_10] : memref<16x1xf32, #tpu.memory_space<vmem>>, vector<16x1xf32>
    %14 = vector.broadcast %13 : vector<16x1xf32> to vector<16x512xf32>
    %15 = arith.mulf %12, %14 : vector<16x512xf32>
    %c0_11 = arith.constant 0 : index
    %c0_12 = arith.constant 0 : index
    %16 = vector.load %arg6[%c0_11, %c0_12] : memref<16x1xf32, #tpu.memory_space<vmem>>, vector<16x1xf32>
    %17 = vector.broadcast %16 : vector<16x1xf32> to vector<16x512xf32>
    %18 = arith.addf %15, %17 : vector<16x512xf32>
    %cst_13 = arith.constant 0.000000e+00 : f32
    %19 = vector.broadcast %cst_13 : f32 to vector<16x512xf32>
    %20 = arith.maximumf %18, %19 : vector<16x512xf32>
    %c0_14 = arith.constant 0 : index
    %c0_15 = arith.constant 0 : index
    %21 = vector.load %arg10[%c0_14, %c0_15] : memref<9x512xf32, #tpu.memory_space<vmem>>, vector<9x512xf32>
    %c17_i32 = arith.constant 17 : i32
    %22 = tpu.dynamic_rotate %20 by %c17_i32 dim 1 : vector<16x512xf32>, i32 -> vector<16x512xf32>
    %23 = vector.extract_strided_slice %21 {offsets = [0, 0], sizes = [1, 512], strides = [1, 1]} : vector<9x512xf32> to vector<1x512xf32>
    %24 = vector.broadcast %23 : vector<1x512xf32> to vector<16x512xf32>
    %25 = arith.mulf %22, %24 : vector<16x512xf32>
    %26 = arith.truncf %25 : vector<16x512xf32> to vector<16x512xbf16>
    %c0_16 = arith.constant 0 : index
    %c0_17 = arith.constant 0 : index
    %27 = vector.load %arg15[%c0_16, %c0_17] : memref<144x512xbf16, #tpu.memory_space<vmem>>, vector<16x512xbf16>
    tpu.vector_store %arg15[%c0_16, %c0_17], %26 {strides = array<i32>} : memref<144x512xbf16, #tpu.memory_space<vmem>>, vector<16x512xbf16>,
    %c16_i32 = arith.constant 16 : i32
    %28 = tpu.dynamic_rotate %20 by %c16_i32 dim 1 : vector<16x512xf32>, i32 -> vector<16x512xf32>
    %29 = vector.extract_strided_slice %21 {offsets = [1, 0], sizes = [1, 512], strides = [1, 1]} : vector<9x512xf32> to vector<1x512xf32>
    %30 = vector.broadcast %29 : vector<1x512xf32> to vector<16x512xf32>
    %31 = arith.mulf %28, %30 : vector<16x512xf32>
    %32 = arith.truncf %31 : vector<16x512xf32> to vector<16x512xbf16>
    %c16 = arith.constant 16 : index
    %c0_18 = arith.constant 0 : index
    %33 = vector.load %arg15[%c16, %c0_18] : memref<144x512xbf16, #tpu.memory_space<vmem>>, vector<16x512xbf16>
    tpu.vector_store %arg15[%c16, %c0_18], %32 {strides = array<i32>} : memref<144x512xbf16, #tpu.memory_space<vmem>>, vector<16x512xbf16>,
    %c15_i32 = arith.constant 15 : i32
    %34 = tpu.dynamic_rotate %20 by %c15_i32 dim 1 : vector<16x512xf32>, i32 -> vector<16x512xf32>
    %35 = vector.extract_strided_slice %21 {offsets = [2, 0], sizes = [1, 512], strides = [1, 1]} : vector<9x512xf32> to vector<1x512xf32>
    %36 = vector.broadcast %35 : vector<1x512xf32> to vector<16x512xf32>
    %37 = arith.mulf %34, %36 : vector<16x512xf32>
    %38 = arith.truncf %37 : vector<16x512xf32> to vector<16x512xbf16>
    %c32 = arith.constant 32 : index
    %c0_19 = arith.constant 0 : index
    %39 = vector.load %arg15[%c32, %c0_19] : memref<144x512xbf16, #tpu.memory_space<vmem>>, vector<16x512xbf16>
    tpu.vector_store %arg15[%c32, %c0_19], %38 {strides = array<i32>} : memref<144x512xbf16, #tpu.memory_space<vmem>>, vector<16x512xbf16>,
    %c1_i32 = arith.constant 1 : i32
    %40 = tpu.dynamic_rotate %20 by %c1_i32 dim 1 : vector<16x512xf32>, i32 -> vector<16x512xf32>
    %41 = vector.extract_strided_slice %21 {offsets = [3, 0], sizes = [1, 512], strides = [1, 1]} : vector<9x512xf32> to vector<1x512xf32>
    %42 = vector.broadcast %41 : vector<1x512xf32> to vector<16x512xf32>
    %43 = arith.mulf %40, %42 : vector<16x512xf32>
    %44 = arith.truncf %43 : vector<16x512xf32> to vector<16x512xbf16>
    %c48 = arith.constant 48 : index
    %c0_20 = arith.constant 0 : index
    %45 = vector.load %arg15[%c48, %c0_20] : memref<144x512xbf16, #tpu.memory_space<vmem>>, vector<16x512xbf16>
    tpu.vector_store %arg15[%c48, %c0_20], %44 {strides = array<i32>} : memref<144x512xbf16, #tpu.memory_space<vmem>>, vector<16x512xbf16>,
    %46 = arith.truncf %20 : vector<16x512xf32> to vector<16x512xbf16>
    %c64 = arith.constant 64 : index
    %c0_21 = arith.constant 0 : index
    %47 = vector.load %arg15[%c64, %c0_21] : memref<144x512xbf16, #tpu.memory_space<vmem>>, vector<16x512xbf16>
    tpu.vector_store %arg15[%c64, %c0_21], %46 {strides = array<i32>} : memref<144x512xbf16, #tpu.memory_space<vmem>>, vector<16x512xbf16>,
    %c511_i32 = arith.constant 511 : i32
    %48 = tpu.dynamic_rotate %20 by %c511_i32 dim 1 : vector<16x512xf32>, i32 -> vector<16x512xf32>
    %49 = vector.extract_strided_slice %21 {offsets = [5, 0], sizes = [1, 512], strides = [1, 1]} : vector<9x512xf32> to vector<1x512xf32>
    %50 = vector.broadcast %49 : vector<1x512xf32> to vector<16x512xf32>
    %51 = arith.mulf %48, %50 : vector<16x512xf32>
    %52 = arith.truncf %51 : vector<16x512xf32> to vector<16x512xbf16>
    %c80 = arith.constant 80 : index
    %c0_22 = arith.constant 0 : index
    %53 = vector.load %arg15[%c80, %c0_22] : memref<144x512xbf16, #tpu.memory_space<vmem>>, vector<16x512xbf16>
    tpu.vector_store %arg15[%c80, %c0_22], %52 {strides = array<i32>} : memref<144x512xbf16, #tpu.memory_space<vmem>>, vector<16x512xbf16>,
    %c497_i32 = arith.constant 497 : i32
    %54 = tpu.dynamic_rotate %20 by %c497_i32 dim 1 : vector<16x512xf32>, i32 -> vector<16x512xf32>
    %55 = vector.extract_strided_slice %21 {offsets = [6, 0], sizes = [1, 512], strides = [1, 1]} : vector<9x512xf32> to vector<1x512xf32>
    %56 = vector.broadcast %55 : vector<1x512xf32> to vector<16x512xf32>
    %57 = arith.mulf %54, %56 : vector<16x512xf32>
    %58 = arith.truncf %57 : vector<16x512xf32> to vector<16x512xbf16>
    %c96 = arith.constant 96 : index
    %c0_23 = arith.constant 0 : index
    %59 = vector.load %arg15[%c96, %c0_23] : memref<144x512xbf16, #tpu.memory_space<vmem>>, vector<16x512xbf16>
    tpu.vector_store %arg15[%c96, %c0_23], %58 {strides = array<i32>} : memref<144x512xbf16, #tpu.memory_space<vmem>>, vector<16x512xbf16>,
    %c496_i32 = arith.constant 496 : i32
    %60 = tpu.dynamic_rotate %20 by %c496_i32 dim 1 : vector<16x512xf32>, i32 -> vector<16x512xf32>
    %61 = vector.extract_strided_slice %21 {offsets = [7, 0], sizes = [1, 512], strides = [1, 1]} : vector<9x512xf32> to vector<1x512xf32>
    %62 = vector.broadcast %61 : vector<1x512xf32> to vector<16x512xf32>
    %63 = arith.mulf %60, %62 : vector<16x512xf32>
    %64 = arith.truncf %63 : vector<16x512xf32> to vector<16x512xbf16>
    %c112 = arith.constant 112 : index
    %c0_24 = arith.constant 0 : index
    %65 = vector.load %arg15[%c112, %c0_24] : memref<144x512xbf16, #tpu.memory_space<vmem>>, vector<16x512xbf16>
    tpu.vector_store %arg15[%c112, %c0_24], %64 {strides = array<i32>} : memref<144x512xbf16, #tpu.memory_space<vmem>>, vector<16x512xbf16>,
    %c495_i32 = arith.constant 495 : i32
    %66 = tpu.dynamic_rotate %20 by %c495_i32 dim 1 : vector<16x512xf32>, i32 -> vector<16x512xf32>
    %67 = vector.extract_strided_slice %21 {offsets = [8, 0], sizes = [1, 512], strides = [1, 1]} : vector<9x512xf32> to vector<1x512xf32>
    %68 = vector.broadcast %67 : vector<1x512xf32> to vector<16x512xf32>
    %69 = arith.mulf %66, %68 : vector<16x512xf32>
    %70 = arith.truncf %69 : vector<16x512xf32> to vector<16x512xbf16>
    %c128 = arith.constant 128 : index
    %c0_25 = arith.constant 0 : index
    %71 = vector.load %arg15[%c128, %c0_25] : memref<144x512xbf16, #tpu.memory_space<vmem>>, vector<16x512xbf16>
    tpu.vector_store %arg15[%c128, %c0_25], %70 {strides = array<i32>} : memref<144x512xbf16, #tpu.memory_space<vmem>>, vector<16x512xbf16>,
    %c0_26 = arith.constant 0 : index
    %c0_27 = arith.constant 0 : index
    %72 = vector.load %arg7[%c0_26, %c0_27] : memref<16x144xbf16, #tpu.memory_space<vmem>>, vector<16x144xbf16>
    %c0_28 = arith.constant 0 : index
    %c0_29 = arith.constant 0 : index
    %73 = vector.load %arg15[%c0_28, %c0_29] : memref<144x512xbf16, #tpu.memory_space<vmem>>, vector<144x512xbf16>
    %cst_30 = arith.constant dense<0.000000e+00> : vector<16x512xf32>
    %74 = tpu.matmul %72, %73, %cst_30 {dimension_numbers = #tpu.dot_dimension_numbers<[1], [0], [0], [1], [0, 0, 1, 1], [], []>} : vector<16x144xbf16>, vector<144x512xbf16>, vector<16x512xf32> -> vector<16x512xf32>
    %c0_31 = arith.constant 0 : index
    %c0_32 = arith.constant 0 : index
    %75 = vector.load %arg8[%c0_31, %c0_32] : memref<16x1xf32, #tpu.memory_space<vmem>>, vector<16x1xf32>
    %76 = vector.broadcast %75 : vector<16x1xf32> to vector<16x512xf32>
    %77 = arith.mulf %74, %76 : vector<16x512xf32>
    %c0_33 = arith.constant 0 : index
    %c0_34 = arith.constant 0 : index
    %78 = vector.load %arg9[%c0_33, %c0_34] : memref<16x1xf32, #tpu.memory_space<vmem>>, vector<16x1xf32>
    %79 = vector.broadcast %78 : vector<16x1xf32> to vector<16x512xf32>
    %80 = arith.addf %77, %79 : vector<16x512xf32>
    %cst_35 = arith.constant 0.000000e+00 : f32
    %81 = vector.broadcast %cst_35 : f32 to vector<16x512xf32>
    %82 = arith.maximumf %80, %81 : vector<16x512xf32>
    %c0_36 = arith.constant 0 : index
    %c0_37 = arith.constant 0 : index
    %83 = vector.load %arg11[%c0_36, %c0_37] : memref<32x1xf32, #tpu.memory_space<vmem>>, vector<32x1xf32>
    %84 = vector.broadcast %83 : vector<32x1xf32> to vector<32x512xf32>
    %85 = arith.mulf %1, %84 : vector<32x512xf32>
    %c0_38 = arith.constant 0 : index
    %c0_39 = arith.constant 0 : index
    %86 = vector.load %arg12[%c0_38, %c0_39] : memref<32x1xf32, #tpu.memory_space<vmem>>, vector<32x1xf32>
    %87 = vector.broadcast %86 : vector<32x1xf32> to vector<32x512xf32>
    %88 = arith.addf %85, %87 : vector<32x512xf32>
    %cst_40 = arith.constant 0.000000e+00 : f32
    %89 = vector.broadcast %cst_40 : f32 to vector<32x512xf32>
    %90 = arith.maximumf %88, %89 : vector<32x512xf32>
    %91 = arith.truncf %82 : vector<16x512xf32> to vector<16x512xbf16>
    %92 = arith.truncf %90 : vector<32x512xf32> to vector<32x512xbf16>
    %93 = tpu.concatenate %91, %92 in 0 : vector<16x512xbf16>, vector<32x512xbf16> -> vector<48x512xbf16>
    %c0_41 = arith.constant 0 : index
    %c0_42 = arith.constant 0 : index
    %94 = vector.load %arg13[%c0_41, %c0_42] : memref<64x48xbf16, #tpu.memory_space<vmem>>, vector<64x48xbf16>
    %cst_43 = arith.constant dense<0.000000e+00> : vector<64x512xf32>
    %95 = tpu.matmul %94, %93, %cst_43 {dimension_numbers = #tpu.dot_dimension_numbers<[1], [0], [0], [1], [0, 0, 1, 1], [], []>} : vector<64x48xbf16>, vector<48x512xbf16>, vector<64x512xf32> -> vector<64x512xf32>
    %c0_44 = arith.constant 0 : index
    %c0_45 = arith.constant 0 : index
    %c0_46 = arith.constant 0 : index
    %96 = vector.load %arg14[%c0_44, %c0_45, %c0_46] : memref<1x64x512xf32, #tpu.memory_space<vmem>>, vector<1x64x512xf32>
    %97 = vector.shape_cast %96 : vector<1x64x512xf32> to vector<64x512xf32>
    %98 = vector.shape_cast %95 : vector<64x512xf32> to vector<1x64x512xf32>
    tpu.vector_store %arg14[%c0_44, %c0_45, %c0_46], %98 {strides = array<i32>} : memref<1x64x512xf32, #tpu.memory_space<vmem>>, vector<1x64x512xf32>,
    return
  }
  func.func @transform_0(%arg0: i32) -> (i32, i32, i32) {
    %c0_i32 = arith.constant 0 : i32
    %c0_i32_0 = arith.constant 0 : i32
    %c0_i32_1 = arith.constant 0 : i32
    return %arg0, %c0_i32, %c0_i32_0 : i32, i32, i32
  }
  func.func @transform_1(%arg0: i32) -> (i32, i32) {
    %c0_i32 = arith.constant 0 : i32
    %c0_i32_0 = arith.constant 0 : i32
    %c0_i32_1 = arith.constant 0 : i32
    return %c0_i32, %c0_i32_0 : i32, i32
  }
  func.func @transform_2(%arg0: i32) -> (i32, i32) {
    %c0_i32 = arith.constant 0 : i32
    %c0_i32_0 = arith.constant 0 : i32
    %c0_i32_1 = arith.constant 0 : i32
    return %c0_i32, %c0_i32_0 : i32, i32
  }
  func.func @transform_3(%arg0: i32) -> (i32, i32) {
    %c0_i32 = arith.constant 0 : i32
    %c0_i32_0 = arith.constant 0 : i32
    %c0_i32_1 = arith.constant 0 : i32
    return %c0_i32, %c0_i32_0 : i32, i32
  }
  func.func @transform_4(%arg0: i32) -> (i32, i32) {
    %c0_i32 = arith.constant 0 : i32
    %c0_i32_0 = arith.constant 0 : i32
    %c0_i32_1 = arith.constant 0 : i32
    return %c0_i32, %c0_i32_0 : i32, i32
  }
  func.func @transform_5(%arg0: i32) -> (i32, i32) {
    %c0_i32 = arith.constant 0 : i32
    %c0_i32_0 = arith.constant 0 : i32
    %c0_i32_1 = arith.constant 0 : i32
    return %c0_i32, %c0_i32_0 : i32, i32
  }
  func.func @transform_6(%arg0: i32) -> (i32, i32) {
    %c0_i32 = arith.constant 0 : i32
    %c0_i32_0 = arith.constant 0 : i32
    %c0_i32_1 = arith.constant 0 : i32
    return %c0_i32, %c0_i32_0 : i32, i32
  }
  func.func @transform_7(%arg0: i32) -> (i32, i32) {
    %c0_i32 = arith.constant 0 : i32
    %c0_i32_0 = arith.constant 0 : i32
    %c0_i32_1 = arith.constant 0 : i32
    return %c0_i32, %c0_i32_0 : i32, i32
  }
  func.func @transform_8(%arg0: i32) -> (i32, i32) {
    %c0_i32 = arith.constant 0 : i32
    %c0_i32_0 = arith.constant 0 : i32
    %c0_i32_1 = arith.constant 0 : i32
    return %c0_i32, %c0_i32_0 : i32, i32
  }
  func.func @transform_9(%arg0: i32) -> (i32, i32) {
    %c0_i32 = arith.constant 0 : i32
    %c0_i32_0 = arith.constant 0 : i32
    %c0_i32_1 = arith.constant 0 : i32
    return %c0_i32, %c0_i32_0 : i32, i32
  }
  func.func @transform_10(%arg0: i32) -> (i32, i32) {
    %c0_i32 = arith.constant 0 : i32
    %c0_i32_0 = arith.constant 0 : i32
    %c0_i32_1 = arith.constant 0 : i32
    return %c0_i32, %c0_i32_0 : i32, i32
  }
  func.func @transform_11(%arg0: i32) -> (i32, i32) {
    %c0_i32 = arith.constant 0 : i32
    %c0_i32_0 = arith.constant 0 : i32
    %c0_i32_1 = arith.constant 0 : i32
    return %c0_i32, %c0_i32_0 : i32, i32
  }
  func.func @transform_12(%arg0: i32) -> (i32, i32) {
    %c0_i32 = arith.constant 0 : i32
    %c0_i32_0 = arith.constant 0 : i32
    %c0_i32_1 = arith.constant 0 : i32
    return %c0_i32, %c0_i32_0 : i32, i32
  }
  func.func @transform_13(%arg0: i32) -> (i32, i32, i32) {
    %c0_i32 = arith.constant 0 : i32
    %c0_i32_0 = arith.constant 0 : i32
    %c0_i32_1 = arith.constant 0 : i32
    return %arg0, %c0_i32, %c0_i32_0 : i32, i32, i32
  }
}

</mosaic_0001>

<llo_original>
// kernel: down_unit_forward.2
$region0: #{down_unit_forward.2}
  #allocation0 [shape = 'u32[]', space=smem, size = 0x4, offset = 0x4, fixed_abs, tag = 'smem constant byte address 0x4 - core index']
  #allocation1 [shape = 'u32[144,128]{1,0:T(1,128)}', space=vmem, size = 0x12000, scoped, tag = 'internal scratch']
  #allocation2 [shape = 'bf16[144,512]{1,0:T(8,128)(2,1)}', space=vmem, size = 0x24000, scoped, tag = 'scratch operand']
  %s0 = inlined_call_operand.vmem [shape: f32[1,32,512], index: 0, kind: input, shape index: {}]
  %s1 = inlined_call_operand.vmem [shape: f32[32,1], index: 1, kind: input, shape index: {}]
  %s2 = inlined_call_operand.vmem [shape: f32[32,1], index: 2, kind: input, shape index: {}]
  %s3 = inlined_call_operand.vmem [shape: bf16[16,32], index: 3, kind: input, shape index: {}]
  %s4 = inlined_call_operand.vmem [shape: f32[16,1], index: 4, kind: input, shape index: {}]
  %s5 = inlined_call_operand.vmem [shape: f32[16,1], index: 5, kind: input, shape index: {}]
  %s6 = inlined_call_operand.vmem [shape: bf16[16,144], index: 6, kind: input, shape index: {}]
  %s7 = inlined_call_operand.vmem [shape: f32[16,1], index: 7, kind: input, shape index: {}]
  %s8 = inlined_call_operand.vmem [shape: f32[16,1], index: 8, kind: input, shape index: {}]
  %s9 = inlined_call_operand.vmem [shape: f32[9,512], index: 9, kind: input, shape index: {}]
  %s10 = inlined_call_operand.vmem [shape: f32[32,1], index: 10, kind: input, shape index: {}]
  %s11 = inlined_call_operand.vmem [shape: f32[32,1], index: 11, kind: input, shape index: {}]
  %s12 = inlined_call_operand.vmem [shape: bf16[64,48], index: 12, kind: input, shape index: {}]
  %s13 = inlined_call_operand.vmem [shape: f32[1,64,512], index: 13, kind: output, shape index: {}]
  %s14 = sld [smem:[#allocation0]]
  $region62: #{down_unit_forward.2} parent=0
    _
  %s16 = ssub.s32 1, %s14
  %s17 = scalar_select 0, %s16, %s14
  // Predicated region
  $region2: #{down_unit_forward.2} parent=0 // pred_check
    _
  $region3: #{down_unit_forward.2} parent=0 // pred_check_branch
    %19 = sbr.rel (0) target = $region5
  $region4: #{down_unit_forward.2} parent=0 // pred_region
    _
  $region5: #{down_unit_forward.2} parent=0 // pred_fallthru
    _
  // Predicated region
  $region6: #{down_unit_forward.2} parent=0 // pred_check
    _
  $region7: #{down_unit_forward.2} parent=0 // pred_check_branch
    %21 = sbr.rel (0) target = $region9
  $region8: #{down_unit_forward.2} parent=0 // pred_region
    _
  $region9: #{down_unit_forward.2} parent=0 // pred_fallthru
    _
  // Predicated region
  $region10: #{down_unit_forward.2} parent=0 // pred_check
    _
  $region11: #{down_unit_forward.2} parent=0 // pred_check_branch
    %23 = sbr.rel (0) target = $region13
  $region12: #{down_unit_forward.2} parent=0 // pred_region
    _
  $region13: #{down_unit_forward.2} parent=0 // pred_fallthru
    _
  // Predicated region
  $region14: #{down_unit_forward.2} parent=0 // pred_check
    _
  $region15: #{down_unit_forward.2} parent=0 // pred_check_branch
    %25 = sbr.rel (0) target = $region17
  $region16: #{down_unit_forward.2} parent=0 // pred_region
    _
  $region17: #{down_unit_forward.2} parent=0 // pred_fallthru
    _
  // Predicated region
  $region18: #{down_unit_forward.2} parent=0 // pred_check
    _
  $region19: #{down_unit_forward.2} parent=0 // pred_check_branch
    %27 = sbr.rel (0) target = $region21
  $region20: #{down_unit_forward.2} parent=0 // pred_region
    _
  $region21: #{down_unit_forward.2} parent=0 // pred_fallthru
    _
  // Predicated region
  $region22: #{down_unit_forward.2} parent=0 // pred_check
    _
  $region23: #{down_unit_forward.2} parent=0 // pred_check_branch
    %29 = sbr.rel (0) target = $region25
  $region24: #{down_unit_forward.2} parent=0 // pred_region
    _
  $region25: #{down_unit_forward.2} parent=0 // pred_fallthru
    _
  // Predicated region
  $region26: #{down_unit_forward.2} parent=0 // pred_check
    _
  $region27: #{down_unit_forward.2} parent=0 // pred_check_branch
    %31 = sbr.rel (0) target = $region29
  $region28: #{down_unit_forward.2} parent=0 // pred_region
    _
  $region29: #{down_unit_forward.2} parent=0 // pred_fallthru
    _
  // Predicated region
  $region30: #{down_unit_forward.2} parent=0 // pred_check
    _
  $region31: #{down_unit_forward.2} parent=0 // pred_check_branch
    %33 = sbr.rel (0) target = $region33
  $region32: #{down_unit_forward.2} parent=0 // pred_region
    _
  $region33: #{down_unit_forward.2} parent=0 // pred_fallthru
    _
  // Predicated region
  $region34: #{down_unit_forward.2} parent=0 // pred_check
    _
  $region35: #{down_unit_forward.2} parent=0 // pred_check_branch
    %35 = sbr.rel (0) target = $region37
  $region36: #{down_unit_forward.2} parent=0 // pred_region
    _
  $region37: #{down_unit_forward.2} parent=0 // pred_fallthru
    _
  // Predicated region
  $region38: #{down_unit_forward.2} parent=0 // pred_check
    _
  $region39: #{down_unit_forward.2} parent=0 // pred_check_branch
    %37 = sbr.rel (0) target = $region41
  $region40: #{down_unit_forward.2} parent=0 // pred_region
    _
  $region41: #{down_unit_forward.2} parent=0 // pred_fallthru
    _
  // Predicated region
  $region42: #{down_unit_forward.2} parent=0 // pred_check
    _
  $region43: #{down_unit_forward.2} parent=0 // pred_check_branch
    %39 = sbr.rel (0) target = $region45
  $region44: #{down_unit_forward.2} parent=0 // pred_region
    _
  $region45: #{down_unit_forward.2} parent=0 // pred_fallthru
    _
  // Predicated region
  $region46: #{down_unit_forward.2} parent=0 // pred_check
    _
  $region47: #{down_unit_forward.2} parent=0 // pred_check_branch
    %41 = sbr.rel (0) target = $region49
  $region48: #{down_unit_forward.2} parent=0 // pred_region
    _
  $region49: #{down_unit_forward.2} parent=0 // pred_fallthru
    _
  // Predicated region
  $region50: #{down_unit_forward.2} parent=0 // pred_check
    _
  $region51: #{down_unit_forward.2} parent=0 // pred_check_branch
    %43 = sbr.rel (0) target = $region53
  $region52: #{down_unit_forward.2} parent=0 // pred_region
    _
  $region53: #{down_unit_forward.2} parent=0 // pred_fallthru
    _
  %v45 = vld [vmem:[%s0] sm:$0xff]
  %v46 = vld [vmem:[%s0 + $0x8] sm:$0xff]
  %v47 = vld [vmem:[%s0 + $0x10] sm:$0xff]
  %v48 = vld [vmem:[%s0 + $0x18] sm:$0xff]
  %v49 = vld [vmem:[%s0 + $0x20] sm:$0xff]
  %v50 = vld [vmem:[%s0 + $0x28] sm:$0xff]
  %v51 = vld [vmem:[%s0 + $0x30] sm:$0xff]
  %v52 = vld [vmem:[%s0 + $0x38] sm:$0xff]
  %v53 = vld [vmem:[%s0 + $0x40] sm:$0xff]
  %v54 = vld [vmem:[%s0 + $0x48] sm:$0xff]
  %v55 = vld [vmem:[%s0 + $0x50] sm:$0xff]
  %v56 = vld [vmem:[%s0 + $0x58] sm:$0xff]
  %v57 = vld [vmem:[%s0 + $0x60] sm:$0xff]
  %v58 = vld [vmem:[%s0 + $0x68] sm:$0xff]
  %v59 = vld [vmem:[%s0 + $0x70] sm:$0xff]
  %v60 = vld [vmem:[%s0 + $0x78] sm:$0xff]
  %v61 = vld [vmem:[%s1] sm:$0xff]
  %v62 = vld [vmem:[%s1 + $0x8] sm:$0xff]
  %v63 = vld [vmem:[%s1 + $0x10] sm:$0xff]
  %v64 = vld [vmem:[%s1 + $0x18] sm:$0xff]
  %66 = vset.pattern.permute.xlu0 0
  %67 = vperm.xlu0 %66, %v61
  %v68 = vpop.permute.xlu0 %67
  %71 = vset.pattern.permute.xlu0 0
  %72 = vperm.xlu0 %71, %v62
  %v73 = vpop.permute.xlu0 %72
  %76 = vset.pattern.permute.xlu0 0
  %77 = vperm.xlu0 %76, %v63
  %v78 = vpop.permute.xlu0 %77
  %81 = vset.pattern.permute.xlu0 0
  %82 = vperm.xlu0 %81, %v64
  %v83 = vpop.permute.xlu0 %82
  %v85 = vmul.f32 %v45, %v68
  %v86 = vmul.f32 %v46, %v68
  %v87 = vmul.f32 %v47, %v68
  %v88 = vmul.f32 %v48, %v68
  %v89 = vmul.f32 %v49, %v73
  %v90 = vmul.f32 %v50, %v73
  %v91 = vmul.f32 %v51, %v73
  %v92 = vmul.f32 %v52, %v73
  %v93 = vmul.f32 %v53, %v78
  %v94 = vmul.f32 %v54, %v78
  %v95 = vmul.f32 %v55, %v78
  %v96 = vmul.f32 %v56, %v78
  %v97 = vmul.f32 %v57, %v83
  %v98 = vmul.f32 %v58, %v83
  %v99 = vmul.f32 %v59, %v83
  %v100 = vmul.f32 %v60, %v83
  %v101 = vld [vmem:[%s2] sm:$0xff]
  %v102 = vld [vmem:[%s2 + $0x8] sm:$0xff]
  %v103 = vld [vmem:[%s2 + $0x10] sm:$0xff]
  %v104 = vld [vmem:[%s2 + $0x18] sm:$0xff]
  %106 = vset.pattern.permute.xlu0 0
  %107 = vperm.xlu0 %106, %v101
  %v108 = vpop.permute.xlu0 %107
  %111 = vset.pattern.permute.xlu0 0
  %112 = vperm.xlu0 %111, %v102
  %v113 = vpop.permute.xlu0 %112
  %116 = vset.pattern.permute.xlu0 0
  %117 = vperm.xlu0 %116, %v103
  %v118 = vpop.permute.xlu0 %117
  %121 = vset.pattern.permute.xlu0 0
  %122 = vperm.xlu0 %121, %v104
  %v123 = vpop.permute.xlu0 %122
  %v125 = vadd.f32 %v85, %v108
  %v126 = vadd.f32 %v86, %v108
  %v127 = vadd.f32 %v87, %v108
  %v128 = vadd.f32 %v88, %v108
  %v129 = vadd.f32 %v89, %v113
  %v130 = vadd.f32 %v90, %v113
  %v131 = vadd.f32 %v91, %v113
  %v132 = vadd.f32 %v92, %v113
  %v133 = vadd.f32 %v93, %v118
  %v134 = vadd.f32 %v94, %v118
  %v135 = vadd.f32 %v95, %v118
  %v136 = vadd.f32 %v96, %v118
  %v137 = vadd.f32 %v97, %v123
  %v138 = vadd.f32 %v98, %v123
  %v139 = vadd.f32 %v99, %v123
  %v140 = vadd.f32 %v100, %v123
  %v141 = vmax.f32 %v125, 0.0
  %v142 = vmax.f32 %v126, 0.0
  %v143 = vmax.f32 %v127, 0.0
  %v144 = vmax.f32 %v128, 0.0
  %v145 = vmax.f32 %v129, 0.0
  %v146 = vmax.f32 %v130, 0.0
  %v147 = vmax.f32 %v131, 0.0
  %v148 = vmax.f32 %v132, 0.0
  %v149 = vmax.f32 %v133, 0.0
  %v150 = vmax.f32 %v134, 0.0
  %v151 = vmax.f32 %v135, 0.0
  %v152 = vmax.f32 %v136, 0.0
  %v153 = vmax.f32 %v137, 0.0
  %v154 = vmax.f32 %v138, 0.0
  %v155 = vmax.f32 %v139, 0.0
  %v156 = vmax.f32 %v140, 0.0
  %v157 = vld [vmem:[%s3] sm:$0xf]
  %v158 = vld [vmem:[%s3 + $0x4] sm:$0xf]
  %v159 = vpack.c.bf16 %v145, %v141
  %v160 = vpack.c.bf16 %v146, %v142
  %v161 = vpack.c.bf16 %v147, %v143
  %v162 = vpack.c.bf16 %v148, %v144
  %v163 = vpack.c.bf16 %v153, %v149
  %v164 = vpack.c.bf16 %v154, %v150
  %v165 = vpack.c.bf16 %v155, %v151
  %v166 = vpack.c.bf16 %v156, %v152
  %v169 = vunpack.c.l.b16 %v157
  %v170 = vunpack.c.l.b16 %v158
  %v171 = vpack.c.b16 %v170, %v169
  %vm172 = vcmask 261120
  %v174 = vsel %vm172, %v171, 0
  %176 = vmatprep.subr.bf16.mxu0 0
  %177 = vmatpush1.bf16.msra.mxu0 0
  %178 = vmatprep.subr.bf16.mxu0 0
  %179 = vmatpush1.bf16.msra.mxu0 0
  %180 = vmatprep.subr.bf16.mxu0 0
  %181 = vmatpush1.bf16.msra.mxu0 0
  %182 = vmatprep.subr.bf16.mxu0 0
  %183 = vmatpush1.bf16.msra.mxu0 0
  %184 = vmatprep.subr.bf16.mxu0 0
  %185 = vmatpush1.bf16.msra.mxu0 0
  %186 = vmatprep.subr.bf16.mxu0 0
  %187 = vmatpush1.bf16.msra.mxu0 0
  %188 = vmatprep.subr.bf16.mxu0 %v164
  %189 = vmatpush1.bf16.msra.mxu0 %v163
  %190 = vmatprep.subr.bf16.mxu0 %v160
  %191 = vmatpush1.bf16.msra.mxu0 %v159
  %192 = vmatprep.subr.bf16.mxu0 0
  %193 = vmatpush2.bf16.msra.mxu0 0
  %194 = vmatprep.subr.bf16.mxu0 0
  %195 = vmatpush2.bf16.msra.mxu0 0
  %196 = vmatprep.subr.bf16.mxu0 0
  %197 = vmatpush2.bf16.msra.mxu0 0
  %198 = vmatprep.subr.bf16.mxu0 0
  %199 = vmatpush2.bf16.msra.mxu0 0
  %200 = vmatprep.subr.bf16.mxu0 0
  %201 = vmatpush2.bf16.msra.mxu0 0
  %202 = vmatprep.subr.bf16.mxu0 0
  %203 = vmatpush2.bf16.msra.mxu0 0
  %204 = vmatprep.subr.bf16.mxu0 0
  %205 = vmatpush2.bf16.msra.mxu0 0
  %206 = vmatprep.subr.bf16.mxu0 0
  %207 = vmatpush2.bf16.msra.mxu0 0
  %208 = vmatprep.mubr.bf16.mxu0 0
  %209 = vmatmul.mubr.bf16.gmra.mxu0 %v174
  %v210 = vpop.f32.mrf.mxu0
  %v211 = vadd.f32 0.0, %v210
  %v212 = vpop.f32.mrf.mxu0
  %v213 = vadd.f32 0.0, %v212
  %v214 = vpop.f32.mrf.mxu0
  %v215 = vadd.f32 0.0, %v214
  %v216 = vpop.f32.mrf.mxu0
  %v217 = vadd.f32 0.0, %v216
  %218 = vdwg.mxu0
  %219 = vmatprep.subr.bf16.mxu0 0
  %220 = vmatpush1.bf16.msra.mxu0 0
  %221 = vmatprep.subr.bf16.mxu0 0
  %222 = vmatpush1.bf16.msra.mxu0 0
  %223 = vmatprep.subr.bf16.mxu0 0
  %224 = vmatpush1.bf16.msra.mxu0 0
  %225 = vmatprep.subr.bf16.mxu0 0
  %226 = vmatpush1.bf16.msra.mxu0 0
  %227 = vmatprep.subr.bf16.mxu0 0
  %228 = vmatpush1.bf16.msra.mxu0 0
  %229 = vmatprep.subr.bf16.mxu0 0
  %230 = vmatpush1.bf16.msra.mxu0 0
  %231 = vmatprep.subr.bf16.mxu0 %v166
  %232 = vmatpush1.bf16.msra.mxu0 %v165
  %233 = vmatprep.subr.bf16.mxu0 %v162
  %234 = vmatpush1.bf16.msra.mxu0 %v161
  %235 = vmatprep.subr.bf16.mxu0 0
  %236 = vmatpush2.bf16.msra.mxu0 0
  %237 = vmatprep.subr.bf16.mxu0 0
  %238 = vmatpush2.bf16.msra.mxu0 0
  %239 = vmatprep.subr.bf16.mxu0 0
  %240 = vmatpush2.bf16.msra.mxu0 0
  %241 = vmatprep.subr.bf16.mxu0 0
  %242 = vmatpush2.bf16.msra.mxu0 0
  %243 = vmatprep.subr.bf16.mxu0 0
  %244 = vmatpush2.bf16.msra.mxu0 0
  %245 = vmatprep.subr.bf16.mxu0 0
  %246 = vmatpush2.bf16.msra.mxu0 0
  %247 = vmatprep.subr.bf16.mxu0 0
  %248 = vmatpush2.bf16.msra.mxu0 0
  %249 = vmatprep.subr.bf16.mxu0 0
  %250 = vmatpush2.bf16.msra.mxu0 0
  %251 = vmatprep.mubr.bf16.mxu0 0
  %252 = vmatmul.mubr.bf16.gmra.mxu0 %v174
  %v253 = vpop.f32.mrf.mxu0
  %v254 = vadd.f32 0.0, %v253
  %v255 = vpop.f32.mrf.mxu0
  %v256 = vadd.f32 0.0, %v255
  %v257 = vpop.f32.mrf.mxu0
  %v258 = vadd.f32 0.0, %v257
  %v259 = vpop.f32.mrf.mxu0
  %v260 = vadd.f32 0.0, %v259
  %261 = vdwg.mxu0
  %v262 = vld [vmem:[%s4] sm:$0xff]
  %v263 = vld [vmem:[%s4 + $0x8] sm:$0xff]
  %265 = vset.pattern.permute.xlu0 0
  %266 = vperm.xlu0 %265, %v262
  %v267 = vpop.permute.xlu0 %266
  %270 = vset.pattern.permute.xlu0 0
  %271 = vperm.xlu0 %270, %v263
  %v272 = vpop.permute.xlu0 %271
  %v274 = vmul.f32 %v211, %v267
  %v275 = vmul.f32 %v213, %v267
  %v276 = vmul.f32 %v254, %v267
  %v277 = vmul.f32 %v256, %v267
  %v278 = vmul.f32 %v215, %v272
  %v279 = vmul.f32 %v217, %v272
  %v280 = vmul.f32 %v258, %v272
  %v281 = vmul.f32 %v260, %v272
  %v282 = vld [vmem:[%s5] sm:$0xff]
  %v283 = vld [vmem:[%s5 + $0x8] sm:$0xff]
  %285 = vset.pattern.permute.xlu0 0
  %286 = vperm.xlu0 %285, %v282
  %v287 = vpop.permute.xlu0 %286
  %290 = vset.pattern.permute.xlu0 0
  %291 = vperm.xlu0 %290, %v283
  %v292 = vpop.permute.xlu0 %291
  %v294 = vadd.f32 %v274, %v287
  %v295 = vadd.f32 %v275, %v287
  %v296 = vadd.f32 %v276, %v287
  %v297 = vadd.f32 %v277, %v287
  %v298 = vadd.f32 %v278, %v292
  %v299 = vadd.f32 %v279, %v292
  %v300 = vadd.f32 %v280, %v292
  %v301 = vadd.f32 %v281, %v292
  %v302 = vmax.f32 %v294, 0.0
  %v303 = vmax.f32 %v295, 0.0
  %v304 = vmax.f32 %v296, 0.0
  %v305 = vmax.f32 %v297, 0.0
  %v306 = vmax.f32 %v298, 0.0
  %v307 = vmax.f32 %v299, 0.0
  %v308 = vmax.f32 %v300, 0.0
  %v309 = vmax.f32 %v301, 0.0
  %v310 = vld [vmem:[%s9] sm:$0xff]
  %v311 = vld [vmem:[%s9 + $0x8] sm:$0xff]
  %v312 = vld [vmem:[%s9 + $0x10] sm:$0xff]
  %v313 = vld [vmem:[%s9 + $0x18] sm:$0xff]
  %v314 = vld [vmem:[%s9 + $0x20] sm:$0x1]
  %v315 = vld [vmem:[%s9 + $0x28] sm:$0x1]
  %v316 = vld [vmem:[%s9 + $0x30] sm:$0x1]
  %v317 = vld [vmem:[%s9 + $0x38] sm:$0x1]
  %318 = vrot.lane.b32.xlu0 %v302, 17
  %v319 = vpop.permute.xlu0 %318
  %320 = vrot.lane.b32.xlu0 %v306, 17
  %v321 = vpop.permute.xlu0 %320
  %322 = vrot.lane.b32.xlu0 %v303, 17
  %v323 = vpop.permute.xlu0 %322
  %324 = vrot.lane.b32.xlu0 %v307, 17
  %v325 = vpop.permute.xlu0 %324
  %326 = vrot.lane.b32.xlu0 %v304, 17
  %v327 = vpop.permute.xlu0 %326
  %328 = vrot.lane.b32.xlu0 %v308, 17
  %v329 = vpop.permute.xlu0 %328
  %330 = vrot.lane.b32.xlu0 %v305, 17
  %v331 = vpop.permute.xlu0 %330
  %332 = vrot.lane.b32.xlu0 %v309, 17
  %v333 = vpop.permute.xlu0 %332
  %v334 = vlaneseq
  %v335 = vand.u32 %v334, 127
  %vm336 = vcmp.lt.s32.totalorder %v335, 17
  %v337 = vsel %vm336, %v327, %v331
  %v338 = vsel %vm336, %v329, %v333
  %v339 = vsel %vm336, %v323, %v327
  %v340 = vsel %vm336, %v325, %v329
  %v341 = vsel %vm336, %v319, %v323
  %v342 = vsel %vm336, %v321, %v325
  %v343 = vsel %vm336, %v331, %v319
  %v344 = vsel %vm336, %v333, %v321
  %v345 = vlaneseq
  %v346 = vshrl.u32 %v345, 7
  %v347 = vsub.s32 0, %v346
  %v348 = vrot.slane %v310, %v347
  %v349 = vlaneseq
  %v350 = vshrl.u32 %v349, 7
  %v351 = vsub.s32 0, %v350
  %v352 = vrot.slane %v311, %v351
  %v353 = vlaneseq
  %v354 = vshrl.u32 %v353, 7
  %v355 = vsub.s32 0, %v354
  %v356 = vrot.slane %v312, %v355
  %v357 = vlaneseq
  %v358 = vshrl.u32 %v357, 7
  %v359 = vsub.s32 0, %v358
  %v360 = vrot.slane %v313, %v359
  %v361 = vmul.f32 %v343, %v348
  %v362 = vmul.f32 %v341, %v352
  %v363 = vmul.f32 %v339, %v356
  %v364 = vmul.f32 %v337, %v360
  %v365 = vmul.f32 %v344, %v348
  %v366 = vmul.f32 %v342, %v352
  %v367 = vmul.f32 %v340, %v356
  %v368 = vmul.f32 %v338, %v360
  %v369 = vpack.c.bf16 %v365, %v361
  %v370 = vpack.c.bf16 %v366, %v362
  %v371 = vpack.c.bf16 %v367, %v363
  %v372 = vpack.c.bf16 %v368, %v364
  %v377 = vunpack.c.l.b16 %v369
  %v378 = vunpack.c.l.b16 %v370
  %v379 = vunpack.c.l.b16 %v371
  %v380 = vunpack.c.l.b16 %v372
  %v381 = vunpack.c.h.b16 %v369
  %v382 = vunpack.c.h.b16 %v370
  %v383 = vunpack.c.h.b16 %v371
  %v384 = vunpack.c.h.b16 %v372
  %v385 = vpack.c.b16 %v378, %v377
  %v386 = vpack.c.b16 %v380, %v379
  %v387 = vpack.c.b16 %v382, %v381
  %v388 = vpack.c.b16 %v384, %v383
  %393 = vst [vmem:[#allocation2] sm:$0xff] %v385
  %394 = vst [vmem:[#allocation2 + $0x8] sm:$0xff] %v386
  %395 = vst [vmem:[#allocation2 + $0x10] sm:$0xff] %v387
  %396 = vst [vmem:[#allocation2 + $0x18] sm:$0xff] %v388
  %397 = vrot.lane.b32.xlu0 %v302, 16
  %v398 = vpop.permute.xlu0 %397
  %399 = vrot.lane.b32.xlu0 %v306, 16
  %v400 = vpop.permute.xlu0 %399
  %401 = vrot.lane.b32.xlu0 %v303, 16
  %v402 = vpop.permute.xlu0 %401
  %403 = vrot.lane.b32.xlu0 %v307, 16
  %v404 = vpop.permute.xlu0 %403
  %405 = vrot.lane.b32.xlu0 %v304, 16
  %v406 = vpop.permute.xlu0 %405
  %407 = vrot.lane.b32.xlu0 %v308, 16
  %v408 = vpop.permute.xlu0 %407
  %409 = vrot.lane.b32.xlu0 %v305, 16
  %v410 = vpop.permute.xlu0 %409
  %411 = vrot.lane.b32.xlu0 %v309, 16
  %v412 = vpop.permute.xlu0 %411
  %vm413 = vcmp.lt.s32.totalorder %v335, 16
  %v414 = vsel %vm413, %v406, %v410
  %v415 = vsel %vm413, %v408, %v412
  %v416 = vsel %vm413, %v402, %v406
  %v417 = vsel %vm413, %v404, %v408
  %v418 = vsel %vm413, %v398, %v402
  %v419 = vsel %vm413, %v400, %v404
  %v420 = vsel %vm413, %v410, %v398
  %v421 = vsel %vm413, %v412, %v400
  %v422 = vlaneseq
  %v423 = vshrl.u32 %v422, 7
  %v424 = vsub.s32 1, %v423
  %v425 = vrot.slane %v310, %v424
  %v426 = vlaneseq
  %v427 = vshrl.u32 %v426, 7
  %v428 = vsub.s32 1, %v427
  %v429 = vrot.slane %v311, %v428
  %v430 = vlaneseq
  %v431 = vshrl.u32 %v430, 7
  %v432 = vsub.s32 1, %v431
  %v433 = vrot.slane %v312, %v432
  %v434 = vlaneseq
  %v435 = vshrl.u32 %v434, 7
  %v436 = vsub.s32 1, %v435
  %v437 = vrot.slane %v313, %v436
  %v438 = vmul.f32 %v420, %v425
  %v439 = vmul.f32 %v418, %v429
  %v440 = vmul.f32 %v416, %v433
  %v441 = vmul.f32 %v414, %v437
  %v442 = vmul.f32 %v421, %v425
  %v443 = vmul.f32 %v419, %v429
  %v444 = vmul.f32 %v417, %v433
  %v445 = vmul.f32 %v415, %v437
  %v446 = vpack.c.bf16 %v442, %v438
  %v447 = vpack.c.bf16 %v443, %v439
  %v448 = vpack.c.bf16 %v444, %v440
  %v449 = vpack.c.bf16 %v445, %v441
  %v454 = vunpack.c.l.b16 %v446
  %v455 = vunpack.c.l.b16 %v447
  %v456 = vunpack.c.l.b16 %v448
  %v457 = vunpack.c.l.b16 %v449
  %v458 = vunpack.c.h.b16 %v446
  %v459 = vunpack.c.h.b16 %v447
  %v460 = vunpack.c.h.b16 %v448
  %v461 = vunpack.c.h.b16 %v449
  %v462 = vpack.c.b16 %v455, %v454
  %v463 = vpack.c.b16 %v457, %v456
  %v464 = vpack.c.b16 %v459, %v458
  %v465 = vpack.c.b16 %v461, %v460
  %470 = vst [vmem:[#allocation2 + $0x20] sm:$0xff] %v462
  %471 = vst [vmem:[#allocation2 + $0x28] sm:$0xff] %v463
  %472 = vst [vmem:[#allocation2 + $0x30] sm:$0xff] %v464
  %473 = vst [vmem:[#allocation2 + $0x38] sm:$0xff] %v465
  %474 = vrot.lane.b32.xlu0 %v302, 15
  %v475 = vpop.permute.xlu0 %474
  %476 = vrot.lane.b32.xlu0 %v306, 15
  %v477 = vpop.permute.xlu0 %476
  %478 = vrot.lane.b32.xlu0 %v303, 15
  %v479 = vpop.permute.xlu0 %478
  %480 = vrot.lane.b32.xlu0 %v307, 15
  %v481 = vpop.permute.xlu0 %480
  %482 = vrot.lane.b32.xlu0 %v304, 15
  %v483 = vpop.permute.xlu0 %482
  %484 = vrot.lane.b32.xlu0 %v308, 15
  %v485 = vpop.permute.xlu0 %484
  %486 = vrot.lane.b32.xlu0 %v305, 15
  %v487 = vpop.permute.xlu0 %486
  %488 = vrot.lane.b32.xlu0 %v309, 15
  %v489 = vpop.permute.xlu0 %488
  %vm490 = vcmp.lt.s32.totalorder %v335, 15
  %v491 = vsel %vm490, %v483, %v487
  %v492 = vsel %vm490, %v485, %v489
  %v493 = vsel %vm490, %v479, %v483
  %v494 = vsel %vm490, %v481, %v485
  %v495 = vsel %vm490, %v475, %v479
  %v496 = vsel %vm490, %v477, %v481
  %v497 = vsel %vm490, %v487, %v475
  %v498 = vsel %vm490, %v489, %v477
  %v499 = vlaneseq
  %v500 = vshrl.u32 %v499, 7
  %v501 = vsub.s32 2, %v500
  %v502 = vrot.slane %v310, %v501
  %v503 = vlaneseq
  %v504 = vshrl.u32 %v503, 7
  %v505 = vsub.s32 2, %v504
  %v506 = vrot.slane %v311, %v505
  %v507 = vlaneseq
  %v508 = vshrl.u32 %v507, 7
  %v509 = vsub.s32 2, %v508
  %v510 = vrot.slane %v312, %v509
  %v511 = vlaneseq
  %v512 = vshrl.u32 %v511, 7
  %v513 = vsub.s32 2, %v512
  %v514 = vrot.slane %v313, %v513
  %v515 = vmul.f32 %v497, %v502
  %v516 = vmul.f32 %v495, %v506
  %v517 = vmul.f32 %v493, %v510
  %v518 = vmul.f32 %v491, %v514
  %v519 = vmul.f32 %v498, %v502
  %v520 = vmul.f32 %v496, %v506
  %v521 = vmul.f32 %v494, %v510
  %v522 = vmul.f32 %v492, %v514
  %v523 = vpack.c.bf16 %v519, %v515
  %v524 = vpack.c.bf16 %v520, %v516
  %v525 = vpack.c.bf16 %v521, %v517
  %v526 = vpack.c.bf16 %v522, %v518
  %v531 = vunpack.c.l.b16 %v523
  %v532 = vunpack.c.l.b16 %v524
  %v533 = vunpack.c.l.b16 %v525
  %v534 = vunpack.c.l.b16 %v526
  %v535 = vunpack.c.h.b16 %v523
  %v536 = vunpack.c.h.b16 %v524
  %v537 = vunpack.c.h.b16 %v525
  %v538 = vunpack.c.h.b16 %v526
  %v539 = vpack.c.b16 %v532, %v531
  %v540 = vpack.c.b16 %v534, %v533
  %v541 = vpack.c.b16 %v536, %v535
  %v542 = vpack.c.b16 %v538, %v537
  %547 = vst [vmem:[#allocation2 + $0x40] sm:$0xff] %v539
  %548 = vst [vmem:[#allocation2 + $0x48] sm:$0xff] %v540
  %549 = vst [vmem:[#allocation2 + $0x50] sm:$0xff] %v541
  %550 = vst [vmem:[#allocation2 + $0x58] sm:$0xff] %v542
  %551 = vrot.lane.b32.xlu0 %v302, 1
  %v552 = vpop.permute.xlu0 %551
  %553 = vrot.lane.b32.xlu0 %v306, 1
  %v554 = vpop.permute.xlu0 %553
  %555 = vrot.lane.b32.xlu0 %v303, 1
  %v556 = vpop.permute.xlu0 %555
  %557 = vrot.lane.b32.xlu0 %v307, 1
  %v558 = vpop.permute.xlu0 %557
  %559 = vrot.lane.b32.xlu0 %v304, 1
  %v560 = vpop.permute.xlu0 %559
  %561 = vrot.lane.b32.xlu0 %v308, 1
  %v562 = vpop.permute.xlu0 %561
  %563 = vrot.lane.b32.xlu0 %v305, 1
  %v564 = vpop.permute.xlu0 %563
  %565 = vrot.lane.b32.xlu0 %v309, 1
  %v566 = vpop.permute.xlu0 %565
  %vm567 = vcmp.lt.s32.totalorder %v335, 1
  %v568 = vsel %vm567, %v560, %v564
  %v569 = vsel %vm567, %v562, %v566
  %v570 = vsel %vm567, %v556, %v560
  %v571 = vsel %vm567, %v558, %v562
  %v572 = vsel %vm567, %v552, %v556
  %v573 = vsel %vm567, %v554, %v558
  %v574 = vsel %vm567, %v564, %v552
  %v575 = vsel %vm567, %v566, %v554
  %v576 = vlaneseq
  %v577 = vshrl.u32 %v576, 7
  %v578 = vsub.s32 3, %v577
  %v579 = vrot.slane %v310, %v578
  %v580 = vlaneseq
  %v581 = vshrl.u32 %v580, 7
  %v582 = vsub.s32 3, %v581
  %v583 = vrot.slane %v311, %v582
  %v584 = vlaneseq
  %v585 = vshrl.u32 %v584, 7
  %v586 = vsub.s32 3, %v585
  %v587 = vrot.slane %v312, %v586
  %v588 = vlaneseq
  %v589 = vshrl.u32 %v588, 7
  %v590 = vsub.s32 3, %v589
  %v591 = vrot.slane %v313, %v590
  %v592 = vmul.f32 %v574, %v579
  %v593 = vmul.f32 %v572, %v583
  %v594 = vmul.f32 %v570, %v587
  %v595 = vmul.f32 %v568, %v591
  %v596 = vmul.f32 %v575, %v579
  %v597 = vmul.f32 %v573, %v583
  %v598 = vmul.f32 %v571, %v587
  %v599 = vmul.f32 %v569, %v591
  %v600 = vpack.c.bf16 %v596, %v592
  %v601 = vpack.c.bf16 %v597, %v593
  %v602 = vpack.c.bf16 %v598, %v594
  %v603 = vpack.c.bf16 %v599, %v595
  %v608 = vunpack.c.l.b16 %v600
  %v609 = vunpack.c.l.b16 %v601
  %v610 = vunpack.c.l.b16 %v602
  %v611 = vunpack.c.l.b16 %v603
  %v612 = vunpack.c.h.b16 %v600
  %v613 = vunpack.c.h.b16 %v601
  %v614 = vunpack.c.h.b16 %v602
  %v615 = vunpack.c.h.b16 %v603
  %v616 = vpack.c.b16 %v609, %v608
  %v617 = vpack.c.b16 %v611, %v610
  %v618 = vpack.c.b16 %v613, %v612
  %v619 = vpack.c.b16 %v615, %v614
  %624 = vst [vmem:[#allocation2 + $0x60] sm:$0xff] %v616
  %625 = vst [vmem:[#allocation2 + $0x68] sm:$0xff] %v617
  %626 = vst [vmem:[#allocation2 + $0x70] sm:$0xff] %v618
  %627 = vst [vmem:[#allocation2 + $0x78] sm:$0xff] %v619
  %v628 = vpack.c.bf16 %v306, %v302
  %v629 = vpack.c.bf16 %v307, %v303
  %v630 = vpack.c.bf16 %v308, %v304
  %v631 = vpack.c.bf16 %v309, %v305
  %v636 = vunpack.c.l.b16 %v628
  %v637 = vunpack.c.l.b16 %v629
  %v638 = vunpack.c.l.b16 %v630
  %v639 = vunpack.c.l.b16 %v631
  %v640 = vunpack.c.h.b16 %v628
  %v641 = vunpack.c.h.b16 %v629
  %v642 = vunpack.c.h.b16 %v630
  %v643 = vunpack.c.h.b16 %v631
  %v644 = vpack.c.b16 %v637, %v636
  %v645 = vpack.c.b16 %v639, %v638
  %v646 = vpack.c.b16 %v641, %v640
  %v647 = vpack.c.b16 %v643, %v642
  %652 = vst [vmem:[#allocation2 + $0x80] sm:$0xff] %v644
  %653 = vst [vmem:[#allocation2 + $0x88] sm:$0xff] %v645
  %654 = vst [vmem:[#allocation2 + $0x90] sm:$0xff] %v646
  %655 = vst [vmem:[#allocation2 + $0x98] sm:$0xff] %v647
  %656 = vrot.lane.b32.xlu0 %v302, 127
  %v657 = vpop.permute.xlu0 %656
  %658 = vrot.lane.b32.xlu0 %v306, 127
  %v659 = vpop.permute.xlu0 %658
  %660 = vrot.lane.b32.xlu0 %v303, 127
  %v661 = vpop.permute.xlu0 %660
  %662 = vrot.lane.b32.xlu0 %v307, 127
  %v663 = vpop.permute.xlu0 %662
  %664 = vrot.lane.b32.xlu0 %v304, 127
  %v665 = vpop.permute.xlu0 %664
  %666 = vrot.lane.b32.xlu0 %v308, 127
  %v667 = vpop.permute.xlu0 %666
  %668 = vrot.lane.b32.xlu0 %v305, 127
  %v669 = vpop.permute.xlu0 %668
  %670 = vrot.lane.b32.xlu0 %v309, 127
  %v671 = vpop.permute.xlu0 %670
  %vm672 = vcmp.lt.s32.totalorder %v335, 127
  %v673 = vsel %vm672, %v665, %v669
  %v674 = vsel %vm672, %v667, %v671
  %v675 = vsel %vm672, %v661, %v665
  %v676 = vsel %vm672, %v663, %v667
  %v677 = vsel %vm672, %v657, %v661
  %v678 = vsel %vm672, %v659, %v663
  %v679 = vsel %vm672, %v669, %v657
  %v680 = vsel %vm672, %v671, %v659
  %v681 = vlaneseq
  %v682 = vshrl.u32 %v681, 7
  %v683 = vsub.s32 5, %v682
  %v684 = vrot.slane %v310, %v683
  %v685 = vlaneseq
  %v686 = vshrl.u32 %v685, 7
  %v687 = vsub.s32 5, %v686
  %v688 = vrot.slane %v311, %v687
  %v689 = vlaneseq
  %v690 = vshrl.u32 %v689, 7
  %v691 = vsub.s32 5, %v690
  %v692 = vrot.slane %v312, %v691
  %v693 = vlaneseq
  %v694 = vshrl.u32 %v693, 7
  %v695 = vsub.s32 5, %v694
  %v696 = vrot.slane %v313, %v695
  %v697 = vmul.f32 %v677, %v684
  %v698 = vmul.f32 %v675, %v688
  %v699 = vmul.f32 %v673, %v692
  %v700 = vmul.f32 %v679, %v696
  %v701 = vmul.f32 %v678, %v684
  %v702 = vmul.f32 %v676, %v688
  %v703 = vmul.f32 %v674, %v692
  %v704 = vmul.f32 %v680, %v696
  %v705 = vpack.c.bf16 %v701, %v697
  %v706 = vpack.c.bf16 %v702, %v698
  %v707 = vpack.c.bf16 %v703, %v699
  %v708 = vpack.c.bf16 %v704, %v700
  %v713 = vunpack.c.l.b16 %v705
  %v714 = vunpack.c.l.b16 %v706
  %v715 = vunpack.c.l.b16 %v707
  %v716 = vunpack.c.l.b16 %v708
  %v717 = vunpack.c.h.b16 %v705
  %v718 = vunpack.c.h.b16 %v706
  %v719 = vunpack.c.h.b16 %v707
  %v720 = vunpack.c.h.b16 %v708
  %v721 = vpack.c.b16 %v714, %v713
  %v722 = vpack.c.b16 %v716, %v715
  %v723 = vpack.c.b16 %v718, %v717
  %v724 = vpack.c.b16 %v720, %v719
  %729 = vst [vmem:[#allocation2 + $0xa0] sm:$0xff] %v721
  %730 = vst [vmem:[#allocation2 + $0xa8] sm:$0xff] %v722
  %731 = vst [vmem:[#allocation2 + $0xb0] sm:$0xff] %v723
  %732 = vst [vmem:[#allocation2 + $0xb8] sm:$0xff] %v724
  %733 = vrot.lane.b32.xlu0 %v302, 113
  %v734 = vpop.permute.xlu0 %733
  %735 = vrot.lane.b32.xlu0 %v306, 113
  %v736 = vpop.permute.xlu0 %735
  %737 = vrot.lane.b32.xlu0 %v303, 113
  %v738 = vpop.permute.xlu0 %737
  %739 = vrot.lane.b32.xlu0 %v307, 113
  %v740 = vpop.permute.xlu0 %739
  %741 = vrot.lane.b32.xlu0 %v304, 113
  %v742 = vpop.permute.xlu0 %741
  %743 = vrot.lane.b32.xlu0 %v308, 113
  %v744 = vpop.permute.xlu0 %743
  %745 = vrot.lane.b32.xlu0 %v305, 113
  %v746 = vpop.permute.xlu0 %745
  %747 = vrot.lane.b32.xlu0 %v309, 113
  %v748 = vpop.permute.xlu0 %747
  %vm749 = vcmp.lt.s32.totalorder %v335, 113
  %v750 = vsel %vm749, %v742, %v746
  %v751 = vsel %vm749, %v744, %v748
  %v752 = vsel %vm749, %v738, %v742
  %v753 = vsel %vm749, %v740, %v744
  %v754 = vsel %vm749, %v734, %v738
  %v755 = vsel %vm749, %v736, %v740
  %v756 = vsel %vm749, %v746, %v734
  %v757 = vsel %vm749, %v748, %v736
  %v758 = vlaneseq
  %v759 = vshrl.u32 %v758, 7
  %v760 = vsub.s32 6, %v759
  %v761 = vrot.slane %v310, %v760
  %v762 = vlaneseq
  %v763 = vshrl.u32 %v762, 7
  %v764 = vsub.s32 6, %v763
  %v765 = vrot.slane %v311, %v764
  %v766 = vlaneseq
  %v767 = vshrl.u32 %v766, 7
  %v768 = vsub.s32 6, %v767
  %v769 = vrot.slane %v312, %v768
  %v770 = vlaneseq
  %v771 = vshrl.u32 %v770, 7
  %v772 = vsub.s32 6, %v771
  %v773 = vrot.slane %v313, %v772
  %v774 = vmul.f32 %v754, %v761
  %v775 = vmul.f32 %v752, %v765
  %v776 = vmul.f32 %v750, %v769
  %v777 = vmul.f32 %v756, %v773
  %v778 = vmul.f32 %v755, %v761
  %v779 = vmul.f32 %v753, %v765
  %v780 = vmul.f32 %v751, %v769
  %v781 = vmul.f32 %v757, %v773
  %v782 = vpack.c.bf16 %v778, %v774
  %v783 = vpack.c.bf16 %v779, %v775
  %v784 = vpack.c.bf16 %v780, %v776
  %v785 = vpack.c.bf16 %v781, %v777
  %v790 = vunpack.c.l.b16 %v782
  %v791 = vunpack.c.l.b16 %v783
  %v792 = vunpack.c.l.b16 %v784
  %v793 = vunpack.c.l.b16 %v785
  %v794 = vunpack.c.h.b16 %v782
  %v795 = vunpack.c.h.b16 %v783
  %v796 = vunpack.c.h.b16 %v784
  %v797 = vunpack.c.h.b16 %v785
  %v798 = vpack.c.b16 %v791, %v790
  %v799 = vpack.c.b16 %v793, %v792
  %v800 = vpack.c.b16 %v795, %v794
  %v801 = vpack.c.b16 %v797, %v796
  %806 = vst [vmem:[#allocation2 + $0xc0] sm:$0xff] %v798
  %807 = vst [vmem:[#allocation2 + $0xc8] sm:$0xff] %v799
  %808 = vst [vmem:[#allocation2 + $0xd0] sm:$0xff] %v800
  %809 = vst [vmem:[#allocation2 + $0xd8] sm:$0xff] %v801
  %810 = vrot.lane.b32.xlu0 %v302, 112
  %v811 = vpop.permute.xlu0 %810
  %812 = vrot.lane.b32.xlu0 %v306, 112
  %v813 = vpop.permute.xlu0 %812
  %814 = vrot.lane.b32.xlu0 %v303, 112
  %v815 = vpop.permute.xlu0 %814
  %816 = vrot.lane.b32.xlu0 %v307, 112
  %v817 = vpop.permute.xlu0 %816
  %818 = vrot.lane.b32.xlu0 %v304, 112
  %v819 = vpop.permute.xlu0 %818
  %820 = vrot.lane.b32.xlu0 %v308, 112
  %v821 = vpop.permute.xlu0 %820
  %822 = vrot.lane.b32.xlu0 %v305, 112
  %v823 = vpop.permute.xlu0 %822
  %824 = vrot.lane.b32.xlu0 %v309, 112
  %v825 = vpop.permute.xlu0 %824
  %vm826 = vcmp.lt.s32.totalorder %v335, 112
  %v827 = vsel %vm826, %v819, %v823
  %v828 = vsel %vm826, %v821, %v825
  %v829 = vsel %vm826, %v815, %v819
  %v830 = vsel %vm826, %v817, %v821
  %v831 = vsel %vm826, %v811, %v815
  %v832 = vsel %vm826, %v813, %v817
  %v833 = vsel %vm826, %v823, %v811
  %v834 = vsel %vm826, %v825, %v813
  %v835 = vlaneseq
  %v836 = vshrl.u32 %v835, 7
  %v837 = vsub.s32 7, %v836
  %v838 = vrot.slane %v310, %v837
  %v839 = vlaneseq
  %v840 = vshrl.u32 %v839, 7
  %v841 = vsub.s32 7, %v840
  %v842 = vrot.slane %v311, %v841
  %v843 = vlaneseq
  %v844 = vshrl.u32 %v843, 7
  %v845 = vsub.s32 7, %v844
  %v846 = vrot.slane %v312, %v845
  %v847 = vlaneseq
  %v848 = vshrl.u32 %v847, 7
  %v849 = vsub.s32 7, %v848
  %v850 = vrot.slane %v313, %v849
  %v851 = vmul.f32 %v831, %v838
  %v852 = vmul.f32 %v829, %v842
  %v853 = vmul.f32 %v827, %v846
  %v854 = vmul.f32 %v833, %v850
  %v855 = vmul.f32 %v832, %v838
  %v856 = vmul.f32 %v830, %v842
  %v857 = vmul.f32 %v828, %v846
  %v858 = vmul.f32 %v834, %v850
  %v859 = vpack.c.bf16 %v855, %v851
  %v860 = vpack.c.bf16 %v856, %v852
  %v861 = vpack.c.bf16 %v857, %v853
  %v862 = vpack.c.bf16 %v858, %v854
  %v867 = vunpack.c.l.b16 %v859
  %v868 = vunpack.c.l.b16 %v860
  %v869 = vunpack.c.l.b16 %v861
  %v870 = vunpack.c.l.b16 %v862
  %v871 = vunpack.c.h.b16 %v859
  %v872 = vunpack.c.h.b16 %v860
  %v873 = vunpack.c.h.b16 %v861
  %v874 = vunpack.c.h.b16 %v862
  %v875 = vpack.c.b16 %v868, %v867
  %v876 = vpack.c.b16 %v870, %v869
  %v877 = vpack.c.b16 %v872, %v871
  %v878 = vpack.c.b16 %v874, %v873
  %883 = vst [vmem:[#allocation2 + $0xe0] sm:$0xff] %v875
  %884 = vst [vmem:[#allocation2 + $0xe8] sm:$0xff] %v876
  %885 = vst [vmem:[#allocation2 + $0xf0] sm:$0xff] %v877
  %886 = vst [vmem:[#allocation2 + $0xf8] sm:$0xff] %v878
  %887 = vrot.lane.b32.xlu0 %v302, 111
  %v888 = vpop.permute.xlu0 %887
  %889 = vrot.lane.b32.xlu0 %v306, 111
  %v890 = vpop.permute.xlu0 %889
  %891 = vrot.lane.b32.xlu0 %v303, 111
  %v892 = vpop.permute.xlu0 %891
  %893 = vrot.lane.b32.xlu0 %v307, 111
  %v894 = vpop.permute.xlu0 %893
  %895 = vrot.lane.b32.xlu0 %v304, 111
  %v896 = vpop.permute.xlu0 %895
  %897 = vrot.lane.b32.xlu0 %v308, 111
  %v898 = vpop.permute.xlu0 %897
  %899 = vrot.lane.b32.xlu0 %v305, 111
  %v900 = vpop.permute.xlu0 %899
  %901 = vrot.lane.b32.xlu0 %v309, 111
  %v902 = vpop.permute.xlu0 %901
  %vm903 = vcmp.lt.s32.totalorder %v335, 111
  %v904 = vsel %vm903, %v896, %v900
  %v905 = vsel %vm903, %v898, %v902
  %v906 = vsel %vm903, %v892, %v896
  %v907 = vsel %vm903, %v894, %v898
  %v908 = vsel %vm903, %v888, %v892
  %v909 = vsel %vm903, %v890, %v894
  %v910 = vsel %vm903, %v900, %v888
  %v911 = vsel %vm903, %v902, %v890
  %v912 = vlaneseq
  %v913 = vshrl.u32 %v912, 7
  %v914 = vsub.s32 0, %v913
  %v915 = vrot.slane %v314, %v914
  %v916 = vlaneseq
  %v917 = vshrl.u32 %v916, 7
  %v918 = vsub.s32 0, %v917
  %v919 = vrot.slane %v315, %v918
  %v920 = vlaneseq
  %v921 = vshrl.u32 %v920, 7
  %v922 = vsub.s32 0, %v921
  %v923 = vrot.slane %v316, %v922
  %v924 = vlaneseq
  %v925 = vshrl.u32 %v924, 7
  %v926 = vsub.s32 0, %v925
  %v927 = vrot.slane %v317, %v926
  %v928 = vmul.f32 %v908, %v915
  %v929 = vmul.f32 %v906, %v919
  %v930 = vmul.f32 %v904, %v923
  %v931 = vmul.f32 %v910, %v927
  %v932 = vmul.f32 %v909, %v915
  %v933 = vmul.f32 %v907, %v919
  %v934 = vmul.f32 %v905, %v923
  %v935 = vmul.f32 %v911, %v927
  %v936 = vpack.c.bf16 %v932, %v928
  %v937 = vpack.c.bf16 %v933, %v929
  %v938 = vpack.c.bf16 %v934, %v930
  %v939 = vpack.c.bf16 %v935, %v931
  %v944 = vunpack.c.l.b16 %v936
  %v945 = vunpack.c.l.b16 %v937
  %v946 = vunpack.c.l.b16 %v938
  %v947 = vunpack.c.l.b16 %v939
  %v948 = vunpack.c.h.b16 %v936
  %v949 = vunpack.c.h.b16 %v937
  %v950 = vunpack.c.h.b16 %v938
  %v951 = vunpack.c.h.b16 %v939
  %v952 = vpack.c.b16 %v945, %v944
  %v953 = vpack.c.b16 %v947, %v946
  %v954 = vpack.c.b16 %v949, %v948
  %v955 = vpack.c.b16 %v951, %v950
  %960 = vst [vmem:[#allocation2 + $0x100] sm:$0xff] %v952
  %961 = vst [vmem:[#allocation2 + $0x108] sm:$0xff] %v953
  %962 = vst [vmem:[#allocation2 + $0x110] sm:$0xff] %v954
  %963 = vst [vmem:[#allocation2 + $0x118] sm:$0xff] %v955
  %v964 = vld [vmem:[%s6] sm:$0xff]
  %v965 = vld [vmem:[%s6 + $0x8] sm:$0xff]
  %v966 = vld [vmem:[#allocation2] sm:$0xff]
  %v967 = vld [vmem:[#allocation2 + $0x8] sm:$0xff]
  %v968 = vld [vmem:[#allocation2 + $0x10] sm:$0xff]
  %v969 = vld [vmem:[#allocation2 + $0x18] sm:$0xff]
  %v970 = vld [vmem:[#allocation2 + $0x20] sm:$0xff]
  %v971 = vld [vmem:[#allocation2 + $0x28] sm:$0xff]
  %v972 = vld [vmem:[#allocation2 + $0x30] sm:$0xff]
  %v973 = vld [vmem:[#allocation2 + $0x38] sm:$0xff]
  %v974 = vld [vmem:[#allocation2 + $0x40] sm:$0xff]
  %v975 = vld [vmem:[#allocation2 + $0x48] sm:$0xff]
  %v976 = vld [vmem:[#allocation2 + $0x50] sm:$0xff]
  %v977 = vld [vmem:[#allocation2 + $0x58] sm:$0xff]
  %v978 = vld [vmem:[#allocation2 + $0x60] sm:$0xff]
  %v979 = vld [vmem:[#allocation2 + $0x68] sm:$0xff]
  %v980 = vld [vmem:[#allocation2 + $0x70] sm:$0xff]
  %v981 = vld [vmem:[#allocation2 + $0x78] sm:$0xff]
  %v982 = vld [vmem:[#allocation2 + $0x80] sm:$0xff]
  %v983 = vld [vmem:[#allocation2 + $0x88] sm:$0xff]
  %v984 = vld [vmem:[#allocation2 + $0x90] sm:$0xff]
  %v985 = vld [vmem:[#allocation2 + $0x98] sm:$0xff]
  %v986 = vld [vmem:[#allocation2 + $0xa0] sm:$0xff]
  %v987 = vld [vmem:[#allocation2 + $0xa8] sm:$0xff]
  %v988 = vld [vmem:[#allocation2 + $0xb0] sm:$0xff]
  %v989 = vld [vmem:[#allocation2 + $0xb8] sm:$0xff]
  %v990 = vld [vmem:[#allocation2 + $0xc0] sm:$0xff]
  %v991 = vld [vmem:[#allocation2 + $0xc8] sm:$0xff]
  %v992 = vld [vmem:[#allocation2 + $0xd0] sm:$0xff]
  %v993 = vld [vmem:[#allocation2 + $0xd8] sm:$0xff]
  %v994 = vld [vmem:[#allocation2 + $0xe0] sm:$0xff]
  %v995 = vld [vmem:[#allocation2 + $0xe8] sm:$0xff]
  %v996 = vld [vmem:[#allocation2 + $0xf0] sm:$0xff]
  %v997 = vld [vmem:[#allocation2 + $0xf8] sm:$0xff]
  %v998 = vld [vmem:[#allocation2 + $0x100] sm:$0xff]
  %v999 = vld [vmem:[#allocation2 + $0x108] sm:$0xff]
  %v1000 = vld [vmem:[#allocation2 + $0x110] sm:$0xff]
  %v1001 = vld [vmem:[#allocation2 + $0x118] sm:$0xff]
  %v1004 = vunpack.c.l.b16 %v964
  %v1005 = vunpack.c.h.b16 %v964
  %v1006 = vunpack.c.l.b16 %v965
  %v1007 = vunpack.c.h.b16 %v965
  %v1008 = vpack.c.b16 %v1006, %v1004
  %v1009 = vpack.c.b16 %v1007, %v1005
  %v1047 = vunpack.c.l.b16 %v966
  %v1048 = vunpack.c.h.b16 %v966
  %v1049 = vunpack.c.l.b16 %v967
  %v1050 = vunpack.c.h.b16 %v967
  %v1051 = vunpack.c.l.b16 %v968
  %v1052 = vunpack.c.h.b16 %v968
  %v1053 = vunpack.c.l.b16 %v969
  %v1054 = vunpack.c.h.b16 %v969
  %v1055 = vunpack.c.l.b16 %v970
  %v1056 = vunpack.c.h.b16 %v970
  %v1057 = vunpack.c.l.b16 %v971
  %v1058 = vunpack.c.h.b16 %v971
  %v1059 = vunpack.c.l.b16 %v972
  %v1060 = vunpack.c.h.b16 %v972
  %v1061 = vunpack.c.l.b16 %v973
  %v1062 = vunpack.c.h.b16 %v973
  %v1063 = vunpack.c.l.b16 %v974
  %v1064 = vunpack.c.h.b16 %v974
  %v1065 = vunpack.c.l.b16 %v975
  %v1066 = vunpack.c.h.b16 %v975
  %v1067 = vunpack.c.l.b16 %v976
  %v1068 = vunpack.c.h.b16 %v976
  %v1069 = vunpack.c.l.b16 %v977
  %v1070 = vunpack.c.h.b16 %v977
  %v1071 = vunpack.c.l.b16 %v978
  %v1072 = vunpack.c.h.b16 %v978
  %v1073 = vunpack.c.l.b16 %v979
  %v1074 = vunpack.c.h.b16 %v979
  %v1075 = vunpack.c.l.b16 %v980
  %v1076 = vunpack.c.h.b16 %v980
  %v1077 = vunpack.c.l.b16 %v981
  %v1078 = vunpack.c.h.b16 %v981
  %v1079 = vunpack.c.l.b16 %v982
  %v1080 = vunpack.c.h.b16 %v982
  %v1081 = vunpack.c.l.b16 %v983
  %v1082 = vunpack.c.h.b16 %v983
  %v1083 = vunpack.c.l.b16 %v984
  %v1084 = vunpack.c.h.b16 %v984
  %v1085 = vunpack.c.l.b16 %v985
  %v1086 = vunpack.c.h.b16 %v985
  %v1087 = vunpack.c.l.b16 %v986
  %v1088 = vunpack.c.h.b16 %v986
  %v1089 = vunpack.c.l.b16 %v987
  %v1090 = vunpack.c.h.b16 %v987
  %v1091 = vunpack.c.l.b16 %v988
  %v1092 = vunpack.c.h.b16 %v988
  %v1093 = vunpack.c.l.b16 %v989
  %v1094 = vunpack.c.h.b16 %v989
  %v1095 = vunpack.c.l.b16 %v990
  %v1096 = vunpack.c.h.b16 %v990
  %v1097 = vunpack.c.l.b16 %v991
  %v1098 = vunpack.c.h.b16 %v991
  %v1099 = vunpack.c.l.b16 %v992
  %v1100 = vunpack.c.h.b16 %v992
  %v1101 = vunpack.c.l.b16 %v993
  %v1102 = vunpack.c.h.b16 %v993
  %v1103 = vunpack.c.l.b16 %v994
  %v1104 = vunpack.c.h.b16 %v994
  %v1105 = vunpack.c.l.b16 %v995
  %v1106 = vunpack.c.h.b16 %v995
  %v1107 = vunpack.c.l.b16 %v996
  %v1108 = vunpack.c.h.b16 %v996
  %v1109 = vunpack.c.l.b16 %v997
  %v1110 = vunpack.c.h.b16 %v997
  %v1111 = vunpack.c.l.b16 %v998
  %v1112 = vunpack.c.h.b16 %v998
  %v1113 = vunpack.c.l.b16 %v999
  %v1114 = vunpack.c.h.b16 %v999
  %v1115 = vunpack.c.l.b16 %v1000
  %v1116 = vunpack.c.h.b16 %v1000
  %v1117 = vunpack.c.l.b16 %v1001
  %v1118 = vunpack.c.h.b16 %v1001
  %v1119 = vpack.c.b16 %v1051, %v1047
  %v1120 = vpack.c.b16 %v1052, %v1048
  %v1121 = vpack.c.b16 %v1053, %v1049
  %v1122 = vpack.c.b16 %v1054, %v1050
  %v1123 = vpack.c.b16 %v1059, %v1055
  %v1124 = vpack.c.b16 %v1060, %v1056
  %v1125 = vpack.c.b16 %v1061, %v1057
  %v1126 = vpack.c.b16 %v1062, %v1058
  %v1127 = vpack.c.b16 %v1067, %v1063
  %v1128 = vpack.c.b16 %v1068, %v1064
  %v1129 = vpack.c.b16 %v1069, %v1065
  %v1130 = vpack.c.b16 %v1070, %v1066
  %v1131 = vpack.c.b16 %v1075, %v1071
  %v1132 = vpack.c.b16 %v1076, %v1072
  %v1133 = vpack.c.b16 %v1077, %v1073
  %v1134 = vpack.c.b16 %v1078, %v1074
  %v1135 = vpack.c.b16 %v1083, %v1079
  %v1136 = vpack.c.b16 %v1084, %v1080
  %v1137 = vpack.c.b16 %v1085, %v1081
  %v1138 = vpack.c.b16 %v1086, %v1082
  %v1139 = vpack.c.b16 %v1091, %v1087
  %v1140 = vpack.c.b16 %v1092, %v1088
  %v1141 = vpack.c.b16 %v1093, %v1089
  %v1142 = vpack.c.b16 %v1094, %v1090
  %v1143 = vpack.c.b16 %v1099, %v1095
  %v1144 = vpack.c.b16 %v1100, %v1096
  %v1145 = vpack.c.b16 %v1101, %v1097
  %v1146 = vpack.c.b16 %v1102, %v1098
  %v1147 = vpack.c.b16 %v1107, %v1103
  %v1148 = vpack.c.b16 %v1108, %v1104
  %v1149 = vpack.c.b16 %v1109, %v1105
  %v1150 = vpack.c.b16 %v1110, %v1106
  %v1151 = vpack.c.b16 %v1115, %v1111
  %v1152 = vpack.c.b16 %v1116, %v1112
  %v1153 = vpack.c.b16 %v1117, %v1113
  %v1154 = vpack.c.b16 %v1118, %v1114
  %vm1191 = vcmask 130048
  %v1193 = vsel %vm1191, %v1009, 0
  %1195 = vmatprep.subr.bf16.mxu0 %v1148
  %1196 = vmatpush1.bf16.msra.mxu0 %v1147
  %1197 = vmatprep.subr.bf16.mxu0 %v1144
  %1198 = vmatpush1.bf16.msra.mxu0 %v1143
  %1199 = vmatprep.subr.bf16.mxu0 %v1140
  %1200 = vmatpush1.bf16.msra.mxu0 %v1139
  %1201 = vmatprep.subr.bf16.mxu0 %v1136
  %1202 = vmatpush1.bf16.msra.mxu0 %v1135
  %1203 = vmatprep.subr.bf16.mxu0 %v1132
  %1204 = vmatpush1.bf16.msra.mxu0 %v1131
  %1205 = vmatprep.subr.bf16.mxu0 %v1128
  %1206 = vmatpush1.bf16.msra.mxu0 %v1127
  %1207 = vmatprep.subr.bf16.mxu0 %v1124
  %1208 = vmatpush1.bf16.msra.mxu0 %v1123
  %1209 = vmatprep.subr.bf16.mxu0 %v1120
  %1210 = vmatpush1.bf16.msra.mxu0 %v1119
  %1211 = vmatprep.subr.bf16.mxu0 0
  %1212 = vmatpush2.bf16.msra.mxu0 0
  %1213 = vmatprep.subr.bf16.mxu0 0
  %1214 = vmatpush2.bf16.msra.mxu0 0
  %1215 = vmatprep.subr.bf16.mxu0 0
  %1216 = vmatpush2.bf16.msra.mxu0 0
  %1217 = vmatprep.subr.bf16.mxu0 0
  %1218 = vmatpush2.bf16.msra.mxu0 0
  %1219 = vmatprep.subr.bf16.mxu0 0
  %1220 = vmatpush2.bf16.msra.mxu0 0
  %1221 = vmatprep.subr.bf16.mxu0 0
  %1222 = vmatpush2.bf16.msra.mxu0 0
  %1223 = vmatprep.subr.bf16.mxu0 0
  %1224 = vmatpush2.bf16.msra.mxu0 0
  %1225 = vmatprep.subr.bf16.mxu0 %v1152
  %1226 = vmatpush2.bf16.msra.mxu0 %v1151
  %1227 = vmatprep.mubr.bf16.mxu0 %v1193
  %1228 = vmatmul.mubr.bf16.gmra.mxu0 %v1008
  %v1229 = vpop.f32.mrf.mxu0
  %v1230 = vadd.f32 0.0, %v1229
  %v1231 = vpop.f32.mrf.mxu0
  %v1232 = vadd.f32 0.0, %v1231
  %v1233 = vpop.f32.mrf.mxu0
  %v1234 = vadd.f32 0.0, %v1233
  %v1235 = vpop.f32.mrf.mxu0
  %v1236 = vadd.f32 0.0, %v1235
  %1237 = vdwg.mxu0
  %1238 = vmatprep.subr.bf16.mxu0 %v1150
  %1239 = vmatpush1.bf16.msra.mxu0 %v1149
  %1240 = vmatprep.subr.bf16.mxu0 %v1146
  %1241 = vmatpush1.bf16.msra.mxu0 %v1145
  %1242 = vmatprep.subr.bf16.mxu0 %v1142
  %1243 = vmatpush1.bf16.msra.mxu0 %v1141
  %1244 = vmatprep.subr.bf16.mxu0 %v1138
  %1245 = vmatpush1.bf16.msra.mxu0 %v1137
  %1246 = vmatprep.subr.bf16.mxu0 %v1134
  %1247 = vmatpush1.bf16.msra.mxu0 %v1133
  %1248 = vmatprep.subr.bf16.mxu0 %v1130
  %1249 = vmatpush1.bf16.msra.mxu0 %v1129
  %1250 = vmatprep.subr.bf16.mxu0 %v1126
  %1251 = vmatpush1.bf16.msra.mxu0 %v1125
  %1252 = vmatprep.subr.bf16.mxu0 %v1122
  %1253 = vmatpush1.bf16.msra.mxu0 %v1121
  %1254 = vmatprep.subr.bf16.mxu0 0
  %1255 = vmatpush2.bf16.msra.mxu0 0
  %1256 = vmatprep.subr.bf16.mxu0 0
  %1257 = vmatpush2.bf16.msra.mxu0 0
  %1258 = vmatprep.subr.bf16.mxu0 0
  %1259 = vmatpush2.bf16.msra.mxu0 0
  %1260 = vmatprep.subr.bf16.mxu0 0
  %1261 = vmatpush2.bf16.msra.mxu0 0
  %1262 = vmatprep.subr.bf16.mxu0 0
  %1263 = vmatpush2.bf16.msra.mxu0 0
  %1264 = vmatprep.subr.bf16.mxu0 0
  %1265 = vmatpush2.bf16.msra.mxu0 0
  %1266 = vmatprep.subr.bf16.mxu0 0
  %1267 = vmatpush2.bf16.msra.mxu0 0
  %1268 = vmatprep.subr.bf16.mxu0 %v1154
  %1269 = vmatpush2.bf16.msra.mxu0 %v1153
  %1270 = vmatprep.mubr.bf16.mxu0 %v1193
  %1271 = vmatmul.mubr.bf16.gmra.mxu0 %v1008
  %v1272 = vpop.f32.mrf.mxu0
  %v1273 = vadd.f32 0.0, %v1272
  %v1274 = vpop.f32.mrf.mxu0
  %v1275 = vadd.f32 0.0, %v1274
  %v1276 = vpop.f32.mrf.mxu0
  %v1277 = vadd.f32 0.0, %v1276
  %v1278 = vpop.f32.mrf.mxu0
  %v1279 = vadd.f32 0.0, %v1278
  %1280 = vdwg.mxu0
  %v1281 = vld [vmem:[%s7] sm:$0xff]
  %v1282 = vld [vmem:[%s7 + $0x8] sm:$0xff]
  %1284 = vset.pattern.permute.xlu0 0
  %1285 = vperm.xlu0 %1284, %v1281
  %v1286 = vpop.permute.xlu0 %1285
  %1289 = vset.pattern.permute.xlu0 0
  %1290 = vperm.xlu0 %1289, %v1282
  %v1291 = vpop.permute.xlu0 %1290
  %v1293 = vmul.f32 %v1230, %v1286
  %v1294 = vmul.f32 %v1232, %v1286
  %v1295 = vmul.f32 %v1273, %v1286
  %v1296 = vmul.f32 %v1275, %v1286
  %v1297 = vmul.f32 %v1234, %v1291
  %v1298 = vmul.f32 %v1236, %v1291
  %v1299 = vmul.f32 %v1277, %v1291
  %v1300 = vmul.f32 %v1279, %v1291
  %v1301 = vld [vmem:[%s8] sm:$0xff]
  %v1302 = vld [vmem:[%s8 + $0x8] sm:$0xff]
  %1304 = vset.pattern.permute.xlu0 0
  %1305 = vperm.xlu0 %1304, %v1301
  %v1306 = vpop.permute.xlu0 %1305
  %1309 = vset.pattern.permute.xlu0 0
  %1310 = vperm.xlu0 %1309, %v1302
  %v1311 = vpop.permute.xlu0 %1310
  %v1313 = vadd.f32 %v1293, %v1306
  %v1314 = vadd.f32 %v1294, %v1306
  %v1315 = vadd.f32 %v1295, %v1306
  %v1316 = vadd.f32 %v1296, %v1306
  %v1317 = vadd.f32 %v1297, %v1311
  %v1318 = vadd.f32 %v1298, %v1311
  %v1319 = vadd.f32 %v1299, %v1311
  %v1320 = vadd.f32 %v1300, %v1311
  %v1321 = vmax.f32 %v1313, 0.0
  %v1322 = vmax.f32 %v1314, 0.0
  %v1323 = vmax.f32 %v1315, 0.0
  %v1324 = vmax.f32 %v1316, 0.0
  %v1325 = vmax.f32 %v1317, 0.0
  %v1326 = vmax.f32 %v1318, 0.0
  %v1327 = vmax.f32 %v1319, 0.0
  %v1328 = vmax.f32 %v1320, 0.0
  %v1329 = vld [vmem:[%s10] sm:$0xff]
  %v1330 = vld [vmem:[%s10 + $0x8] sm:$0xff]
  %v1331 = vld [vmem:[%s10 + $0x10] sm:$0xff]
  %v1332 = vld [vmem:[%s10 + $0x18] sm:$0xff]
  %1334 = vset.pattern.permute.xlu0 0
  %1335 = vperm.xlu0 %1334, %v1329
  %v1336 = vpop.permute.xlu0 %1335
  %1339 = vset.pattern.permute.xlu0 0
  %1340 = vperm.xlu0 %1339, %v1330
  %v1341 = vpop.permute.xlu0 %1340
  %1344 = vset.pattern.permute.xlu0 0
  %1345 = vperm.xlu0 %1344, %v1331
  %v1346 = vpop.permute.xlu0 %1345
  %1349 = vset.pattern.permute.xlu0 0
  %1350 = vperm.xlu0 %1349, %v1332
  %v1351 = vpop.permute.xlu0 %1350
  %v1353 = vmul.f32 %v45, %v1336
  %v1354 = vmul.f32 %v46, %v1336
  %v1355 = vmul.f32 %v47, %v1336
  %v1356 = vmul.f32 %v48, %v1336
  %v1357 = vmul.f32 %v49, %v1341
  %v1358 = vmul.f32 %v50, %v1341
  %v1359 = vmul.f32 %v51, %v1341
  %v1360 = vmul.f32 %v52, %v1341
  %v1361 = vmul.f32 %v53, %v1346
  %v1362 = vmul.f32 %v54, %v1346
  %v1363 = vmul.f32 %v55, %v1346
  %v1364 = vmul.f32 %v56, %v1346
  %v1365 = vmul.f32 %v57, %v1351
  %v1366 = vmul.f32 %v58, %v1351
  %v1367 = vmul.f32 %v59, %v1351
  %v1368 = vmul.f32 %v60, %v1351
  %v1369 = vld [vmem:[%s11] sm:$0xff]
  %v1370 = vld [vmem:[%s11 + $0x8] sm:$0xff]
  %v1371 = vld [vmem:[%s11 + $0x10] sm:$0xff]
  %v1372 = vld [vmem:[%s11 + $0x18] sm:$0xff]
  %1374 = vset.pattern.permute.xlu0 0
  %1375 = vperm.xlu0 %1374, %v1369
  %v1376 = vpop.permute.xlu0 %1375
  %1379 = vset.pattern.permute.xlu0 0
  %1380 = vperm.xlu0 %1379, %v1370
  %v1381 = vpop.permute.xlu0 %1380
  %1384 = vset.pattern.permute.xlu0 0
  %1385 = vperm.xlu0 %1384, %v1371
  %v1386 = vpop.permute.xlu0 %1385
  %1389 = vset.pattern.permute.xlu0 0
  %1390 = vperm.xlu0 %1389, %v1372
  %v1391 = vpop.permute.xlu0 %1390
  %v1393 = vadd.f32 %v1353, %v1376
  %v1394 = vadd.f32 %v1354, %v1376
  %v1395 = vadd.f32 %v1355, %v1376
  %v1396 = vadd.f32 %v1356, %v1376
  %v1397 = vadd.f32 %v1357, %v1381
  %v1398 = vadd.f32 %v1358, %v1381
  %v1399 = vadd.f32 %v1359, %v1381
  %v1400 = vadd.f32 %v1360, %v1381
  %v1401 = vadd.f32 %v1361, %v1386
  %v1402 = vadd.f32 %v1362, %v1386
  %v1403 = vadd.f32 %v1363, %v1386
  %v1404 = vadd.f32 %v1364, %v1386
  %v1405 = vadd.f32 %v1365, %v1391
  %v1406 = vadd.f32 %v1366, %v1391
  %v1407 = vadd.f32 %v1367, %v1391
  %v1408 = vadd.f32 %v1368, %v1391
  %v1409 = vmax.f32 %v1393, 0.0
  %v1410 = vmax.f32 %v1394, 0.0
  %v1411 = vmax.f32 %v1395, 0.0
  %v1412 = vmax.f32 %v1396, 0.0
  %v1413 = vmax.f32 %v1397, 0.0
  %v1414 = vmax.f32 %v1398, 0.0
  %v1415 = vmax.f32 %v1399, 0.0
  %v1416 = vmax.f32 %v1400, 0.0
  %v1417 = vmax.f32 %v1401, 0.0
  %v1418 = vmax.f32 %v1402, 0.0
  %v1419 = vmax.f32 %v1403, 0.0
  %v1420 = vmax.f32 %v1404, 0.0
  %v1421 = vmax.f32 %v1405, 0.0
  %v1422 = vmax.f32 %v1406, 0.0
  %v1423 = vmax.f32 %v1407, 0.0
  %v1424 = vmax.f32 %v1408, 0.0
  %v1425 = vpack.c.bf16 %v1325, %v1321
  %v1426 = vpack.c.bf16 %v1326, %v1322
  %v1427 = vpack.c.bf16 %v1327, %v1323
  %v1428 = vpack.c.bf16 %v1328, %v1324
  %v1429 = vpack.c.bf16 %v1413, %v1409
  %v1430 = vpack.c.bf16 %v1414, %v1410
  %v1431 = vpack.c.bf16 %v1415, %v1411
  %v1432 = vpack.c.bf16 %v1416, %v1412
  %v1433 = vpack.c.bf16 %v1421, %v1417
  %v1434 = vpack.c.bf16 %v1422, %v1418
  %v1435 = vpack.c.bf16 %v1423, %v1419
  %v1436 = vpack.c.bf16 %v1424, %v1420
  %v1437 = vld [vmem:[%s12] sm:$0xf]
  %v1438 = vld [vmem:[%s12 + $0x4] sm:$0xf]
  %v1439 = vld [vmem:[%s12 + $0x8] sm:$0xf]
  %v1440 = vld [vmem:[%s12 + $0xc] sm:$0xf]
  %v1441 = vld [vmem:[%s12 + $0x10] sm:$0xf]
  %v1442 = vld [vmem:[%s12 + $0x14] sm:$0xf]
  %v1443 = vld [vmem:[%s12 + $0x18] sm:$0xf]
  %v1444 = vld [vmem:[%s12 + $0x1c] sm:$0xf]
  %v1453 = vunpack.c.l.b16 %v1437
  %v1454 = vunpack.c.l.b16 %v1438
  %v1455 = vunpack.c.l.b16 %v1439
  %v1456 = vunpack.c.l.b16 %v1440
  %v1457 = vunpack.c.l.b16 %v1441
  %v1458 = vunpack.c.l.b16 %v1442
  %v1459 = vunpack.c.l.b16 %v1443
  %v1460 = vunpack.c.l.b16 %v1444
  %v1461 = vpack.c.b16 %v1454, %v1453
  %v1462 = vpack.c.b16 %v1456, %v1455
  %v1463 = vpack.c.b16 %v1458, %v1457
  %v1464 = vpack.c.b16 %v1460, %v1459
  %vm1465 = vcmask 392192
  %v1467 = vsel %vm1465, %v1461, 0
  %v1470 = vsel %vm1465, %v1462, 0
  %v1473 = vsel %vm1465, %v1463, 0
  %v1476 = vsel %vm1465, %v1464, 0
  %1478 = vmatprep.subr.bf16.mxu0 0
  %1479 = vmatpush1.bf16.msra.mxu0 0
  %1480 = vmatprep.subr.bf16.mxu0 0
  %1481 = vmatpush1.bf16.msra.mxu0 0
  %1482 = vmatprep.subr.bf16.mxu0 0
  %1483 = vmatpush1.bf16.msra.mxu0 0
  %1484 = vmatprep.subr.bf16.mxu0 0
  %1485 = vmatpush1.bf16.msra.mxu0 0
  %1486 = vmatprep.subr.bf16.mxu0 0
  %1487 = vmatpush1.bf16.msra.mxu0 0
  %1488 = vmatprep.subr.bf16.mxu0 %v1434
  %1489 = vmatpush1.bf16.msra.mxu0 %v1433
  %1490 = vmatprep.subr.bf16.mxu0 %v1430
  %1491 = vmatpush1.bf16.msra.mxu0 %v1429
  %1492 = vmatprep.subr.bf16.mxu0 %v1426
  %1493 = vmatpush1.bf16.msra.mxu0 %v1425
  %1494 = vmatprep.subr.bf16.mxu0 0
  %1495 = vmatpush2.bf16.msra.mxu0 0
  %1496 = vmatprep.subr.bf16.mxu0 0
  %1497 = vmatpush2.bf16.msra.mxu0 0
  %1498 = vmatprep.subr.bf16.mxu0 0
  %1499 = vmatpush2.bf16.msra.mxu0 0
  %1500 = vmatprep.subr.bf16.mxu0 0
  %1501 = vmatpush2.bf16.msra.mxu0 0
  %1502 = vmatprep.subr.bf16.mxu0 0
  %1503 = vmatpush2.bf16.msra.mxu0 0
  %1504 = vmatprep.subr.bf16.mxu0 0
  %1505 = vmatpush2.bf16.msra.mxu0 0
  %1506 = vmatprep.subr.bf16.mxu0 0
  %1507 = vmatpush2.bf16.msra.mxu0 0
  %1508 = vmatprep.subr.bf16.mxu0 0
  %1509 = vmatpush2.bf16.msra.mxu0 0
  %1510 = vmatprep.mubr.bf16.mxu0 0
  %1511 = vmatmul.mubr.bf16.gmra.mxu0 %v1467
  %v1512 = vpop.f32.mrf.mxu0
  %v1513 = vadd.f32 0.0, %v1512
  %v1514 = vpop.f32.mrf.mxu0
  %v1515 = vadd.f32 0.0, %v1514
  %v1516 = vpop.f32.mrf.mxu0
  %v1517 = vadd.f32 0.0, %v1516
  %v1518 = vpop.f32.mrf.mxu0
  %v1519 = vadd.f32 0.0, %v1518
  %1520 = vmatprep.mubr.bf16.mxu0 0
  %1521 = vmatmul.mubr.bf16.gmra.mxu0 %v1470
  %v1522 = vpop.f32.mrf.mxu0
  %v1523 = vadd.f32 0.0, %v1522
  %v1524 = vpop.f32.mrf.mxu0
  %v1525 = vadd.f32 0.0, %v1524
  %v1526 = vpop.f32.mrf.mxu0
  %v1527 = vadd.f32 0.0, %v1526
  %v1528 = vpop.f32.mrf.mxu0
  %v1529 = vadd.f32 0.0, %v1528
  %1530 = vmatprep.mubr.bf16.mxu0 0
  %1531 = vmatmul.mubr.bf16.gmra.mxu0 %v1473
  %v1532 = vpop.f32.mrf.mxu0
  %v1533 = vadd.f32 0.0, %v1532
  %v1534 = vpop.f32.mrf.mxu0
  %v1535 = vadd.f32 0.0, %v1534
  %v1536 = vpop.f32.mrf.mxu0
  %v1537 = vadd.f32 0.0, %v1536
  %v1538 = vpop.f32.mrf.mxu0
  %v1539 = vadd.f32 0.0, %v1538
  %1540 = vmatprep.mubr.bf16.mxu0 0
  %1541 = vmatmul.mubr.bf16.gmra.mxu0 %v1476
  %v1542 = vpop.f32.mrf.mxu0
  %v1543 = vadd.f32 0.0, %v1542
  %v1544 = vpop.f32.mrf.mxu0
  %v1545 = vadd.f32 0.0, %v1544
  %v1546 = vpop.f32.mrf.mxu0
  %v1547 = vadd.f32 0.0, %v1546
  %v1548 = vpop.f32.mrf.mxu0
  %v1549 = vadd.f32 0.0, %v1548
  %1550 = vdwg.mxu0
  %1551 = vmatprep.subr.bf16.mxu0 0
  %1552 = vmatpush1.bf16.msra.mxu0 0
  %1553 = vmatprep.subr.bf16.mxu0 0
  %1554 = vmatpush1.bf16.msra.mxu0 0
  %1555 = vmatprep.subr.bf16.mxu0 0
  %1556 = vmatpush1.bf16.msra.mxu0 0
  %1557 = vmatprep.subr.bf16.mxu0 0
  %1558 = vmatpush1.bf16.msra.mxu0 0
  %1559 = vmatprep.subr.bf16.mxu0 0
  %1560 = vmatpush1.bf16.msra.mxu0 0
  %1561 = vmatprep.subr.bf16.mxu0 %v1436
  %1562 = vmatpush1.bf16.msra.mxu0 %v1435
  %1563 = vmatprep.subr.bf16.mxu0 %v1432
  %1564 = vmatpush1.bf16.msra.mxu0 %v1431
  %1565 = vmatprep.subr.bf16.mxu0 %v1428
  %1566 = vmatpush1.bf16.msra.mxu0 %v1427
  %1567 = vmatprep.subr.bf16.mxu0 0
  %1568 = vmatpush2.bf16.msra.mxu0 0
  %1569 = vmatprep.subr.bf16.mxu0 0
  %1570 = vmatpush2.bf16.msra.mxu0 0
  %1571 = vmatprep.subr.bf16.mxu0 0
  %1572 = vmatpush2.bf16.msra.mxu0 0
  %1573 = vmatprep.subr.bf16.mxu0 0
  %1574 = vmatpush2.bf16.msra.mxu0 0
  %1575 = vmatprep.subr.bf16.mxu0 0
  %1576 = vmatpush2.bf16.msra.mxu0 0
  %1577 = vmatprep.subr.bf16.mxu0 0
  %1578 = vmatpush2.bf16.msra.mxu0 0
  %1579 = vmatprep.subr.bf16.mxu0 0
  %1580 = vmatpush2.bf16.msra.mxu0 0
  %1581 = vmatprep.subr.bf16.mxu0 0
  %1582 = vmatpush2.bf16.msra.mxu0 0
  %1583 = vmatprep.mubr.bf16.mxu0 0
  %1584 = vmatmul.mubr.bf16.gmra.mxu0 %v1467
  %v1585 = vpop.f32.mrf.mxu0
  %v1586 = vadd.f32 0.0, %v1585
  %v1587 = vpop.f32.mrf.mxu0
  %v1588 = vadd.f32 0.0, %v1587
  %v1589 = vpop.f32.mrf.mxu0
  %v1590 = vadd.f32 0.0, %v1589
  %v1591 = vpop.f32.mrf.mxu0
  %v1592 = vadd.f32 0.0, %v1591
  %1593 = vmatprep.mubr.bf16.mxu0 0
  %1594 = vmatmul.mubr.bf16.gmra.mxu0 %v1470
  %v1595 = vpop.f32.mrf.mxu0
  %v1596 = vadd.f32 0.0, %v1595
  %v1597 = vpop.f32.mrf.mxu0
  %v1598 = vadd.f32 0.0, %v1597
  %v1599 = vpop.f32.mrf.mxu0
  %v1600 = vadd.f32 0.0, %v1599
  %v1601 = vpop.f32.mrf.mxu0
  %v1602 = vadd.f32 0.0, %v1601
  %1603 = vmatprep.mubr.bf16.mxu0 0
  %1604 = vmatmul.mubr.bf16.gmra.mxu0 %v1473
  %v1605 = vpop.f32.mrf.mxu0
  %v1606 = vadd.f32 0.0, %v1605
  %v1607 = vpop.f32.mrf.mxu0
  %v1608 = vadd.f32 0.0, %v1607
  %v1609 = vpop.f32.mrf.mxu0
  %v1610 = vadd.f32 0.0, %v1609
  %v1611 = vpop.f32.mrf.mxu0
  %v1612 = vadd.f32 0.0, %v1611
  %1613 = vmatprep.mubr.bf16.mxu0 0
  %1614 = vmatmul.mubr.bf16.gmra.mxu0 %v1476
  %v1615 = vpop.f32.mrf.mxu0
  %v1616 = vadd.f32 0.0, %v1615
  %v1617 = vpop.f32.mrf.mxu0
  %v1618 = vadd.f32 0.0, %v1617
  %v1619 = vpop.f32.mrf.mxu0
  %v1620 = vadd.f32 0.0, %v1619
  %v1621 = vpop.f32.mrf.mxu0
  %v1622 = vadd.f32 0.0, %v1621
  %1623 = vdwg.mxu0
  %1624 = vst [vmem:[%s13] sm:$0xff] %v1513
  %1625 = vst [vmem:[%s13 + $0x8] sm:$0xff] %v1515
  %1626 = vst [vmem:[%s13 + $0x10] sm:$0xff] %v1586
  %1627 = vst [vmem:[%s13 + $0x18] sm:$0xff] %v1588
  %1628 = vst [vmem:[%s13 + $0x20] sm:$0xff] %v1517
  %1629 = vst [vmem:[%s13 + $0x28] sm:$0xff] %v1519
  %1630 = vst [vmem:[%s13 + $0x30] sm:$0xff] %v1590
  %1631 = vst [vmem:[%s13 + $0x38] sm:$0xff] %v1592
  %1632 = vst [vmem:[%s13 + $0x40] sm:$0xff] %v1523
  %1633 = vst [vmem:[%s13 + $0x48] sm:$0xff] %v1525
  %1634 = vst [vmem:[%s13 + $0x50] sm:$0xff] %v1596
  %1635 = vst [vmem:[%s13 + $0x58] sm:$0xff] %v1598
  %1636 = vst [vmem:[%s13 + $0x60] sm:$0xff] %v1527
  %1637 = vst [vmem:[%s13 + $0x68] sm:$0xff] %v1529
  %1638 = vst [vmem:[%s13 + $0x70] sm:$0xff] %v1600
  %1639 = vst [vmem:[%s13 + $0x78] sm:$0xff] %v1602
  %1640 = vst [vmem:[%s13 + $0x80] sm:$0xff] %v1533
  %1641 = vst [vmem:[%s13 + $0x88] sm:$0xff] %v1535
  %1642 = vst [vmem:[%s13 + $0x90] sm:$0xff] %v1606
  %1643 = vst [vmem:[%s13 + $0x98] sm:$0xff] %v1608
  %1644 = vst [vmem:[%s13 + $0xa0] sm:$0xff] %v1537
  %1645 = vst [vmem:[%s13 + $0xa8] sm:$0xff] %v1539
  %1646 = vst [vmem:[%s13 + $0xb0] sm:$0xff] %v1610
  %1647 = vst [vmem:[%s13 + $0xb8] sm:$0xff] %v1612
  %1648 = vst [vmem:[%s13 + $0xc0] sm:$0xff] %v1543
  %1649 = vst [vmem:[%s13 + $0xc8] sm:$0xff] %v1545
  %1650 = vst [vmem:[%s13 + $0xd0] sm:$0xff] %v1616
  %1651 = vst [vmem:[%s13 + $0xd8] sm:$0xff] %v1618
  %1652 = vst [vmem:[%s13 + $0xe0] sm:$0xff] %v1547
  %1653 = vst [vmem:[%s13 + $0xe8] sm:$0xff] %v1549
  %1654 = vst [vmem:[%s13 + $0xf0] sm:$0xff] %v1620
  %1655 = vst [vmem:[%s13 + $0xf8] sm:$0xff] %v1622
  // Predicated region
  $region54: #{down_unit_forward.2} parent=0 // pred_check
    _
  $region55: #{down_unit_forward.2} parent=0 // pred_check_branch
    %1657 = sbr.rel (0) target = $region57
  $region56: #{down_unit_forward.2} parent=0 // pred_region
    _
  $region57: #{down_unit_forward.2} parent=0 // pred_fallthru
    _
  // Predicated region
  $region58: #{down_unit_forward.2} parent=0 // pred_check
    _
  $region59: #{down_unit_forward.2} parent=0 // pred_check_branch
    %1659 = sbr.rel (0) target = $region61
  $region60: #{down_unit_forward.2} parent=0 // pred_region
    _
  $region61: #{down_unit_forward.2} parent=0 // pred_fallthru
    _

// kernel: down_unit_forward.3
$region0: #{down_unit_forward.3}
  #allocation0 [shape = 'u32[]', space=smem, size = 0x4, offset = 0x4, fixed_abs, tag = 'smem constant byte address 0x4 - core index']
  #allocation1 [shape = 'u32[144,128]{1,0:T(1,128)}', space=vmem, size = 0x12000, scoped, tag = 'internal scratch']
  #allocation2 [shape = 'bf16[144,512]{1,0:T(8,128)(2,1)}', space=vmem, size = 0x24000, scoped, tag = 'scratch operand']
  %s0 = inlined_call_operand.vmem [shape: f32[1,64,512], index: 0, kind: input, shape index: {}]
  %s1 = inlined_call_operand.vmem [shape: f32[64,1], index: 1, kind: input, shape index: {}]
  %s2 = inlined_call_operand.vmem [shape: f32[64,1], index: 2, kind: input, shape index: {}]
  %s3 = inlined_call_operand.vmem [shape: bf16[16,64], index: 3, kind: input, shape index: {}]
  %s4 = inlined_call_operand.vmem [shape: f32[16,1], index: 4, kind: input, shape index: {}]
  %s5 = inlined_call_operand.vmem [shape: f32[16,1], index: 5, kind: input, shape index: {}]
  %s6 = inlined_call_operand.vmem [shape: bf16[16,144], index: 6, kind: input, shape index: {}]
  %s7 = inlined_call_operand.vmem [shape: f32[16,1], index: 7, kind: input, shape index: {}]
  %s8 = inlined_call_operand.vmem [shape: f32[16,1], index: 8, kind: input, shape index: {}]
  %s9 = inlined_call_operand.vmem [shape: f32[9,512], index: 9, kind: input, shape index: {}]
  %s10 = inlined_call_operand.vmem [shape: bf16[64,16], index: 10, kind: input, shape index: {}]
  %s11 = inlined_call_operand.vmem [shape: bf16[512,128], index: 11, kind: input, shape index: {}]
  %s12 = inlined_call_operand.vmem [shape: f32[1,64,128], index: 12, kind: output, shape index: {}]
  %s13 = sld [smem:[#allocation0]]
  $region58: #{down_unit_forward.3} parent=0
    _
  %s15 = ssub.s32 1, %s13
  %s16 = scalar_select 0, %s15, %s13
  // Predicated region
  $region2: #{down_unit_forward.3} parent=0 // pred_check
    _
  $region3: #{down_unit_forward.3} parent=0 // pred_check_branch
    %18 = sbr.rel (0) target = $region5
  $region4: #{down_unit_forward.3} parent=0 // pred_region
    _
  $region5: #{down_unit_forward.3} parent=0 // pred_fallthru
    _
  // Predicated region
  $region6: #{down_unit_forward.3} parent=0 // pred_check
    _
  $region7: #{down_unit_forward.3} parent=0 // pred_check_branch
    %20 = sbr.rel (0) target = $region9
  $region8: #{down_unit_forward.3} parent=0 // pred_region
    _
  $region9: #{down_unit_forward.3} parent=0 // pred_fallthru
    _
  // Predicated region
  $region10: #{down_unit_forward.3} parent=0 // pred_check
    _
  $region11: #{down_unit_forward.3} parent=0 // pred_check_branch
    %22 = sbr.rel (0) target = $region13
  $region12: #{down_unit_forward.3} parent=0 // pred_region
    _
  $region13: #{down_unit_forward.3} parent=0 // pred_fallthru
    _
  // Predicated region
  $region14: #{down_unit_forward.3} parent=0 // pred_check
    _
  $region15: #{down_unit_forward.3} parent=0 // pred_check_branch
    %24 = sbr.rel (0) target = $region17
  $region16: #{down_unit_forward.3} parent=0 // pred_region
    _
  $region17: #{down_unit_forward.3} parent=0 // pred_fallthru
    _
  // Predicated region
  $region18: #{down_unit_forward.3} parent=0 // pred_check
    _
  $region19: #{down_unit_forward.3} parent=0 // pred_check_branch
    %26 = sbr.rel (0) target = $region21
  $region20: #{down_unit_forward.3} parent=0 // pred_region
    _
  $region21: #{down_unit_forward.3} parent=0 // pred_fallthru
    _
  // Predicated region
  $region22: #{down_unit_forward.3} parent=0 // pred_check
    _
  $region23: #{down_unit_forward.3} parent=0 // pred_check_branch
    %28 = sbr.rel (0) target = $region25
  $region24: #{down_unit_forward.3} parent=0 // pred_region
    _
  $region25: #{down_unit_forward.3} parent=0 // pred_fallthru
    _
  // Predicated region
  $region26: #{down_unit_forward.3} parent=0 // pred_check
    _
  $region27: #{down_unit_forward.3} parent=0 // pred_check_branch
    %30 = sbr.rel (0) target = $region29
  $region28: #{down_unit_forward.3} parent=0 // pred_region
    _
  $region29: #{down_unit_forward.3} parent=0 // pred_fallthru
    _
  // Predicated region
  $region30: #{down_unit_forward.3} parent=0 // pred_check
    _
  $region31: #{down_unit_forward.3} parent=0 // pred_check_branch
    %32 = sbr.rel (0) target = $region33
  $region32: #{down_unit_forward.3} parent=0 // pred_region
    _
  $region33: #{down_unit_forward.3} parent=0 // pred_fallthru
    _
  // Predicated region
  $region34: #{down_unit_forward.3} parent=0 // pred_check
    _
  $region35: #{down_unit_forward.3} parent=0 // pred_check_branch
    %34 = sbr.rel (0) target = $region37
  $region36: #{down_unit_forward.3} parent=0 // pred_region
    _
  $region37: #{down_unit_forward.3} parent=0 // pred_fallthru
    _
  // Predicated region
  $region38: #{down_unit_forward.3} parent=0 // pred_check
    _
  $region39: #{down_unit_forward.3} parent=0 // pred_check_branch
    %36 = sbr.rel (0) target = $region41
  $region40: #{down_unit_forward.3} parent=0 // pred_region
    _
  $region41: #{down_unit_forward.3} parent=0 // pred_fallthru
    _
  // Predicated region
  $region42: #{down_unit_forward.3} parent=0 // pred_check
    _
  $region43: #{down_unit_forward.3} parent=0 // pred_check_branch
    %38 = sbr.rel (0) target = $region45
  $region44: #{down_unit_forward.3} parent=0 // pred_region
    _
  $region45: #{down_unit_forward.3} parent=0 // pred_fallthru
    _
  // Predicated region
  $region46: #{down_unit_forward.3} parent=0 // pred_check
    _
  $region47: #{down_unit_forward.3} parent=0 // pred_check_branch
    %40 = sbr.rel (0) target = $region49
  $region48: #{down_unit_forward.3} parent=0 // pred_region
    _
  $region49: #{down_unit_forward.3} parent=0 // pred_fallthru
    _
  %v42 = vld [vmem:[%s0] sm:$0xff]
  %v43 = vld [vmem:[%s0 + $0x8] sm:$0xff]
  %v44 = vld [vmem:[%s0 + $0x10] sm:$0xff]
  %v45 = vld [vmem:[%s0 + $0x18] sm:$0xff]
  %v46 = vld [vmem:[%s0 + $0x20] sm:$0xff]
  %v47 = vld [vmem:[%s0 + $0x28] sm:$0xff]
  %v48 = vld [vmem:[%s0 + $0x30] sm:$0xff]
  %v49 = vld [vmem:[%s0 + $0x38] sm:$0xff]
  %v50 = vld [vmem:[%s0 + $0x40] sm:$0xff]
  %v51 = vld [vmem:[%s0 + $0x48] sm:$0xff]
  %v52 = vld [vmem:[%s0 + $0x50] sm:$0xff]
  %v53 = vld [vmem:[%s0 + $0x58] sm:$0xff]
  %v54 = vld [vmem:[%s0 + $0x60] sm:$0xff]
  %v55 = vld [vmem:[%s0 + $0x68] sm:$0xff]
  %v56 = vld [vmem:[%s0 + $0x70] sm:$0xff]
  %v57 = vld [vmem:[%s0 + $0x78] sm:$0xff]
  %v58 = vld [vmem:[%s0 + $0x80] sm:$0xff]
  %v59 = vld [vmem:[%s0 + $0x88] sm:$0xff]
  %v60 = vld [vmem:[%s0 + $0x90] sm:$0xff]
  %v61 = vld [vmem:[%s0 + $0x98] sm:$0xff]
  %v62 = vld [vmem:[%s0 + $0xa0] sm:$0xff]
  %v63 = vld [vmem:[%s0 + $0xa8] sm:$0xff]
  %v64 = vld [vmem:[%s0 + $0xb0] sm:$0xff]
  %v65 = vld [vmem:[%s0 + $0xb8] sm:$0xff]
  %v66 = vld [vmem:[%s0 + $0xc0] sm:$0xff]
  %v67 = vld [vmem:[%s0 + $0xc8] sm:$0xff]
  %v68 = vld [vmem:[%s0 + $0xd0] sm:$0xff]
  %v69 = vld [vmem:[%s0 + $0xd8] sm:$0xff]
  %v70 = vld [vmem:[%s0 + $0xe0] sm:$0xff]
  %v71 = vld [vmem:[%s0 + $0xe8] sm:$0xff]
  %v72 = vld [vmem:[%s0 + $0xf0] sm:$0xff]
  %v73 = vld [vmem:[%s0 + $0xf8] sm:$0xff]
  %v74 = vld [vmem:[%s1] sm:$0xff]
  %v75 = vld [vmem:[%s1 + $0x8] sm:$0xff]
  %v76 = vld [vmem:[%s1 + $0x10] sm:$0xff]
  %v77 = vld [vmem:[%s1 + $0x18] sm:$0xff]
  %v78 = vld [vmem:[%s1 + $0x20] sm:$0xff]
  %v79 = vld [vmem:[%s1 + $0x28] sm:$0xff]
  %v80 = vld [vmem:[%s1 + $0x30] sm:$0xff]
  %v81 = vld [vmem:[%s1 + $0x38] sm:$0xff]
  %83 = vset.pattern.permute.xlu0 0
  %84 = vperm.xlu0 %83, %v74
  %v85 = vpop.permute.xlu0 %84
  %88 = vset.pattern.permute.xlu0 0
  %89 = vperm.xlu0 %88, %v75
  %v90 = vpop.permute.xlu0 %89
  %93 = vset.pattern.permute.xlu0 0
  %94 = vperm.xlu0 %93, %v76
  %v95 = vpop.permute.xlu0 %94
  %98 = vset.pattern.permute.xlu0 0
  %99 = vperm.xlu0 %98, %v77
  %v100 = vpop.permute.xlu0 %99
  %103 = vset.pattern.permute.xlu0 0
  %104 = vperm.xlu0 %103, %v78
  %v105 = vpop.permute.xlu0 %104
  %108 = vset.pattern.permute.xlu0 0
  %109 = vperm.xlu0 %108, %v79
  %v110 = vpop.permute.xlu0 %109
  %113 = vset.pattern.permute.xlu0 0
  %114 = vperm.xlu0 %113, %v80
  %v115 = vpop.permute.xlu0 %114
  %118 = vset.pattern.permute.xlu0 0
  %119 = vperm.xlu0 %118, %v81
  %v120 = vpop.permute.xlu0 %119
  %v122 = vmul.f32 %v42, %v85
  %v123 = vmul.f32 %v43, %v85
  %v124 = vmul.f32 %v44, %v85
  %v125 = vmul.f32 %v45, %v85
  %v126 = vmul.f32 %v46, %v90
  %v127 = vmul.f32 %v47, %v90
  %v128 = vmul.f32 %v48, %v90
  %v129 = vmul.f32 %v49, %v90
  %v130 = vmul.f32 %v50, %v95
  %v131 = vmul.f32 %v51, %v95
  %v132 = vmul.f32 %v52, %v95
  %v133 = vmul.f32 %v53, %v95
  %v134 = vmul.f32 %v54, %v100
  %v135 = vmul.f32 %v55, %v100
  %v136 = vmul.f32 %v56, %v100
  %v137 = vmul.f32 %v57, %v100
  %v138 = vmul.f32 %v58, %v105
  %v139 = vmul.f32 %v59, %v105
  %v140 = vmul.f32 %v60, %v105
  %v141 = vmul.f32 %v61, %v105
  %v142 = vmul.f32 %v62, %v110
  %v143 = vmul.f32 %v63, %v110
  %v144 = vmul.f32 %v64, %v110
  %v145 = vmul.f32 %v65, %v110
  %v146 = vmul.f32 %v66, %v115
  %v147 = vmul.f32 %v67, %v115
  %v148 = vmul.f32 %v68, %v115
  %v149 = vmul.f32 %v69, %v115
  %v150 = vmul.f32 %v70, %v120
  %v151 = vmul.f32 %v71, %v120
  %v152 = vmul.f32 %v72, %v120
  %v153 = vmul.f32 %v73, %v120
  %v154 = vld [vmem:[%s2] sm:$0xff]
  %v155 = vld [vmem:[%s2 + $0x8] sm:$0xff]
  %v156 = vld [vmem:[%s2 + $0x10] sm:$0xff]
  %v157 = vld [vmem:[%s2 + $0x18] sm:$0xff]
  %v158 = vld [vmem:[%s2 + $0x20] sm:$0xff]
  %v159 = vld [vmem:[%s2 + $0x28] sm:$0xff]
  %v160 = vld [vmem:[%s2 + $0x30] sm:$0xff]
  %v161 = vld [vmem:[%s2 + $0x38] sm:$0xff]
  %163 = vset.pattern.permute.xlu0 0
  %164 = vperm.xlu0 %163, %v154
  %v165 = vpop.permute.xlu0 %164
  %168 = vset.pattern.permute.xlu0 0
  %169 = vperm.xlu0 %168, %v155
  %v170 = vpop.permute.xlu0 %169
  %173 = vset.pattern.permute.xlu0 0
  %174 = vperm.xlu0 %173, %v156
  %v175 = vpop.permute.xlu0 %174
  %178 = vset.pattern.permute.xlu0 0
  %179 = vperm.xlu0 %178, %v157
  %v180 = vpop.permute.xlu0 %179
  %183 = vset.pattern.permute.xlu0 0
  %184 = vperm.xlu0 %183, %v158
  %v185 = vpop.permute.xlu0 %184
  %188 = vset.pattern.permute.xlu0 0
  %189 = vperm.xlu0 %188, %v159
  %v190 = vpop.permute.xlu0 %189
  %193 = vset.pattern.permute.xlu0 0
  %194 = vperm.xlu0 %193, %v160
  %v195 = vpop.permute.xlu0 %194
  %198 = vset.pattern.permute.xlu0 0
  %199 = vperm.xlu0 %198, %v161
  %v200 = vpop.permute.xlu0 %199
  %v202 = vadd.f32 %v122, %v165
  %v203 = vadd.f32 %v123, %v165
  %v204 = vadd.f32 %v124, %v165
  %v205 = vadd.f32 %v125, %v165
  %v206 = vadd.f32 %v126, %v170
  %v207 = vadd.f32 %v127, %v170
  %v208 = vadd.f32 %v128, %v170
  %v209 = vadd.f32 %v129, %v170
  %v210 = vadd.f32 %v130, %v175
  %v211 = vadd.f32 %v131, %v175
  %v212 = vadd.f32 %v132, %v175
  %v213 = vadd.f32 %v133, %v175
  %v214 = vadd.f32 %v134, %v180
  %v215 = vadd.f32 %v135, %v180
  %v216 = vadd.f32 %v136, %v180
  %v217 = vadd.f32 %v137, %v180
  %v218 = vadd.f32 %v138, %v185
  %v219 = vadd.f32 %v139, %v185
  %v220 = vadd.f32 %v140, %v185
  %v221 = vadd.f32 %v141, %v185
  %v222 = vadd.f32 %v142, %v190
  %v223 = vadd.f32 %v143, %v190
  %v224 = vadd.f32 %v144, %v190
  %v225 = vadd.f32 %v145, %v190
  %v226 = vadd.f32 %v146, %v195
  %v227 = vadd.f32 %v147, %v195
  %v228 = vadd.f32 %v148, %v195
  %v229 = vadd.f32 %v149, %v195
  %v230 = vadd.f32 %v150, %v200
  %v231 = vadd.f32 %v151, %v200
  %v232 = vadd.f32 %v152, %v200
  %v233 = vadd.f32 %v153, %v200
  %v234 = vmax.f32 %v202, 0.0
  %v235 = vmax.f32 %v203, 0.0
  %v236 = vmax.f32 %v204, 0.0
  %v237 = vmax.f32 %v205, 0.0
  %v238 = vmax.f32 %v206, 0.0
  %v239 = vmax.f32 %v207, 0.0
  %v240 = vmax.f32 %v208, 0.0
  %v241 = vmax.f32 %v209, 0.0
  %v242 = vmax.f32 %v210, 0.0
  %v243 = vmax.f32 %v211, 0.0
  %v244 = vmax.f32 %v212, 0.0
  %v245 = vmax.f32 %v213, 0.0
  %v246 = vmax.f32 %v214, 0.0
  %v247 = vmax.f32 %v215, 0.0
  %v248 = vmax.f32 %v216, 0.0
  %v249 = vmax.f32 %v217, 0.0
  %v250 = vmax.f32 %v218, 0.0
  %v251 = vmax.f32 %v219, 0.0
  %v252 = vmax.f32 %v220, 0.0
  %v253 = vmax.f32 %v221, 0.0
  %v254 = vmax.f32 %v222, 0.0
  %v255 = vmax.f32 %v223, 0.0
  %v256 = vmax.f32 %v224, 0.0
  %v257 = vmax.f32 %v225, 0.0
  %v258 = vmax.f32 %v226, 0.0
  %v259 = vmax.f32 %v227, 0.0
  %v260 = vmax.f32 %v228, 0.0
  %v261 = vmax.f32 %v229, 0.0
  %v262 = vmax.f32 %v230, 0.0
  %v263 = vmax.f32 %v231, 0.0
  %v264 = vmax.f32 %v232, 0.0
  %v265 = vmax.f32 %v233, 0.0
  %v266 = vld [vmem:[%s3] sm:$0xf]
  %v267 = vld [vmem:[%s3 + $0x4] sm:$0xf]
  %v268 = vpack.c.bf16 %v238, %v234
  %v269 = vpack.c.bf16 %v239, %v235
  %v270 = vpack.c.bf16 %v240, %v236
  %v271 = vpack.c.bf16 %v241, %v237
  %v272 = vpack.c.bf16 %v246, %v242
  %v273 = vpack.c.bf16 %v247, %v243
  %v274 = vpack.c.bf16 %v248, %v244
  %v275 = vpack.c.bf16 %v249, %v245
  %v276 = vpack.c.bf16 %v254, %v250
  %v277 = vpack.c.bf16 %v255, %v251
  %v278 = vpack.c.bf16 %v256, %v252
  %v279 = vpack.c.bf16 %v257, %v253
  %v280 = vpack.c.bf16 %v262, %v258
  %v281 = vpack.c.bf16 %v263, %v259
  %v282 = vpack.c.bf16 %v264, %v260
  %v283 = vpack.c.bf16 %v265, %v261
  %v286 = vunpack.c.l.b16 %v266
  %v287 = vunpack.c.l.b16 %v267
  %v288 = vpack.c.b16 %v287, %v286
  %vm289 = vcmask 523264
  %v291 = vsel %vm289, %v288, 0
  %293 = vmatprep.subr.bf16.mxu0 0
  %294 = vmatpush1.bf16.msra.mxu0 0
  %295 = vmatprep.subr.bf16.mxu0 0
  %296 = vmatpush1.bf16.msra.mxu0 0
  %297 = vmatprep.subr.bf16.mxu0 0
  %298 = vmatpush1.bf16.msra.mxu0 0
  %299 = vmatprep.subr.bf16.mxu0 0
  %300 = vmatpush1.bf16.msra.mxu0 0
  %301 = vmatprep.subr.bf16.mxu0 %v281
  %302 = vmatpush1.bf16.msra.mxu0 %v280
  %303 = vmatprep.subr.bf16.mxu0 %v277
  %304 = vmatpush1.bf16.msra.mxu0 %v276
  %305 = vmatprep.subr.bf16.mxu0 %v273
  %306 = vmatpush1.bf16.msra.mxu0 %v272
  %307 = vmatprep.subr.bf16.mxu0 %v269
  %308 = vmatpush1.bf16.msra.mxu0 %v268
  %309 = vmatprep.subr.bf16.mxu0 0
  %310 = vmatpush2.bf16.msra.mxu0 0
  %311 = vmatprep.subr.bf16.mxu0 0
  %312 = vmatpush2.bf16.msra.mxu0 0
  %313 = vmatprep.subr.bf16.mxu0 0
  %314 = vmatpush2.bf16.msra.mxu0 0
  %315 = vmatprep.subr.bf16.mxu0 0
  %316 = vmatpush2.bf16.msra.mxu0 0
  %317 = vmatprep.subr.bf16.mxu0 0
  %318 = vmatpush2.bf16.msra.mxu0 0
  %319 = vmatprep.subr.bf16.mxu0 0
  %320 = vmatpush2.bf16.msra.mxu0 0
  %321 = vmatprep.subr.bf16.mxu0 0
  %322 = vmatpush2.bf16.msra.mxu0 0
  %323 = vmatprep.subr.bf16.mxu0 0
  %324 = vmatpush2.bf16.msra.mxu0 0
  %325 = vmatprep.mubr.bf16.mxu0 0
  %326 = vmatmul.mubr.bf16.gmra.mxu0 %v291
  %v327 = vpop.f32.mrf.mxu0
  %v328 = vadd.f32 0.0, %v327
  %v329 = vpop.f32.mrf.mxu0
  %v330 = vadd.f32 0.0, %v329
  %v331 = vpop.f32.mrf.mxu0
  %v332 = vadd.f32 0.0, %v331
  %v333 = vpop.f32.mrf.mxu0
  %v334 = vadd.f32 0.0, %v333
  %335 = vdwg.mxu0
  %336 = vmatprep.subr.bf16.mxu0 0
  %337 = vmatpush1.bf16.msra.mxu0 0
  %338 = vmatprep.subr.bf16.mxu0 0
  %339 = vmatpush1.bf16.msra.mxu0 0
  %340 = vmatprep.subr.bf16.mxu0 0
  %341 = vmatpush1.bf16.msra.mxu0 0
  %342 = vmatprep.subr.bf16.mxu0 0
  %343 = vmatpush1.bf16.msra.mxu0 0
  %344 = vmatprep.subr.bf16.mxu0 %v283
  %345 = vmatpush1.bf16.msra.mxu0 %v282
  %346 = vmatprep.subr.bf16.mxu0 %v279
  %347 = vmatpush1.bf16.msra.mxu0 %v278
  %348 = vmatprep.subr.bf16.mxu0 %v275
  %349 = vmatpush1.bf16.msra.mxu0 %v274
  %350 = vmatprep.subr.bf16.mxu0 %v271
  %351 = vmatpush1.bf16.msra.mxu0 %v270
  %352 = vmatprep.subr.bf16.mxu0 0
  %353 = vmatpush2.bf16.msra.mxu0 0
  %354 = vmatprep.subr.bf16.mxu0 0
  %355 = vmatpush2.bf16.msra.mxu0 0
  %356 = vmatprep.subr.bf16.mxu0 0
  %357 = vmatpush2.bf16.msra.mxu0 0
  %358 = vmatprep.subr.bf16.mxu0 0
  %359 = vmatpush2.bf16.msra.mxu0 0
  %360 = vmatprep.subr.bf16.mxu0 0
  %361 = vmatpush2.bf16.msra.mxu0 0
  %362 = vmatprep.subr.bf16.mxu0 0
  %363 = vmatpush2.bf16.msra.mxu0 0
  %364 = vmatprep.subr.bf16.mxu0 0
  %365 = vmatpush2.bf16.msra.mxu0 0
  %366 = vmatprep.subr.bf16.mxu0 0
  %367 = vmatpush2.bf16.msra.mxu0 0
  %368 = vmatprep.mubr.bf16.mxu0 0
  %369 = vmatmul.mubr.bf16.gmra.mxu0 %v291
  %v370 = vpop.f32.mrf.mxu0
  %v371 = vadd.f32 0.0, %v370
  %v372 = vpop.f32.mrf.mxu0
  %v373 = vadd.f32 0.0, %v372
  %v374 = vpop.f32.mrf.mxu0
  %v375 = vadd.f32 0.0, %v374
  %v376 = vpop.f32.mrf.mxu0
  %v377 = vadd.f32 0.0, %v376
  %378 = vdwg.mxu0
  %v379 = vld [vmem:[%s4] sm:$0xff]
  %v380 = vld [vmem:[%s4 + $0x8] sm:$0xff]
  %382 = vset.pattern.permute.xlu0 0
  %383 = vperm.xlu0 %382, %v379
  %v384 = vpop.permute.xlu0 %383
  %387 = vset.pattern.permute.xlu0 0
  %388 = vperm.xlu0 %387, %v380
  %v389 = vpop.permute.xlu0 %388
  %v391 = vmul.f32 %v328, %v384
  %v392 = vmul.f32 %v330, %v384
  %v393 = vmul.f32 %v371, %v384
  %v394 = vmul.f32 %v373, %v384
  %v395 = vmul.f32 %v332, %v389
  %v396 = vmul.f32 %v334, %v389
  %v397 = vmul.f32 %v375, %v389
  %v398 = vmul.f32 %v377, %v389
  %v399 = vld [vmem:[%s5] sm:$0xff]
  %v400 = vld [vmem:[%s5 + $0x8] sm:$0xff]
  %402 = vset.pattern.permute.xlu0 0
  %403 = vperm.xlu0 %402, %v399
  %v404 = vpop.permute.xlu0 %403
  %407 = vset.pattern.permute.xlu0 0
  %408 = vperm.xlu0 %407, %v400
  %v409 = vpop.permute.xlu0 %408
  %v411 = vadd.f32 %v391, %v404
  %v412 = vadd.f32 %v392, %v404
  %v413 = vadd.f32 %v393, %v404
  %v414 = vadd.f32 %v394, %v404
  %v415 = vadd.f32 %v395, %v409
  %v416 = vadd.f32 %v396, %v409
  %v417 = vadd.f32 %v397, %v409
  %v418 = vadd.f32 %v398, %v409
  %v419 = vmax.f32 %v411, 0.0
  %v420 = vmax.f32 %v412, 0.0
  %v421 = vmax.f32 %v413, 0.0
  %v422 = vmax.f32 %v414, 0.0
  %v423 = vmax.f32 %v415, 0.0
  %v424 = vmax.f32 %v416, 0.0
  %v425 = vmax.f32 %v417, 0.0
  %v426 = vmax.f32 %v418, 0.0
  %v427 = vld [vmem:[%s9] sm:$0xff]
  %v428 = vld [vmem:[%s9 + $0x8] sm:$0xff]
  %v429 = vld [vmem:[%s9 + $0x10] sm:$0xff]
  %v430 = vld [vmem:[%s9 + $0x18] sm:$0xff]
  %v431 = vld [vmem:[%s9 + $0x20] sm:$0x1]
  %v432 = vld [vmem:[%s9 + $0x28] sm:$0x1]
  %v433 = vld [vmem:[%s9 + $0x30] sm:$0x1]
  %v434 = vld [vmem:[%s9 + $0x38] sm:$0x1]
  %435 = vrot.lane.b32.xlu0 %v419, 17
  %v436 = vpop.permute.xlu0 %435
  %437 = vrot.lane.b32.xlu0 %v423, 17
  %v438 = vpop.permute.xlu0 %437
  %439 = vrot.lane.b32.xlu0 %v420, 17
  %v440 = vpop.permute.xlu0 %439
  %441 = vrot.lane.b32.xlu0 %v424, 17
  %v442 = vpop.permute.xlu0 %441
  %443 = vrot.lane.b32.xlu0 %v421, 17
  %v444 = vpop.permute.xlu0 %443
  %445 = vrot.lane.b32.xlu0 %v425, 17
  %v446 = vpop.permute.xlu0 %445
  %447 = vrot.lane.b32.xlu0 %v422, 17
  %v448 = vpop.permute.xlu0 %447
  %449 = vrot.lane.b32.xlu0 %v426, 17
  %v450 = vpop.permute.xlu0 %449
  %v451 = vlaneseq
  %v452 = vand.u32 %v451, 127
  %vm453 = vcmp.lt.s32.totalorder %v452, 17
  %v454 = vsel %vm453, %v444, %v448
  %v455 = vsel %vm453, %v446, %v450
  %v456 = vsel %vm453, %v440, %v444
  %v457 = vsel %vm453, %v442, %v446
  %v458 = vsel %vm453, %v436, %v440
  %v459 = vsel %vm453, %v438, %v442
  %v460 = vsel %vm453, %v448, %v436
  %v461 = vsel %vm453, %v450, %v438
  %v462 = vlaneseq
  %v463 = vshrl.u32 %v462, 7
  %v464 = vsub.s32 0, %v463
  %v465 = vrot.slane %v427, %v464
  %v466 = vlaneseq
  %v467 = vshrl.u32 %v466, 7
  %v468 = vsub.s32 0, %v467
  %v469 = vrot.slane %v428, %v468
  %v470 = vlaneseq
  %v471 = vshrl.u32 %v470, 7
  %v472 = vsub.s32 0, %v471
  %v473 = vrot.slane %v429, %v472
  %v474 = vlaneseq
  %v475 = vshrl.u32 %v474, 7
  %v476 = vsub.s32 0, %v475
  %v477 = vrot.slane %v430, %v476
  %v478 = vmul.f32 %v460, %v465
  %v479 = vmul.f32 %v458, %v469
  %v480 = vmul.f32 %v456, %v473
  %v481 = vmul.f32 %v454, %v477
  %v482 = vmul.f32 %v461, %v465
  %v483 = vmul.f32 %v459, %v469
  %v484 = vmul.f32 %v457, %v473
  %v485 = vmul.f32 %v455, %v477
  %v486 = vpack.c.bf16 %v482, %v478
  %v487 = vpack.c.bf16 %v483, %v479
  %v488 = vpack.c.bf16 %v484, %v480
  %v489 = vpack.c.bf16 %v485, %v481
  %v494 = vunpack.c.l.b16 %v486
  %v495 = vunpack.c.l.b16 %v487
  %v496 = vunpack.c.l.b16 %v488
  %v497 = vunpack.c.l.b16 %v489
  %v498 = vunpack.c.h.b16 %v486
  %v499 = vunpack.c.h.b16 %v487
  %v500 = vunpack.c.h.b16 %v488
  %v501 = vunpack.c.h.b16 %v489
  %v502 = vpack.c.b16 %v495, %v494
  %v503 = vpack.c.b16 %v497, %v496
  %v504 = vpack.c.b16 %v499, %v498
  %v505 = vpack.c.b16 %v501, %v500
  %510 = vst [vmem:[#allocation2] sm:$0xff] %v502
  %511 = vst [vmem:[#allocation2 + $0x8] sm:$0xff] %v503
  %512 = vst [vmem:[#allocation2 + $0x10] sm:$0xff] %v504
  %513 = vst [vmem:[#allocation2 + $0x18] sm:$0xff] %v505
  %514 = vrot.lane.b32.xlu0 %v419, 16
  %v515 = vpop.permute.xlu0 %514
  %516 = vrot.lane.b32.xlu0 %v423, 16
  %v517 = vpop.permute.xlu0 %516
  %518 = vrot.lane.b32.xlu0 %v420, 16
  %v519 = vpop.permute.xlu0 %518
  %520 = vrot.lane.b32.xlu0 %v424, 16
  %v521 = vpop.permute.xlu0 %520
  %522 = vrot.lane.b32.xlu0 %v421, 16
  %v523 = vpop.permute.xlu0 %522
  %524 = vrot.lane.b32.xlu0 %v425, 16
  %v525 = vpop.permute.xlu0 %524
  %526 = vrot.lane.b32.xlu0 %v422, 16
  %v527 = vpop.permute.xlu0 %526
  %528 = vrot.lane.b32.xlu0 %v426, 16
  %v529 = vpop.permute.xlu0 %528
  %vm530 = vcmp.lt.s32.totalorder %v452, 16
  %v531 = vsel %vm530, %v523, %v527
  %v532 = vsel %vm530, %v525, %v529
  %v533 = vsel %vm530, %v519, %v523
  %v534 = vsel %vm530, %v521, %v525
  %v535 = vsel %vm530, %v515, %v519
  %v536 = vsel %vm530, %v517, %v521
  %v537 = vsel %vm530, %v527, %v515
  %v538 = vsel %vm530, %v529, %v517
  %v539 = vlaneseq
  %v540 = vshrl.u32 %v539, 7
  %v541 = vsub.s32 1, %v540
  %v542 = vrot.slane %v427, %v541
  %v543 = vlaneseq
  %v544 = vshrl.u32 %v543, 7
  %v545 = vsub.s32 1, %v544
  %v546 = vrot.slane %v428, %v545
  %v547 = vlaneseq
  %v548 = vshrl.u32 %v547, 7
  %v549 = vsub.s32 1, %v548
  %v550 = vrot.slane %v429, %v549
  %v551 = vlaneseq
  %v552 = vshrl.u32 %v551, 7
  %v553 = vsub.s32 1, %v552
  %v554 = vrot.slane %v430, %v553
  %v555 = vmul.f32 %v537, %v542
  %v556 = vmul.f32 %v535, %v546
  %v557 = vmul.f32 %v533, %v550
  %v558 = vmul.f32 %v531, %v554
  %v559 = vmul.f32 %v538, %v542
  %v560 = vmul.f32 %v536, %v546
  %v561 = vmul.f32 %v534, %v550
  %v562 = vmul.f32 %v532, %v554
  %v563 = vpack.c.bf16 %v559, %v555
  %v564 = vpack.c.bf16 %v560, %v556
  %v565 = vpack.c.bf16 %v561, %v557
  %v566 = vpack.c.bf16 %v562, %v558
  %v571 = vunpack.c.l.b16 %v563
  %v572 = vunpack.c.l.b16 %v564
  %v573 = vunpack.c.l.b16 %v565
  %v574 = vunpack.c.l.b16 %v566
  %v575 = vunpack.c.h.b16 %v563
  %v576 = vunpack.c.h.b16 %v564
  %v577 = vunpack.c.h.b16 %v565
  %v578 = vunpack.c.h.b16 %v566
  %v579 = vpack.c.b16 %v572, %v571
  %v580 = vpack.c.b16 %v574, %v573
  %v581 = vpack.c.b16 %v576, %v575
  %v582 = vpack.c.b16 %v578, %v577
  %587 = vst [vmem:[#allocation2 + $0x20] sm:$0xff] %v579
  %588 = vst [vmem:[#allocation2 + $0x28] sm:$0xff] %v580
  %589 = vst [vmem:[#allocation2 + $0x30] sm:$0xff] %v581
  %590 = vst [vmem:[#allocation2 + $0x38] sm:$0xff] %v582
  %591 = vrot.lane.b32.xlu0 %v419, 15
  %v592 = vpop.permute.xlu0 %591
  %593 = vrot.lane.b32.xlu0 %v423, 15
  %v594 = vpop.permute.xlu0 %593
  %595 = vrot.lane.b32.xlu0 %v420, 15
  %v596 = vpop.permute.xlu0 %595
  %597 = vrot.lane.b32.xlu0 %v424, 15
  %v598 = vpop.permute.xlu0 %597
  %599 = vrot.lane.b32.xlu0 %v421, 15
  %v600 = vpop.permute.xlu0 %599
  %601 = vrot.lane.b32.xlu0 %v425, 15
  %v602 = vpop.permute.xlu0 %601
  %603 = vrot.lane.b32.xlu0 %v422, 15
  %v604 = vpop.permute.xlu0 %603
  %605 = vrot.lane.b32.xlu0 %v426, 15
  %v606 = vpop.permute.xlu0 %605
  %vm607 = vcmp.lt.s32.totalorder %v452, 15
  %v608 = vsel %vm607, %v600, %v604
  %v609 = vsel %vm607, %v602, %v606
  %v610 = vsel %vm607, %v596, %v600
  %v611 = vsel %vm607, %v598, %v602
  %v612 = vsel %vm607, %v592, %v596
  %v613 = vsel %vm607, %v594, %v598
  %v614 = vsel %vm607, %v604, %v592
  %v615 = vsel %vm607, %v606, %v594
  %v616 = vlaneseq
  %v617 = vshrl.u32 %v616, 7
  %v618 = vsub.s32 2, %v617
  %v619 = vrot.slane %v427, %v618
  %v620 = vlaneseq
  %v621 = vshrl.u32 %v620, 7
  %v622 = vsub.s32 2, %v621
  %v623 = vrot.slane %v428, %v622
  %v624 = vlaneseq
  %v625 = vshrl.u32 %v624, 7
  %v626 = vsub.s32 2, %v625
  %v627 = vrot.slane %v429, %v626
  %v628 = vlaneseq
  %v629 = vshrl.u32 %v628, 7
  %v630 = vsub.s32 2, %v629
  %v631 = vrot.slane %v430, %v630
  %v632 = vmul.f32 %v614, %v619
  %v633 = vmul.f32 %v612, %v623
  %v634 = vmul.f32 %v610, %v627
  %v635 = vmul.f32 %v608, %v631
  %v636 = vmul.f32 %v615, %v619
  %v637 = vmul.f32 %v613, %v623
  %v638 = vmul.f32 %v611, %v627
  %v639 = vmul.f32 %v609, %v631
  %v640 = vpack.c.bf16 %v636, %v632
  %v641 = vpack.c.bf16 %v637, %v633
  %v642 = vpack.c.bf16 %v638, %v634
  %v643 = vpack.c.bf16 %v639, %v635
  %v648 = vunpack.c.l.b16 %v640
  %v649 = vunpack.c.l.b16 %v641
  %v650 = vunpack.c.l.b16 %v642
  %v651 = vunpack.c.l.b16 %v643
  %v652 = vunpack.c.h.b16 %v640
  %v653 = vunpack.c.h.b16 %v641
  %v654 = vunpack.c.h.b16 %v642
  %v655 = vunpack.c.h.b16 %v643
  %v656 = vpack.c.b16 %v649, %v648
  %v657 = vpack.c.b16 %v651, %v650
  %v658 = vpack.c.b16 %v653, %v652
  %v659 = vpack.c.b16 %v655, %v654
  %664 = vst [vmem:[#allocation2 + $0x40] sm:$0xff] %v656
  %665 = vst [vmem:[#allocation2 + $0x48] sm:$0xff] %v657
  %666 = vst [vmem:[#allocation2 + $0x50] sm:$0xff] %v658
  %667 = vst [vmem:[#allocation2 + $0x58] sm:$0xff] %v659
  %668 = vrot.lane.b32.xlu0 %v419, 1
  %v669 = vpop.permute.xlu0 %668
  %670 = vrot.lane.b32.xlu0 %v423, 1
  %v671 = vpop.permute.xlu0 %670
  %672 = vrot.lane.b32.xlu0 %v420, 1
  %v673 = vpop.permute.xlu0 %672
  %674 = vrot.lane.b32.xlu0 %v424, 1
  %v675 = vpop.permute.xlu0 %674
  %676 = vrot.lane.b32.xlu0 %v421, 1
  %v677 = vpop.permute.xlu0 %676
  %678 = vrot.lane.b32.xlu0 %v425, 1
  %v679 = vpop.permute.xlu0 %678
  %680 = vrot.lane.b32.xlu0 %v422, 1
  %v681 = vpop.permute.xlu0 %680
  %682 = vrot.lane.b32.xlu0 %v426, 1
  %v683 = vpop.permute.xlu0 %682
  %vm684 = vcmp.lt.s32.totalorder %v452, 1
  %v685 = vsel %vm684, %v677, %v681
  %v686 = vsel %vm684, %v679, %v683
  %v687 = vsel %vm684, %v673, %v677
  %v688 = vsel %vm684, %v675, %v679
  %v689 = vsel %vm684, %v669, %v673
  %v690 = vsel %vm684, %v671, %v675
  %v691 = vsel %vm684, %v681, %v669
  %v692 = vsel %vm684, %v683, %v671
  %v693 = vlaneseq
  %v694 = vshrl.u32 %v693, 7
  %v695 = vsub.s32 3, %v694
  %v696 = vrot.slane %v427, %v695
  %v697 = vlaneseq
  %v698 = vshrl.u32 %v697, 7
  %v699 = vsub.s32 3, %v698
  %v700 = vrot.slane %v428, %v699
  %v701 = vlaneseq
  %v702 = vshrl.u32 %v701, 7
  %v703 = vsub.s32 3, %v702
  %v704 = vrot.slane %v429, %v703
  %v705 = vlaneseq
  %v706 = vshrl.u32 %v705, 7
  %v707 = vsub.s32 3, %v706
  %v708 = vrot.slane %v430, %v707
  %v709 = vmul.f32 %v691, %v696
  %v710 = vmul.f32 %v689, %v700
  %v711 = vmul.f32 %v687, %v704
  %v712 = vmul.f32 %v685, %v708
  %v713 = vmul.f32 %v692, %v696
  %v714 = vmul.f32 %v690, %v700
  %v715 = vmul.f32 %v688, %v704
  %v716 = vmul.f32 %v686, %v708
  %v717 = vpack.c.bf16 %v713, %v709
  %v718 = vpack.c.bf16 %v714, %v710
  %v719 = vpack.c.bf16 %v715, %v711
  %v720 = vpack.c.bf16 %v716, %v712
  %v725 = vunpack.c.l.b16 %v717
  %v726 = vunpack.c.l.b16 %v718
  %v727 = vunpack.c.l.b16 %v719
  %v728 = vunpack.c.l.b16 %v720
  %v729 = vunpack.c.h.b16 %v717
  %v730 = vunpack.c.h.b16 %v718
  %v731 = vunpack.c.h.b16 %v719
  %v732 = vunpack.c.h.b16 %v720
  %v733 = vpack.c.b16 %v726, %v725
  %v734 = vpack.c.b16 %v728, %v727
  %v735 = vpack.c.b16 %v730, %v729
  %v736 = vpack.c.b16 %v732, %v731
  %741 = vst [vmem:[#allocation2 + $0x60] sm:$0xff] %v733
  %742 = vst [vmem:[#allocation2 + $0x68] sm:$0xff] %v734
  %743 = vst [vmem:[#allocation2 + $0x70] sm:$0xff] %v735
  %744 = vst [vmem:[#allocation2 + $0x78] sm:$0xff] %v736
  %v745 = vpack.c.bf16 %v423, %v419
  %v746 = vpack.c.bf16 %v424, %v420
  %v747 = vpack.c.bf16 %v425, %v421
  %v748 = vpack.c.bf16 %v426, %v422
  %v753 = vunpack.c.l.b16 %v745
  %v754 = vunpack.c.l.b16 %v746
  %v755 = vunpack.c.l.b16 %v747
  %v756 = vunpack.c.l.b16 %v748
  %v757 = vunpack.c.h.b16 %v745
  %v758 = vunpack.c.h.b16 %v746
  %v759 = vunpack.c.h.b16 %v747
  %v760 = vunpack.c.h.b16 %v748
  %v761 = vpack.c.b16 %v754, %v753
  %v762 = vpack.c.b16 %v756, %v755
  %v763 = vpack.c.b16 %v758, %v757
  %v764 = vpack.c.b16 %v760, %v759
  %769 = vst [vmem:[#allocation2 + $0x80] sm:$0xff] %v761
  %770 = vst [vmem:[#allocation2 + $0x88] sm:$0xff] %v762
  %771 = vst [vmem:[#allocation2 + $0x90] sm:$0xff] %v763
  %772 = vst [vmem:[#allocation2 + $0x98] sm:$0xff] %v764
  %773 = vrot.lane.b32.xlu0 %v419, 127
  %v774 = vpop.permute.xlu0 %773
  %775 = vrot.lane.b32.xlu0 %v423, 127
  %v776 = vpop.permute.xlu0 %775
  %777 = vrot.lane.b32.xlu0 %v420, 127
  %v778 = vpop.permute.xlu0 %777
  %779 = vrot.lane.b32.xlu0 %v424, 127
  %v780 = vpop.permute.xlu0 %779
  %781 = vrot.lane.b32.xlu0 %v421, 127
  %v782 = vpop.permute.xlu0 %781
  %783 = vrot.lane.b32.xlu0 %v425, 127
  %v784 = vpop.permute.xlu0 %783
  %785 = vrot.lane.b32.xlu0 %v422, 127
  %v786 = vpop.permute.xlu0 %785
  %787 = vrot.lane.b32.xlu0 %v426, 127
  %v788 = vpop.permute.xlu0 %787
  %vm789 = vcmp.lt.s32.totalorder %v452, 127
  %v790 = vsel %vm789, %v782, %v786
  %v791 = vsel %vm789, %v784, %v788
  %v792 = vsel %vm789, %v778, %v782
  %v793 = vsel %vm789, %v780, %v784
  %v794 = vsel %vm789, %v774, %v778
  %v795 = vsel %vm789, %v776, %v780
  %v796 = vsel %vm789, %v786, %v774
  %v797 = vsel %vm789, %v788, %v776
  %v798 = vlaneseq
  %v799 = vshrl.u32 %v798, 7
  %v800 = vsub.s32 5, %v799
  %v801 = vrot.slane %v427, %v800
  %v802 = vlaneseq
  %v803 = vshrl.u32 %v802, 7
  %v804 = vsub.s32 5, %v803
  %v805 = vrot.slane %v428, %v804
  %v806 = vlaneseq
  %v807 = vshrl.u32 %v806, 7
  %v808 = vsub.s32 5, %v807
  %v809 = vrot.slane %v429, %v808
  %v810 = vlaneseq
  %v811 = vshrl.u32 %v810, 7
  %v812 = vsub.s32 5, %v811
  %v813 = vrot.slane %v430, %v812
  %v814 = vmul.f32 %v794, %v801
  %v815 = vmul.f32 %v792, %v805
  %v816 = vmul.f32 %v790, %v809
  %v817 = vmul.f32 %v796, %v813
  %v818 = vmul.f32 %v795, %v801
  %v819 = vmul.f32 %v793, %v805
  %v820 = vmul.f32 %v791, %v809
  %v821 = vmul.f32 %v797, %v813
  %v822 = vpack.c.bf16 %v818, %v814
  %v823 = vpack.c.bf16 %v819, %v815
  %v824 = vpack.c.bf16 %v820, %v816
  %v825 = vpack.c.bf16 %v821, %v817
  %v830 = vunpack.c.l.b16 %v822
  %v831 = vunpack.c.l.b16 %v823
  %v832 = vunpack.c.l.b16 %v824
  %v833 = vunpack.c.l.b16 %v825
  %v834 = vunpack.c.h.b16 %v822
  %v835 = vunpack.c.h.b16 %v823
  %v836 = vunpack.c.h.b16 %v824
  %v837 = vunpack.c.h.b16 %v825
  %v838 = vpack.c.b16 %v831, %v830
  %v839 = vpack.c.b16 %v833, %v832
  %v840 = vpack.c.b16 %v835, %v834
  %v841 = vpack.c.b16 %v837, %v836
  %846 = vst [vmem:[#allocation2 + $0xa0] sm:$0xff] %v838
  %847 = vst [vmem:[#allocation2 + $0xa8] sm:$0xff] %v839
  %848 = vst [vmem:[#allocation2 + $0xb0] sm:$0xff] %v840
  %849 = vst [vmem:[#allocation2 + $0xb8] sm:$0xff] %v841
  %850 = vrot.lane.b32.xlu0 %v419, 113
  %v851 = vpop.permute.xlu0 %850
  %852 = vrot.lane.b32.xlu0 %v423, 113
  %v853 = vpop.permute.xlu0 %852
  %854 = vrot.lane.b32.xlu0 %v420, 113
  %v855 = vpop.permute.xlu0 %854
  %856 = vrot.lane.b32.xlu0 %v424, 113
  %v857 = vpop.permute.xlu0 %856
  %858 = vrot.lane.b32.xlu0 %v421, 113
  %v859 = vpop.permute.xlu0 %858
  %860 = vrot.lane.b32.xlu0 %v425, 113
  %v861 = vpop.permute.xlu0 %860
  %862 = vrot.lane.b32.xlu0 %v422, 113
  %v863 = vpop.permute.xlu0 %862
  %864 = vrot.lane.b32.xlu0 %v426, 113
  %v865 = vpop.permute.xlu0 %864
  %vm866 = vcmp.lt.s32.totalorder %v452, 113
  %v867 = vsel %vm866, %v859, %v863
  %v868 = vsel %vm866, %v861, %v865
  %v869 = vsel %vm866, %v855, %v859
  %v870 = vsel %vm866, %v857, %v861
  %v871 = vsel %vm866, %v851, %v855
  %v872 = vsel %vm866, %v853, %v857
  %v873 = vsel %vm866, %v863, %v851
  %v874 = vsel %vm866, %v865, %v853
  %v875 = vlaneseq
  %v876 = vshrl.u32 %v875, 7
  %v877 = vsub.s32 6, %v876
  %v878 = vrot.slane %v427, %v877
  %v879 = vlaneseq
  %v880 = vshrl.u32 %v879, 7
  %v881 = vsub.s32 6, %v880
  %v882 = vrot.slane %v428, %v881
  %v883 = vlaneseq
  %v884 = vshrl.u32 %v883, 7
  %v885 = vsub.s32 6, %v884
  %v886 = vrot.slane %v429, %v885
  %v887 = vlaneseq
  %v888 = vshrl.u32 %v887, 7
  %v889 = vsub.s32 6, %v888
  %v890 = vrot.slane %v430, %v889
  %v891 = vmul.f32 %v871, %v878
  %v892 = vmul.f32 %v869, %v882
  %v893 = vmul.f32 %v867, %v886
  %v894 = vmul.f32 %v873, %v890
  %v895 = vmul.f32 %v872, %v878
  %v896 = vmul.f32 %v870, %v882
  %v897 = vmul.f32 %v868, %v886
  %v898 = vmul.f32 %v874, %v890
  %v899 = vpack.c.bf16 %v895, %v891
  %v900 = vpack.c.bf16 %v896, %v892
  %v901 = vpack.c.bf16 %v897, %v893
  %v902 = vpack.c.bf16 %v898, %v894
  %v907 = vunpack.c.l.b16 %v899
  %v908 = vunpack.c.l.b16 %v900
  %v909 = vunpack.c.l.b16 %v901
  %v910 = vunpack.c.l.b16 %v902
  %v911 = vunpack.c.h.b16 %v899
  %v912 = vunpack.c.h.b16 %v900
  %v913 = vunpack.c.h.b16 %v901
  %v914 = vunpack.c.h.b16 %v902
  %v915 = vpack.c.b16 %v908, %v907
  %v916 = vpack.c.b16 %v910, %v909
  %v917 = vpack.c.b16 %v912, %v911
  %v918 = vpack.c.b16 %v914, %v913
  %923 = vst [vmem:[#allocation2 + $0xc0] sm:$0xff] %v915
  %924 = vst [vmem:[#allocation2 + $0xc8] sm:$0xff] %v916
  %925 = vst [vmem:[#allocation2 + $0xd0] sm:$0xff] %v917
  %926 = vst [vmem:[#allocation2 + $0xd8] sm:$0xff] %v918
  %927 = vrot.lane.b32.xlu0 %v419, 112
  %v928 = vpop.permute.xlu0 %927
  %929 = vrot.lane.b32.xlu0 %v423, 112
  %v930 = vpop.permute.xlu0 %929
  %931 = vrot.lane.b32.xlu0 %v420, 112
  %v932 = vpop.permute.xlu0 %931
  %933 = vrot.lane.b32.xlu0 %v424, 112
  %v934 = vpop.permute.xlu0 %933
  %935 = vrot.lane.b32.xlu0 %v421, 112
  %v936 = vpop.permute.xlu0 %935
  %937 = vrot.lane.b32.xlu0 %v425, 112
  %v938 = vpop.permute.xlu0 %937
  %939 = vrot.lane.b32.xlu0 %v422, 112
  %v940 = vpop.permute.xlu0 %939
  %941 = vrot.lane.b32.xlu0 %v426, 112
  %v942 = vpop.permute.xlu0 %941
  %vm943 = vcmp.lt.s32.totalorder %v452, 112
  %v944 = vsel %vm943, %v936, %v940
  %v945 = vsel %vm943, %v938, %v942
  %v946 = vsel %vm943, %v932, %v936
  %v947 = vsel %vm943, %v934, %v938
  %v948 = vsel %vm943, %v928, %v932
  %v949 = vsel %vm943, %v930, %v934
  %v950 = vsel %vm943, %v940, %v928
  %v951 = vsel %vm943, %v942, %v930
  %v952 = vlaneseq
  %v953 = vshrl.u32 %v952, 7
  %v954 = vsub.s32 7, %v953
  %v955 = vrot.slane %v427, %v954
  %v956 = vlaneseq
  %v957 = vshrl.u32 %v956, 7
  %v958 = vsub.s32 7, %v957
  %v959 = vrot.slane %v428, %v958
  %v960 = vlaneseq
  %v961 = vshrl.u32 %v960, 7
  %v962 = vsub.s32 7, %v961
  %v963 = vrot.slane %v429, %v962
  %v964 = vlaneseq
  %v965 = vshrl.u32 %v964, 7
  %v966 = vsub.s32 7, %v965
  %v967 = vrot.slane %v430, %v966
  %v968 = vmul.f32 %v948, %v955
  %v969 = vmul.f32 %v946, %v959
  %v970 = vmul.f32 %v944, %v963
  %v971 = vmul.f32 %v950, %v967
  %v972 = vmul.f32 %v949, %v955
  %v973 = vmul.f32 %v947, %v959
  %v974 = vmul.f32 %v945, %v963
  %v975 = vmul.f32 %v951, %v967
  %v976 = vpack.c.bf16 %v972, %v968
  %v977 = vpack.c.bf16 %v973, %v969
  %v978 = vpack.c.bf16 %v974, %v970
  %v979 = vpack.c.bf16 %v975, %v971
  %v984 = vunpack.c.l.b16 %v976
  %v985 = vunpack.c.l.b16 %v977
  %v986 = vunpack.c.l.b16 %v978
  %v987 = vunpack.c.l.b16 %v979
  %v988 = vunpack.c.h.b16 %v976
  %v989 = vunpack.c.h.b16 %v977
  %v990 = vunpack.c.h.b16 %v978
  %v991 = vunpack.c.h.b16 %v979
  %v992 = vpack.c.b16 %v985, %v984
  %v993 = vpack.c.b16 %v987, %v986
  %v994 = vpack.c.b16 %v989, %v988
  %v995 = vpack.c.b16 %v991, %v990
  %1000 = vst [vmem:[#allocation2 + $0xe0] sm:$0xff] %v992
  %1001 = vst [vmem:[#allocation2 + $0xe8] sm:$0xff] %v993
  %1002 = vst [vmem:[#allocation2 + $0xf0] sm:$0xff] %v994
  %1003 = vst [vmem:[#allocation2 + $0xf8] sm:$0xff] %v995
  %1004 = vrot.lane.b32.xlu0 %v419, 111
  %v1005 = vpop.permute.xlu0 %1004
  %1006 = vrot.lane.b32.xlu0 %v423, 111
  %v1007 = vpop.permute.xlu0 %1006
  %1008 = vrot.lane.b32.xlu0 %v420, 111
  %v1009 = vpop.permute.xlu0 %1008
  %1010 = vrot.lane.b32.xlu0 %v424, 111
  %v1011 = vpop.permute.xlu0 %1010
  %1012 = vrot.lane.b32.xlu0 %v421, 111
  %v1013 = vpop.permute.xlu0 %1012
  %1014 = vrot.lane.b32.xlu0 %v425, 111
  %v1015 = vpop.permute.xlu0 %1014
  %1016 = vrot.lane.b32.xlu0 %v422, 111
  %v1017 = vpop.permute.xlu0 %1016
  %1018 = vrot.lane.b32.xlu0 %v426, 111
  %v1019 = vpop.permute.xlu0 %1018
  %vm1020 = vcmp.lt.s32.totalorder %v452, 111
  %v1021 = vsel %vm1020, %v1013, %v1017
  %v1022 = vsel %vm1020, %v1015, %v1019
  %v1023 = vsel %vm1020, %v1009, %v1013
  %v1024 = vsel %vm1020, %v1011, %v1015
  %v1025 = vsel %vm1020, %v1005, %v1009
  %v1026 = vsel %vm1020, %v1007, %v1011
  %v1027 = vsel %vm1020, %v1017, %v1005
  %v1028 = vsel %vm1020, %v1019, %v1007
  %v1029 = vlaneseq
  %v1030 = vshrl.u32 %v1029, 7
  %v1031 = vsub.s32 0, %v1030
  %v1032 = vrot.slane %v431, %v1031
  %v1033 = vlaneseq
  %v1034 = vshrl.u32 %v1033, 7
  %v1035 = vsub.s32 0, %v1034
  %v1036 = vrot.slane %v432, %v1035
  %v1037 = vlaneseq
  %v1038 = vshrl.u32 %v1037, 7
  %v1039 = vsub.s32 0, %v1038
  %v1040 = vrot.slane %v433, %v1039
  %v1041 = vlaneseq
  %v1042 = vshrl.u32 %v1041, 7
  %v1043 = vsub.s32 0, %v1042
  %v1044 = vrot.slane %v434, %v1043
  %v1045 = vmul.f32 %v1025, %v1032
  %v1046 = vmul.f32 %v1023, %v1036
  %v1047 = vmul.f32 %v1021, %v1040
  %v1048 = vmul.f32 %v1027, %v1044
  %v1049 = vmul.f32 %v1026, %v1032
  %v1050 = vmul.f32 %v1024, %v1036
  %v1051 = vmul.f32 %v1022, %v1040
  %v1052 = vmul.f32 %v1028, %v1044
  %v1053 = vpack.c.bf16 %v1049, %v1045
  %v1054 = vpack.c.bf16 %v1050, %v1046
  %v1055 = vpack.c.bf16 %v1051, %v1047
  %v1056 = vpack.c.bf16 %v1052, %v1048
  %v1061 = vunpack.c.l.b16 %v1053
  %v1062 = vunpack.c.l.b16 %v1054
  %v1063 = vunpack.c.l.b16 %v1055
  %v1064 = vunpack.c.l.b16 %v1056
  %v1065 = vunpack.c.h.b16 %v1053
  %v1066 = vunpack.c.h.b16 %v1054
  %v1067 = vunpack.c.h.b16 %v1055
  %v1068 = vunpack.c.h.b16 %v1056
  %v1069 = vpack.c.b16 %v1062, %v1061
  %v1070 = vpack.c.b16 %v1064, %v1063
  %v1071 = vpack.c.b16 %v1066, %v1065
  %v1072 = vpack.c.b16 %v1068, %v1067
  %1077 = vst [vmem:[#allocation2 + $0x100] sm:$0xff] %v1069
  %1078 = vst [vmem:[#allocation2 + $0x108] sm:$0xff] %v1070
  %1079 = vst [vmem:[#allocation2 + $0x110] sm:$0xff] %v1071
  %1080 = vst [vmem:[#allocation2 + $0x118] sm:$0xff] %v1072
  %v1081 = vld [vmem:[%s6] sm:$0xff]
  %v1082 = vld [vmem:[%s6 + $0x8] sm:$0xff]
  %v1083 = vld [vmem:[#allocation2] sm:$0xff]
  %v1084 = vld [vmem:[#allocation2 + $0x8] sm:$0xff]
  %v1085 = vld [vmem:[#allocation2 + $0x10] sm:$0xff]
  %v1086 = vld [vmem:[#allocation2 + $0x18] sm:$0xff]
  %v1087 = vld [vmem:[#allocation2 + $0x20] sm:$0xff]
  %v1088 = vld [vmem:[#allocation2 + $0x28] sm:$0xff]
  %v1089 = vld [vmem:[#allocation2 + $0x30] sm:$0xff]
  %v1090 = vld [vmem:[#allocation2 + $0x38] sm:$0xff]
  %v1091 = vld [vmem:[#allocation2 + $0x40] sm:$0xff]
  %v1092 = vld [vmem:[#allocation2 + $0x48] sm:$0xff]
  %v1093 = vld [vmem:[#allocation2 + $0x50] sm:$0xff]
  %v1094 = vld [vmem:[#allocation2 + $0x58] sm:$0xff]
  %v1095 = vld [vmem:[#allocation2 + $0x60] sm:$0xff]
  %v1096 = vld [vmem:[#allocation2 + $0x68] sm:$0xff]
  %v1097 = vld [vmem:[#allocation2 + $0x70] sm:$0xff]
  %v1098 = vld [vmem:[#allocation2 + $0x78] sm:$0xff]
  %v1099 = vld [vmem:[#allocation2 + $0x80] sm:$0xff]
  %v1100 = vld [vmem:[#allocation2 + $0x88] sm:$0xff]
  %v1101 = vld [vmem:[#allocation2 + $0x90] sm:$0xff]
  %v1102 = vld [vmem:[#allocation2 + $0x98] sm:$0xff]
  %v1103 = vld [vmem:[#allocation2 + $0xa0] sm:$0xff]
  %v1104 = vld [vmem:[#allocation2 + $0xa8] sm:$0xff]
  %v1105 = vld [vmem:[#allocation2 + $0xb0] sm:$0xff]
  %v1106 = vld [vmem:[#allocation2 + $0xb8] sm:$0xff]
  %v1107 = vld [vmem:[#allocation2 + $0xc0] sm:$0xff]
  %v1108 = vld [vmem:[#allocation2 + $0xc8] sm:$0xff]
  %v1109 = vld [vmem:[#allocation2 + $0xd0] sm:$0xff]
  %v1110 = vld [vmem:[#allocation2 + $0xd8] sm:$0xff]
  %v1111 = vld [vmem:[#allocation2 + $0xe0] sm:$0xff]
  %v1112 = vld [vmem:[#allocation2 + $0xe8] sm:$0xff]
  %v1113 = vld [vmem:[#allocation2 + $0xf0] sm:$0xff]
  %v1114 = vld [vmem:[#allocation2 + $0xf8] sm:$0xff]
  %v1115 = vld [vmem:[#allocation2 + $0x100] sm:$0xff]
  %v1116 = vld [vmem:[#allocation2 + $0x108] sm:$0xff]
  %v1117 = vld [vmem:[#allocation2 + $0x110] sm:$0xff]
  %v1118 = vld [vmem:[#allocation2 + $0x118] sm:$0xff]
  %v1121 = vunpack.c.l.b16 %v1081
  %v1122 = vunpack.c.h.b16 %v1081
  %v1123 = vunpack.c.l.b16 %v1082
  %v1124 = vunpack.c.h.b16 %v1082
  %v1125 = vpack.c.b16 %v1123, %v1121
  %v1126 = vpack.c.b16 %v1124, %v1122
  %v1164 = vunpack.c.l.b16 %v1083
  %v1165 = vunpack.c.h.b16 %v1083
  %v1166 = vunpack.c.l.b16 %v1084
  %v1167 = vunpack.c.h.b16 %v1084
  %v1168 = vunpack.c.l.b16 %v1085
  %v1169 = vunpack.c.h.b16 %v1085
  %v1170 = vunpack.c.l.b16 %v1086
  %v1171 = vunpack.c.h.b16 %v1086
  %v1172 = vunpack.c.l.b16 %v1087
  %v1173 = vunpack.c.h.b16 %v1087
  %v1174 = vunpack.c.l.b16 %v1088
  %v1175 = vunpack.c.h.b16 %v1088
  %v1176 = vunpack.c.l.b16 %v1089
  %v1177 = vunpack.c.h.b16 %v1089
  %v1178 = vunpack.c.l.b16 %v1090
  %v1179 = vunpack.c.h.b16 %v1090
  %v1180 = vunpack.c.l.b16 %v1091
  %v1181 = vunpack.c.h.b16 %v1091
  %v1182 = vunpack.c.l.b16 %v1092
  %v1183 = vunpack.c.h.b16 %v1092
  %v1184 = vunpack.c.l.b16 %v1093
  %v1185 = vunpack.c.h.b16 %v1093
  %v1186 = vunpack.c.l.b16 %v1094
  %v1187 = vunpack.c.h.b16 %v1094
  %v1188 = vunpack.c.l.b16 %v1095
  %v1189 = vunpack.c.h.b16 %v1095
  %v1190 = vunpack.c.l.b16 %v1096
  %v1191 = vunpack.c.h.b16 %v1096
  %v1192 = vunpack.c.l.b16 %v1097
  %v1193 = vunpack.c.h.b16 %v1097
  %v1194 = vunpack.c.l.b16 %v1098
  %v1195 = vunpack.c.h.b16 %v1098
  %v1196 = vunpack.c.l.b16 %v1099
  %v1197 = vunpack.c.h.b16 %v1099
  %v1198 = vunpack.c.l.b16 %v1100
  %v1199 = vunpack.c.h.b16 %v1100
  %v1200 = vunpack.c.l.b16 %v1101
  %v1201 = vunpack.c.h.b16 %v1101
  %v1202 = vunpack.c.l.b16 %v1102
  %v1203 = vunpack.c.h.b16 %v1102
  %v1204 = vunpack.c.l.b16 %v1103
  %v1205 = vunpack.c.h.b16 %v1103
  %v1206 = vunpack.c.l.b16 %v1104
  %v1207 = vunpack.c.h.b16 %v1104
  %v1208 = vunpack.c.l.b16 %v1105
  %v1209 = vunpack.c.h.b16 %v1105
  %v1210 = vunpack.c.l.b16 %v1106
  %v1211 = vunpack.c.h.b16 %v1106
  %v1212 = vunpack.c.l.b16 %v1107
  %v1213 = vunpack.c.h.b16 %v1107
  %v1214 = vunpack.c.l.b16 %v1108
  %v1215 = vunpack.c.h.b16 %v1108
  %v1216 = vunpack.c.l.b16 %v1109
  %v1217 = vunpack.c.h.b16 %v1109
  %v1218 = vunpack.c.l.b16 %v1110
  %v1219 = vunpack.c.h.b16 %v1110
  %v1220 = vunpack.c.l.b16 %v1111
  %v1221 = vunpack.c.h.b16 %v1111
  %v1222 = vunpack.c.l.b16 %v1112
  %v1223 = vunpack.c.h.b16 %v1112
  %v1224 = vunpack.c.l.b16 %v1113
  %v1225 = vunpack.c.h.b16 %v1113
  %v1226 = vunpack.c.l.b16 %v1114
  %v1227 = vunpack.c.h.b16 %v1114
  %v1228 = vunpack.c.l.b16 %v1115
  %v1229 = vunpack.c.h.b16 %v1115
  %v1230 = vunpack.c.l.b16 %v1116
  %v1231 = vunpack.c.h.b16 %v1116
  %v1232 = vunpack.c.l.b16 %v1117
  %v1233 = vunpack.c.h.b16 %v1117
  %v1234 = vunpack.c.l.b16 %v1118
  %v1235 = vunpack.c.h.b16 %v1118
  %v1236 = vpack.c.b16 %v1168, %v1164
  %v1237 = vpack.c.b16 %v1169, %v1165
  %v1238 = vpack.c.b16 %v1170, %v1166
  %v1239 = vpack.c.b16 %v1171, %v1167
  %v1240 = vpack.c.b16 %v1176, %v1172
  %v1241 = vpack.c.b16 %v1177, %v1173
  %v1242 = vpack.c.b16 %v1178, %v1174
  %v1243 = vpack.c.b16 %v1179, %v1175
  %v1244 = vpack.c.b16 %v1184, %v1180
  %v1245 = vpack.c.b16 %v1185, %v1181
  %v1246 = vpack.c.b16 %v1186, %v1182
  %v1247 = vpack.c.b16 %v1187, %v1183
  %v1248 = vpack.c.b16 %v1192, %v1188
  %v1249 = vpack.c.b16 %v1193, %v1189
  %v1250 = vpack.c.b16 %v1194, %v1190
  %v1251 = vpack.c.b16 %v1195, %v1191
  %v1252 = vpack.c.b16 %v1200, %v1196
  %v1253 = vpack.c.b16 %v1201, %v1197
  %v1254 = vpack.c.b16 %v1202, %v1198
  %v1255 = vpack.c.b16 %v1203, %v1199
  %v1256 = vpack.c.b16 %v1208, %v1204
  %v1257 = vpack.c.b16 %v1209, %v1205
  %v1258 = vpack.c.b16 %v1210, %v1206
  %v1259 = vpack.c.b16 %v1211, %v1207
  %v1260 = vpack.c.b16 %v1216, %v1212
  %v1261 = vpack.c.b16 %v1217, %v1213
  %v1262 = vpack.c.b16 %v1218, %v1214
  %v1263 = vpack.c.b16 %v1219, %v1215
  %v1264 = vpack.c.b16 %v1224, %v1220
  %v1265 = vpack.c.b16 %v1225, %v1221
  %v1266 = vpack.c.b16 %v1226, %v1222
  %v1267 = vpack.c.b16 %v1227, %v1223
  %v1268 = vpack.c.b16 %v1232, %v1228
  %v1269 = vpack.c.b16 %v1233, %v1229
  %v1270 = vpack.c.b16 %v1234, %v1230
  %v1271 = vpack.c.b16 %v1235, %v1231
  %vm1308 = vcmask 130048
  %v1310 = vsel %vm1308, %v1126, 0
  %1312 = vmatprep.subr.bf16.mxu0 %v1265
  %1313 = vmatpush1.bf16.msra.mxu0 %v1264
  %1314 = vmatprep.subr.bf16.mxu0 %v1261
  %1315 = vmatpush1.bf16.msra.mxu0 %v1260
  %1316 = vmatprep.subr.bf16.mxu0 %v1257
  %1317 = vmatpush1.bf16.msra.mxu0 %v1256
  %1318 = vmatprep.subr.bf16.mxu0 %v1253
  %1319 = vmatpush1.bf16.msra.mxu0 %v1252
  %1320 = vmatprep.subr.bf16.mxu0 %v1249
  %1321 = vmatpush1.bf16.msra.mxu0 %v1248
  %1322 = vmatprep.subr.bf16.mxu0 %v1245
  %1323 = vmatpush1.bf16.msra.mxu0 %v1244
  %1324 = vmatprep.subr.bf16.mxu0 %v1241
  %1325 = vmatpush1.bf16.msra.mxu0 %v1240
  %1326 = vmatprep.subr.bf16.mxu0 %v1237
  %1327 = vmatpush1.bf16.msra.mxu0 %v1236
  %1328 = vmatprep.subr.bf16.mxu0 0
  %1329 = vmatpush2.bf16.msra.mxu0 0
  %1330 = vmatprep.subr.bf16.mxu0 0
  %1331 = vmatpush2.bf16.msra.mxu0 0
  %1332 = vmatprep.subr.bf16.mxu0 0
  %1333 = vmatpush2.bf16.msra.mxu0 0
  %1334 = vmatprep.subr.bf16.mxu0 0
  %1335 = vmatpush2.bf16.msra.mxu0 0
  %1336 = vmatprep.subr.bf16.mxu0 0
  %1337 = vmatpush2.bf16.msra.mxu0 0
  %1338 = vmatprep.subr.bf16.mxu0 0
  %1339 = vmatpush2.bf16.msra.mxu0 0
  %1340 = vmatprep.subr.bf16.mxu0 0
  %1341 = vmatpush2.bf16.msra.mxu0 0
  %1342 = vmatprep.subr.bf16.mxu0 %v1269
  %1343 = vmatpush2.bf16.msra.mxu0 %v1268
  %1344 = vmatprep.mubr.bf16.mxu0 %v1310
  %1345 = vmatmul.mubr.bf16.gmra.mxu0 %v1125
  %v1346 = vpop.f32.mrf.mxu0
  %v1347 = vadd.f32 0.0, %v1346
  %v1348 = vpop.f32.mrf.mxu0
  %v1349 = vadd.f32 0.0, %v1348
  %v1350 = vpop.f32.mrf.mxu0
  %v1351 = vadd.f32 0.0, %v1350
  %v1352 = vpop.f32.mrf.mxu0
  %v1353 = vadd.f32 0.0, %v1352
  %1354 = vdwg.mxu0
  %1355 = vmatprep.subr.bf16.mxu0 %v1267
  %1356 = vmatpush1.bf16.msra.mxu0 %v1266
  %1357 = vmatprep.subr.bf16.mxu0 %v1263
  %1358 = vmatpush1.bf16.msra.mxu0 %v1262
  %1359 = vmatprep.subr.bf16.mxu0 %v1259
  %1360 = vmatpush1.bf16.msra.mxu0 %v1258
  %1361 = vmatprep.subr.bf16.mxu0 %v1255
  %1362 = vmatpush1.bf16.msra.mxu0 %v1254
  %1363 = vmatprep.subr.bf16.mxu0 %v1251
  %1364 = vmatpush1.bf16.msra.mxu0 %v1250
  %1365 = vmatprep.subr.bf16.mxu0 %v1247
  %1366 = vmatpush1.bf16.msra.mxu0 %v1246
  %1367 = vmatprep.subr.bf16.mxu0 %v1243
  %1368 = vmatpush1.bf16.msra.mxu0 %v1242
  %1369 = vmatprep.subr.bf16.mxu0 %v1239
  %1370 = vmatpush1.bf16.msra.mxu0 %v1238
  %1371 = vmatprep.subr.bf16.mxu0 0
  %1372 = vmatpush2.bf16.msra.mxu0 0
  %1373 = vmatprep.subr.bf16.mxu0 0
  %1374 = vmatpush2.bf16.msra.mxu0 0
  %1375 = vmatprep.subr.bf16.mxu0 0
  %1376 = vmatpush2.bf16.msra.mxu0 0
  %1377 = vmatprep.subr.bf16.mxu0 0
  %1378 = vmatpush2.bf16.msra.mxu0 0
  %1379 = vmatprep.subr.bf16.mxu0 0
  %1380 = vmatpush2.bf16.msra.mxu0 0
  %1381 = vmatprep.subr.bf16.mxu0 0
  %1382 = vmatpush2.bf16.msra.mxu0 0
  %1383 = vmatprep.subr.bf16.mxu0 0
  %1384 = vmatpush2.bf16.msra.mxu0 0
  %1385 = vmatprep.subr.bf16.mxu0 %v1271
  %1386 = vmatpush2.bf16.msra.mxu0 %v1270
  %1387 = vmatprep.mubr.bf16.mxu0 %v1310
  %1388 = vmatmul.mubr.bf16.gmra.mxu0 %v1125
  %v1389 = vpop.f32.mrf.mxu0
  %v1390 = vadd.f32 0.0, %v1389
  %v1391 = vpop.f32.mrf.mxu0
  %v1392 = vadd.f32 0.0, %v1391
  %v1393 = vpop.f32.mrf.mxu0
  %v1394 = vadd.f32 0.0, %v1393
  %v1395 = vpop.f32.mrf.mxu0
  %v1396 = vadd.f32 0.0, %v1395
  %1397 = vdwg.mxu0
  %v1398 = vld [vmem:[%s7] sm:$0xff]
  %v1399 = vld [vmem:[%s7 + $0x8] sm:$0xff]
  %1401 = vset.pattern.permute.xlu0 0
  %1402 = vperm.xlu0 %1401, %v1398
  %v1403 = vpop.permute.xlu0 %1402
  %1406 = vset.pattern.permute.xlu0 0
  %1407 = vperm.xlu0 %1406, %v1399
  %v1408 = vpop.permute.xlu0 %1407
  %v1410 = vmul.f32 %v1347, %v1403
  %v1411 = vmul.f32 %v1349, %v1403
  %v1412 = vmul.f32 %v1390, %v1403
  %v1413 = vmul.f32 %v1392, %v1403
  %v1414 = vmul.f32 %v1351, %v1408
  %v1415 = vmul.f32 %v1353, %v1408
  %v1416 = vmul.f32 %v1394, %v1408
  %v1417 = vmul.f32 %v1396, %v1408
  %v1418 = vld [vmem:[%s8] sm:$0xff]
  %v1419 = vld [vmem:[%s8 + $0x8] sm:$0xff]
  %1421 = vset.pattern.permute.xlu0 0
  %1422 = vperm.xlu0 %1421, %v1418
  %v1423 = vpop.permute.xlu0 %1422
  %1426 = vset.pattern.permute.xlu0 0
  %1427 = vperm.xlu0 %1426, %v1419
  %v1428 = vpop.permute.xlu0 %1427
  %v1430 = vadd.f32 %v1410, %v1423
  %v1431 = vadd.f32 %v1411, %v1423
  %v1432 = vadd.f32 %v1412, %v1423
  %v1433 = vadd.f32 %v1413, %v1423
  %v1434 = vadd.f32 %v1414, %v1428
  %v1435 = vadd.f32 %v1415, %v1428
  %v1436 = vadd.f32 %v1416, %v1428
  %v1437 = vadd.f32 %v1417, %v1428
  %v1438 = vmax.f32 %v1430, 0.0
  %v1439 = vmax.f32 %v1431, 0.0
  %v1440 = vmax.f32 %v1432, 0.0
  %v1441 = vmax.f32 %v1433, 0.0
  %v1442 = vmax.f32 %v1434, 0.0
  %v1443 = vmax.f32 %v1435, 0.0
  %v1444 = vmax.f32 %v1436, 0.0
  %v1445 = vmax.f32 %v1437, 0.0
  %v1446 = vld [vmem:[%s10] sm:$0xf]
  %v1447 = vld [vmem:[%s10 + $0x4] sm:$0xf]
  %v1448 = vld [vmem:[%s10 + $0x8] sm:$0xf]
  %v1449 = vld [vmem:[%s10 + $0xc] sm:$0xf]
  %v1450 = vld [vmem:[%s10 + $0x10] sm:$0xf]
  %v1451 = vld [vmem:[%s10 + $0x14] sm:$0xf]
  %v1452 = vld [vmem:[%s10 + $0x18] sm:$0xf]
  %v1453 = vld [vmem:[%s10 + $0x1c] sm:$0xf]
  %v1454 = vpack.c.bf16 %v1442, %v1438
  %v1455 = vpack.c.bf16 %v1443, %v1439
  %v1456 = vpack.c.bf16 %v1444, %v1440
  %v1457 = vpack.c.bf16 %v1445, %v1441
  %v1466 = vunpack.c.l.b16 %v1446
  %v1467 = vunpack.c.l.b16 %v1447
  %v1468 = vunpack.c.l.b16 %v1448
  %v1469 = vunpack.c.l.b16 %v1449
  %v1470 = vunpack.c.l.b16 %v1450
  %v1471 = vunpack.c.l.b16 %v1451
  %v1472 = vunpack.c.l.b16 %v1452
  %v1473 = vunpack.c.l.b16 %v1453
  %v1474 = vpack.c.b16 %v1467, %v1466
  %v1475 = vpack.c.b16 %v1469, %v1468
  %v1476 = vpack.c.b16 %v1471, %v1470
  %v1477 = vpack.c.b16 %v1473, %v1472
  %v1479 = vsel %vm1308, %v1474, 0
  %v1482 = vsel %vm1308, %v1475, 0
  %v1485 = vsel %vm1308, %v1476, 0
  %v1488 = vsel %vm1308, %v1477, 0
  %1490 = vmatprep.subr.bf16.mxu0 0
  %1491 = vmatpush1.bf16.msra.mxu0 0
  %1492 = vmatprep.subr.bf16.mxu0 0
  %1493 = vmatpush1.bf16.msra.mxu0 0
  %1494 = vmatprep.subr.bf16.mxu0 0
  %1495 = vmatpush1.bf16.msra.mxu0 0
  %1496 = vmatprep.subr.bf16.mxu0 0
  %1497 = vmatpush1.bf16.msra.mxu0 0
  %1498 = vmatprep.subr.bf16.mxu0 0
  %1499 = vmatpush1.bf16.msra.mxu0 0
  %1500 = vmatprep.subr.bf16.mxu0 0
  %1501 = vmatpush1.bf16.msra.mxu0 0
  %1502 = vmatprep.subr.bf16.mxu0 0
  %1503 = vmatpush1.bf16.msra.mxu0 0
  %1504 = vmatprep.subr.bf16.mxu0 %v1455
  %1505 = vmatpush1.bf16.msra.mxu0 %v1454
  %1506 = vmatprep.subr.bf16.mxu0 0
  %1507 = vmatpush2.bf16.msra.mxu0 0
  %1508 = vmatprep.subr.bf16.mxu0 0
  %1509 = vmatpush2.bf16.msra.mxu0 0
  %1510 = vmatprep.subr.bf16.mxu0 0
  %1511 = vmatpush2.bf16.msra.mxu0 0
  %1512 = vmatprep.subr.bf16.mxu0 0
  %1513 = vmatpush2.bf16.msra.mxu0 0
  %1514 = vmatprep.subr.bf16.mxu0 0
  %1515 = vmatpush2.bf16.msra.mxu0 0
  %1516 = vmatprep.subr.bf16.mxu0 0
  %1517 = vmatpush2.bf16.msra.mxu0 0
  %1518 = vmatprep.subr.bf16.mxu0 0
  %1519 = vmatpush2.bf16.msra.mxu0 0
  %1520 = vmatprep.subr.bf16.mxu0 0
  %1521 = vmatpush2.bf16.msra.mxu0 0
  %1522 = vmatprep.mubr.bf16.mxu0 0
  %1523 = vmatmul.mubr.bf16.gmra.mxu0 %v1479
  %v1524 = vpop.f32.mrf.mxu0
  %v1525 = vadd.f32 %v42, %v1524
  %v1526 = vpop.f32.mrf.mxu0
  %v1527 = vadd.f32 %v43, %v1526
  %v1528 = vpop.f32.mrf.mxu0
  %v1529 = vadd.f32 %v46, %v1528
  %v1530 = vpop.f32.mrf.mxu0
  %v1531 = vadd.f32 %v47, %v1530
  %1532 = vmatprep.mubr.bf16.mxu0 0
  %1533 = vmatmul.mubr.bf16.gmra.mxu0 %v1482
  %v1534 = vpop.f32.mrf.mxu0
  %v1535 = vadd.f32 %v50, %v1534
  %v1536 = vpop.f32.mrf.mxu0
  %v1537 = vadd.f32 %v51, %v1536
  %v1538 = vpop.f32.mrf.mxu0
  %v1539 = vadd.f32 %v54, %v1538
  %v1540 = vpop.f32.mrf.mxu0
  %v1541 = vadd.f32 %v55, %v1540
  %1542 = vmatprep.mubr.bf16.mxu0 0
  %1543 = vmatmul.mubr.bf16.gmra.mxu0 %v1485
  %v1544 = vpop.f32.mrf.mxu0
  %v1545 = vadd.f32 %v58, %v1544
  %v1546 = vpop.f32.mrf.mxu0
  %v1547 = vadd.f32 %v59, %v1546
  %v1548 = vpop.f32.mrf.mxu0
  %v1549 = vadd.f32 %v62, %v1548
  %v1550 = vpop.f32.mrf.mxu0
  %v1551 = vadd.f32 %v63, %v1550
  %1552 = vmatprep.mubr.bf16.mxu0 0
  %1553 = vmatmul.mubr.bf16.gmra.mxu0 %v1488
  %v1554 = vpop.f32.mrf.mxu0
  %v1555 = vadd.f32 %v66, %v1554
  %v1556 = vpop.f32.mrf.mxu0
  %v1557 = vadd.f32 %v67, %v1556
  %v1558 = vpop.f32.mrf.mxu0
  %v1559 = vadd.f32 %v70, %v1558
  %v1560 = vpop.f32.mrf.mxu0
  %v1561 = vadd.f32 %v71, %v1560
  %1562 = vdwg.mxu0
  %1563 = vmatprep.subr.bf16.mxu0 0
  %1564 = vmatpush1.bf16.msra.mxu0 0
  %1565 = vmatprep.subr.bf16.mxu0 0
  %1566 = vmatpush1.bf16.msra.mxu0 0
  %1567 = vmatprep.subr.bf16.mxu0 0
  %1568 = vmatpush1.bf16.msra.mxu0 0
  %1569 = vmatprep.subr.bf16.mxu0 0
  %1570 = vmatpush1.bf16.msra.mxu0 0
  %1571 = vmatprep.subr.bf16.mxu0 0
  %1572 = vmatpush1.bf16.msra.mxu0 0
  %1573 = vmatprep.subr.bf16.mxu0 0
  %1574 = vmatpush1.bf16.msra.mxu0 0
  %1575 = vmatprep.subr.bf16.mxu0 0
  %1576 = vmatpush1.bf16.msra.mxu0 0
  %1577 = vmatprep.subr.bf16.mxu0 %v1457
  %1578 = vmatpush1.bf16.msra.mxu0 %v1456
  %1579 = vmatprep.subr.bf16.mxu0 0
  %1580 = vmatpush2.bf16.msra.mxu0 0
  %1581 = vmatprep.subr.bf16.mxu0 0
  %1582 = vmatpush2.bf16.msra.mxu0 0
  %1583 = vmatprep.subr.bf16.mxu0 0
  %1584 = vmatpush2.bf16.msra.mxu0 0
  %1585 = vmatprep.subr.bf16.mxu0 0
  %1586 = vmatpush2.bf16.msra.mxu0 0
  %1587 = vmatprep.subr.bf16.mxu0 0
  %1588 = vmatpush2.bf16.msra.mxu0 0
  %1589 = vmatprep.subr.bf16.mxu0 0
  %1590 = vmatpush2.bf16.msra.mxu0 0
  %1591 = vmatprep.subr.bf16.mxu0 0
  %1592 = vmatpush2.bf16.msra.mxu0 0
  %1593 = vmatprep.subr.bf16.mxu0 0
  %1594 = vmatpush2.bf16.msra.mxu0 0
  %1595 = vmatprep.mubr.bf16.mxu0 0
  %1596 = vmatmul.mubr.bf16.gmra.mxu0 %v1479
  %v1597 = vpop.f32.mrf.mxu0
  %v1598 = vadd.f32 %v44, %v1597
  %v1599 = vpop.f32.mrf.mxu0
  %v1600 = vadd.f32 %v45, %v1599
  %v1601 = vpop.f32.mrf.mxu0
  %v1602 = vadd.f32 %v48, %v1601
  %v1603 = vpop.f32.mrf.mxu0
  %v1604 = vadd.f32 %v49, %v1603
  %1605 = vmatprep.mubr.bf16.mxu0 0
  %1606 = vmatmul.mubr.bf16.gmra.mxu0 %v1482
  %v1607 = vpop.f32.mrf.mxu0
  %v1608 = vadd.f32 %v52, %v1607
  %v1609 = vpop.f32.mrf.mxu0
  %v1610 = vadd.f32 %v53, %v1609
  %v1611 = vpop.f32.mrf.mxu0
  %v1612 = vadd.f32 %v56, %v1611
  %v1613 = vpop.f32.mrf.mxu0
  %v1614 = vadd.f32 %v57, %v1613
  %1615 = vmatprep.mubr.bf16.mxu0 0
  %1616 = vmatmul.mubr.bf16.gmra.mxu0 %v1485
  %v1617 = vpop.f32.mrf.mxu0
  %v1618 = vadd.f32 %v60, %v1617
  %v1619 = vpop.f32.mrf.mxu0
  %v1620 = vadd.f32 %v61, %v1619
  %v1621 = vpop.f32.mrf.mxu0
  %v1622 = vadd.f32 %v64, %v1621
  %v1623 = vpop.f32.mrf.mxu0
  %v1624 = vadd.f32 %v65, %v1623
  %1625 = vmatprep.mubr.bf16.mxu0 0
  %1626 = vmatmul.mubr.bf16.gmra.mxu0 %v1488
  %v1627 = vpop.f32.mrf.mxu0
  %v1628 = vadd.f32 %v68, %v1627
  %v1629 = vpop.f32.mrf.mxu0
  %v1630 = vadd.f32 %v69, %v1629
  %v1631 = vpop.f32.mrf.mxu0
  %v1632 = vadd.f32 %v72, %v1631
  %v1633 = vpop.f32.mrf.mxu0
  %v1634 = vadd.f32 %v73, %v1633
  %1635 = vdwg.mxu0
  %1636 = vrot.lane.b32.xlu0 %v1525, 127
  %v1637 = vpop.permute.xlu0 %1636
  %1638 = vrot.lane.b32.xlu0 %v1529, 127
  %v1639 = vpop.permute.xlu0 %1638
  %1640 = vrot.lane.b32.xlu0 %v1535, 127
  %v1641 = vpop.permute.xlu0 %1640
  %1642 = vrot.lane.b32.xlu0 %v1539, 127
  %v1643 = vpop.permute.xlu0 %1642
  %1644 = vrot.lane.b32.xlu0 %v1545, 127
  %v1645 = vpop.permute.xlu0 %1644
  %1646 = vrot.lane.b32.xlu0 %v1549, 127
  %v1647 = vpop.permute.xlu0 %1646
  %1648 = vrot.lane.b32.xlu0 %v1555, 127
  %v1649 = vpop.permute.xlu0 %1648
  %1650 = vrot.lane.b32.xlu0 %v1559, 127
  %v1651 = vpop.permute.xlu0 %1650
  %1652 = vrot.lane.b32.xlu0 %v1527, 127
  %v1653 = vpop.permute.xlu0 %1652
  %1654 = vrot.lane.b32.xlu0 %v1531, 127
  %v1655 = vpop.permute.xlu0 %1654
  %1656 = vrot.lane.b32.xlu0 %v1537, 127
  %v1657 = vpop.permute.xlu0 %1656
  %1658 = vrot.lane.b32.xlu0 %v1541, 127
  %v1659 = vpop.permute.xlu0 %1658
  %1660 = vrot.lane.b32.xlu0 %v1547, 127
  %v1661 = vpop.permute.xlu0 %1660
  %1662 = vrot.lane.b32.xlu0 %v1551, 127
  %v1663 = vpop.permute.xlu0 %1662
  %1664 = vrot.lane.b32.xlu0 %v1557, 127
  %v1665 = vpop.permute.xlu0 %1664
  %1666 = vrot.lane.b32.xlu0 %v1561, 127
  %v1667 = vpop.permute.xlu0 %1666
  %1668 = vrot.lane.b32.xlu0 %v1598, 127
  %v1669 = vpop.permute.xlu0 %1668
  %1670 = vrot.lane.b32.xlu0 %v1602, 127
  %v1671 = vpop.permute.xlu0 %1670
  %1672 = vrot.lane.b32.xlu0 %v1608, 127
  %v1673 = vpop.permute.xlu0 %1672
  %1674 = vrot.lane.b32.xlu0 %v1612, 127
  %v1675 = vpop.permute.xlu0 %1674
  %1676 = vrot.lane.b32.xlu0 %v1618, 127
  %v1677 = vpop.permute.xlu0 %1676
  %1678 = vrot.lane.b32.xlu0 %v1622, 127
  %v1679 = vpop.permute.xlu0 %1678
  %1680 = vrot.lane.b32.xlu0 %v1628, 127
  %v1681 = vpop.permute.xlu0 %1680
  %1682 = vrot.lane.b32.xlu0 %v1632, 127
  %v1683 = vpop.permute.xlu0 %1682
  %1684 = vrot.lane.b32.xlu0 %v1600, 127
  %v1685 = vpop.permute.xlu0 %1684
  %1686 = vrot.lane.b32.xlu0 %v1604, 127
  %v1687 = vpop.permute.xlu0 %1686
  %1688 = vrot.lane.b32.xlu0 %v1610, 127
  %v1689 = vpop.permute.xlu0 %1688
  %1690 = vrot.lane.b32.xlu0 %v1614, 127
  %v1691 = vpop.permute.xlu0 %1690
  %1692 = vrot.lane.b32.xlu0 %v1620, 127
  %v1693 = vpop.permute.xlu0 %1692
  %1694 = vrot.lane.b32.xlu0 %v1624, 127
  %v1695 = vpop.permute.xlu0 %1694
  %1696 = vrot.lane.b32.xlu0 %v1630, 127
  %v1697 = vpop.permute.xlu0 %1696
  %1698 = vrot.lane.b32.xlu0 %v1634, 127
  %v1699 = vpop.permute.xlu0 %1698
  %v1700 = vsel %vm789, %v1669, %v1685
  %v1701 = vsel %vm789, %v1671, %v1687
  %v1702 = vsel %vm789, %v1673, %v1689
  %v1703 = vsel %vm789, %v1675, %v1691
  %v1704 = vsel %vm789, %v1677, %v1693
  %v1705 = vsel %vm789, %v1679, %v1695
  %v1706 = vsel %vm789, %v1681, %v1697
  %v1707 = vsel %vm789, %v1683, %v1699
  %v1708 = vsel %vm789, %v1653, %v1669
  %v1709 = vsel %vm789, %v1655, %v1671
  %v1710 = vsel %vm789, %v1657, %v1673
  %v1711 = vsel %vm789, %v1659, %v1675
  %v1712 = vsel %vm789, %v1661, %v1677
  %v1713 = vsel %vm789, %v1663, %v1679
  %v1714 = vsel %vm789, %v1665, %v1681
  %v1715 = vsel %vm789, %v1667, %v1683
  %v1716 = vsel %vm789, %v1637, %v1653
  %v1717 = vsel %vm789, %v1639, %v1655
  %v1718 = vsel %vm789, %v1641, %v1657
  %v1719 = vsel %vm789, %v1643, %v1659
  %v1720 = vsel %vm789, %v1645, %v1661
  %v1721 = vsel %vm789, %v1647, %v1663
  %v1722 = vsel %vm789, %v1649, %v1665
  %v1723 = vsel %vm789, %v1651, %v1667
  %v1724 = vsel %vm789, %v1685, %v1637
  %v1725 = vsel %vm789, %v1687, %v1639
  %v1726 = vsel %vm789, %v1689, %v1641
  %v1727 = vsel %vm789, %v1691, %v1643
  %v1728 = vsel %vm789, %v1693, %v1645
  %v1729 = vsel %vm789, %v1695, %v1647
  %v1730 = vsel %vm789, %v1697, %v1649
  %v1731 = vsel %vm789, %v1699, %v1651
  %1732 = vrot.lane.b32.xlu0 %v1525, 112
  %v1733 = vpop.permute.xlu0 %1732
  %1734 = vrot.lane.b32.xlu0 %v1529, 112
  %v1735 = vpop.permute.xlu0 %1734
  %1736 = vrot.lane.b32.xlu0 %v1535, 112
  %v1737 = vpop.permute.xlu0 %1736
  %1738 = vrot.lane.b32.xlu0 %v1539, 112
  %v1739 = vpop.permute.xlu0 %1738
  %1740 = vrot.lane.b32.xlu0 %v1545, 112
  %v1741 = vpop.permute.xlu0 %1740
  %1742 = vrot.lane.b32.xlu0 %v1549, 112
  %v1743 = vpop.permute.xlu0 %1742
  %1744 = vrot.lane.b32.xlu0 %v1555, 112
  %v1745 = vpop.permute.xlu0 %1744
  %1746 = vrot.lane.b32.xlu0 %v1559, 112
  %v1747 = vpop.permute.xlu0 %1746
  %1748 = vrot.lane.b32.xlu0 %v1527, 112
  %v1749 = vpop.permute.xlu0 %1748
  %1750 = vrot.lane.b32.xlu0 %v1531, 112
  %v1751 = vpop.permute.xlu0 %1750
  %1752 = vrot.lane.b32.xlu0 %v1537, 112
  %v1753 = vpop.permute.xlu0 %1752
  %1754 = vrot.lane.b32.xlu0 %v1541, 112
  %v1755 = vpop.permute.xlu0 %1754
  %1756 = vrot.lane.b32.xlu0 %v1547, 112
  %v1757 = vpop.permute.xlu0 %1756
  %1758 = vrot.lane.b32.xlu0 %v1551, 112
  %v1759 = vpop.permute.xlu0 %1758
  %1760 = vrot.lane.b32.xlu0 %v1557, 112
  %v1761 = vpop.permute.xlu0 %1760
  %1762 = vrot.lane.b32.xlu0 %v1561, 112
  %v1763 = vpop.permute.xlu0 %1762
  %1764 = vrot.lane.b32.xlu0 %v1598, 112
  %v1765 = vpop.permute.xlu0 %1764
  %1766 = vrot.lane.b32.xlu0 %v1602, 112
  %v1767 = vpop.permute.xlu0 %1766
  %1768 = vrot.lane.b32.xlu0 %v1608, 112
  %v1769 = vpop.permute.xlu0 %1768
  %1770 = vrot.lane.b32.xlu0 %v1612, 112
  %v1771 = vpop.permute.xlu0 %1770
  %1772 = vrot.lane.b32.xlu0 %v1618, 112
  %v1773 = vpop.permute.xlu0 %1772
  %1774 = vrot.lane.b32.xlu0 %v1622, 112
  %v1775 = vpop.permute.xlu0 %1774
  %1776 = vrot.lane.b32.xlu0 %v1628, 112
  %v1777 = vpop.permute.xlu0 %1776
  %1778 = vrot.lane.b32.xlu0 %v1632, 112
  %v1779 = vpop.permute.xlu0 %1778
  %1780 = vrot.lane.b32.xlu0 %v1600, 112
  %v1781 = vpop.permute.xlu0 %1780
  %1782 = vrot.lane.b32.xlu0 %v1604, 112
  %v1783 = vpop.permute.xlu0 %1782
  %1784 = vrot.lane.b32.xlu0 %v1610, 112
  %v1785 = vpop.permute.xlu0 %1784
  %1786 = vrot.lane.b32.xlu0 %v1614, 112
  %v1787 = vpop.permute.xlu0 %1786
  %1788 = vrot.lane.b32.xlu0 %v1620, 112
  %v1789 = vpop.permute.xlu0 %1788
  %1790 = vrot.lane.b32.xlu0 %v1624, 112
  %v1791 = vpop.permute.xlu0 %1790
  %1792 = vrot.lane.b32.xlu0 %v1630, 112
  %v1793 = vpop.permute.xlu0 %1792
  %1794 = vrot.lane.b32.xlu0 %v1634, 112
  %v1795 = vpop.permute.xlu0 %1794
  %v1796 = vsel %vm943, %v1765, %v1781
  %v1797 = vsel %vm943, %v1767, %v1783
  %v1798 = vsel %vm943, %v1769, %v1785
  %v1799 = vsel %vm943, %v1771, %v1787
  %v1800 = vsel %vm943, %v1773, %v1789
  %v1801 = vsel %vm943, %v1775, %v1791
  %v1802 = vsel %vm943, %v1777, %v1793
  %v1803 = vsel %vm943, %v1779, %v1795
  %v1804 = vsel %vm943, %v1749, %v1765
  %v1805 = vsel %vm943, %v1751, %v1767
  %v1806 = vsel %vm943, %v1753, %v1769
  %v1807 = vsel %vm943, %v1755, %v1771
  %v1808 = vsel %vm943, %v1757, %v1773
  %v1809 = vsel %vm943, %v1759, %v1775
  %v1810 = vsel %vm943, %v1761, %v1777
  %v1811 = vsel %vm943, %v1763, %v1779
  %v1812 = vsel %vm943, %v1733, %v1749
  %v1813 = vsel %vm943, %v1735, %v1751
  %v1814 = vsel %vm943, %v1737, %v1753
  %v1815 = vsel %vm943, %v1739, %v1755
  %v1816 = vsel %vm943, %v1741, %v1757
  %v1817 = vsel %vm943, %v1743, %v1759
  %v1818 = vsel %vm943, %v1745, %v1761
  %v1819 = vsel %vm943, %v1747, %v1763
  %v1820 = vsel %vm943, %v1781, %v1733
  %v1821 = vsel %vm943, %v1783, %v1735
  %v1822 = vsel %vm943, %v1785, %v1737
  %v1823 = vsel %vm943, %v1787, %v1739
  %v1824 = vsel %vm943, %v1789, %v1741
  %v1825 = vsel %vm943, %v1791, %v1743
  %v1826 = vsel %vm943, %v1793, %v1745
  %v1827 = vsel %vm943, %v1795, %v1747
  %1828 = vrot.lane.b32.xlu0 %v1525, 111
  %v1829 = vpop.permute.xlu0 %1828
  %1830 = vrot.lane.b32.xlu0 %v1529, 111
  %v1831 = vpop.permute.xlu0 %1830
  %1832 = vrot.lane.b32.xlu0 %v1535, 111
  %v1833 = vpop.permute.xlu0 %1832
  %1834 = vrot.lane.b32.xlu0 %v1539, 111
  %v1835 = vpop.permute.xlu0 %1834
  %1836 = vrot.lane.b32.xlu0 %v1545, 111
  %v1837 = vpop.permute.xlu0 %1836
  %1838 = vrot.lane.b32.xlu0 %v1549, 111
  %v1839 = vpop.permute.xlu0 %1838
  %1840 = vrot.lane.b32.xlu0 %v1555, 111
  %v1841 = vpop.permute.xlu0 %1840
  %1842 = vrot.lane.b32.xlu0 %v1559, 111
  %v1843 = vpop.permute.xlu0 %1842
  %1844 = vrot.lane.b32.xlu0 %v1527, 111
  %v1845 = vpop.permute.xlu0 %1844
  %1846 = vrot.lane.b32.xlu0 %v1531, 111
  %v1847 = vpop.permute.xlu0 %1846
  %1848 = vrot.lane.b32.xlu0 %v1537, 111
  %v1849 = vpop.permute.xlu0 %1848
  %1850 = vrot.lane.b32.xlu0 %v1541, 111
  %v1851 = vpop.permute.xlu0 %1850
  %1852 = vrot.lane.b32.xlu0 %v1547, 111
  %v1853 = vpop.permute.xlu0 %1852
  %1854 = vrot.lane.b32.xlu0 %v1551, 111
  %v1855 = vpop.permute.xlu0 %1854
  %1856 = vrot.lane.b32.xlu0 %v1557, 111
  %v1857 = vpop.permute.xlu0 %1856
  %1858 = vrot.lane.b32.xlu0 %v1561, 111
  %v1859 = vpop.permute.xlu0 %1858
  %1860 = vrot.lane.b32.xlu0 %v1598, 111
  %v1861 = vpop.permute.xlu0 %1860
  %1862 = vrot.lane.b32.xlu0 %v1602, 111
  %v1863 = vpop.permute.xlu0 %1862
  %1864 = vrot.lane.b32.xlu0 %v1608, 111
  %v1865 = vpop.permute.xlu0 %1864
  %1866 = vrot.lane.b32.xlu0 %v1612, 111
  %v1867 = vpop.permute.xlu0 %1866
  %1868 = vrot.lane.b32.xlu0 %v1618, 111
  %v1869 = vpop.permute.xlu0 %1868
  %1870 = vrot.lane.b32.xlu0 %v1622, 111
  %v1871 = vpop.permute.xlu0 %1870
  %1872 = vrot.lane.b32.xlu0 %v1628, 111
  %v1873 = vpop.permute.xlu0 %1872
  %1874 = vrot.lane.b32.xlu0 %v1632, 111
  %v1875 = vpop.permute.xlu0 %1874
  %1876 = vrot.lane.b32.xlu0 %v1600, 111
  %v1877 = vpop.permute.xlu0 %1876
  %1878 = vrot.lane.b32.xlu0 %v1604, 111
  %v1879 = vpop.permute.xlu0 %1878
  %1880 = vrot.lane.b32.xlu0 %v1610, 111
  %v1881 = vpop.permute.xlu0 %1880
  %1882 = vrot.lane.b32.xlu0 %v1614, 111
  %v1883 = vpop.permute.xlu0 %1882
  %1884 = vrot.lane.b32.xlu0 %v1620, 111
  %v1885 = vpop.permute.xlu0 %1884
  %1886 = vrot.lane.b32.xlu0 %v1624, 111
  %v1887 = vpop.permute.xlu0 %1886
  %1888 = vrot.lane.b32.xlu0 %v1630, 111
  %v1889 = vpop.permute.xlu0 %1888
  %1890 = vrot.lane.b32.xlu0 %v1634, 111
  %v1891 = vpop.permute.xlu0 %1890
  %v1892 = vsel %vm1020, %v1861, %v1877
  %v1893 = vsel %vm1020, %v1863, %v1879
  %v1894 = vsel %vm1020, %v1865, %v1881
  %v1895 = vsel %vm1020, %v1867, %v1883
  %v1896 = vsel %vm1020, %v1869, %v1885
  %v1897 = vsel %vm1020, %v1871, %v1887
  %v1898 = vsel %vm1020, %v1873, %v1889
  %v1899 = vsel %vm1020, %v1875, %v1891
  %v1900 = vsel %vm1020, %v1845, %v1861
  %v1901 = vsel %vm1020, %v1847, %v1863
  %v1902 = vsel %vm1020, %v1849, %v1865
  %v1903 = vsel %vm1020, %v1851, %v1867
  %v1904 = vsel %vm1020, %v1853, %v1869
  %v1905 = vsel %vm1020, %v1855, %v1871
  %v1906 = vsel %vm1020, %v1857, %v1873
  %v1907 = vsel %vm1020, %v1859, %v1875
  %v1908 = vsel %vm1020, %v1829, %v1845
  %v1909 = vsel %vm1020, %v1831, %v1847
  %v1910 = vsel %vm1020, %v1833, %v1849
  %v1911 = vsel %vm1020, %v1835, %v1851
  %v1912 = vsel %vm1020, %v1837, %v1853
  %v1913 = vsel %vm1020, %v1839, %v1855
  %v1914 = vsel %vm1020, %v1841, %v1857
  %v1915 = vsel %vm1020, %v1843, %v1859
  %v1916 = vsel %vm1020, %v1877, %v1829
  %v1917 = vsel %vm1020, %v1879, %v1831
  %v1918 = vsel %vm1020, %v1881, %v1833
  %v1919 = vsel %vm1020, %v1883, %v1835
  %v1920 = vsel %vm1020, %v1885, %v1837
  %v1921 = vsel %vm1020, %v1887, %v1839
  %v1922 = vsel %vm1020, %v1889, %v1841
  %v1923 = vsel %vm1020, %v1891, %v1843
  %v1924 = vmax.f32 %v1525, %v1716
  %v1925 = vmax.f32 %v1527, %v1708
  %v1926 = vmax.f32 %v1598, %v1700
  %v1927 = vmax.f32 %v1600, %v1724
  %v1928 = vmax.f32 %v1529, %v1717
  %v1929 = vmax.f32 %v1531, %v1709
  %v1930 = vmax.f32 %v1602, %v1701
  %v1931 = vmax.f32 %v1604, %v1725
  %v1932 = vmax.f32 %v1535, %v1718
  %v1933 = vmax.f32 %v1537, %v1710
  %v1934 = vmax.f32 %v1608, %v1702
  %v1935 = vmax.f32 %v1610, %v1726
  %v1936 = vmax.f32 %v1539, %v1719
  %v1937 = vmax.f32 %v1541, %v1711
  %v1938 = vmax.f32 %v1612, %v1703
  %v1939 = vmax.f32 %v1614, %v1727
  %v1940 = vmax.f32 %v1545, %v1720
  %v1941 = vmax.f32 %v1547, %v1712
  %v1942 = vmax.f32 %v1618, %v1704
  %v1943 = vmax.f32 %v1620, %v1728
  %v1944 = vmax.f32 %v1549, %v1721
  %v1945 = vmax.f32 %v1551, %v1713
  %v1946 = vmax.f32 %v1622, %v1705
  %v1947 = vmax.f32 %v1624, %v1729
  %v1948 = vmax.f32 %v1555, %v1722
  %v1949 = vmax.f32 %v1557, %v1714
  %v1950 = vmax.f32 %v1628, %v1706
  %v1951 = vmax.f32 %v1630, %v1730
  %v1952 = vmax.f32 %v1559, %v1723
  %v1953 = vmax.f32 %v1561, %v1715
  %v1954 = vmax.f32 %v1632, %v1707
  %v1955 = vmax.f32 %v1634, %v1731
  %v1956 = vmax.f32 %v1812, %v1908
  %v1957 = vmax.f32 %v1804, %v1900
  %v1958 = vmax.f32 %v1796, %v1892
  %v1959 = vmax.f32 %v1820, %v1916
  %v1960 = vmax.f32 %v1813, %v1909
  %v1961 = vmax.f32 %v1805, %v1901
  %v1962 = vmax.f32 %v1797, %v1893
  %v1963 = vmax.f32 %v1821, %v1917
  %v1964 = vmax.f32 %v1814, %v1910
  %v1965 = vmax.f32 %v1806, %v1902
  %v1966 = vmax.f32 %v1798, %v1894
  %v1967 = vmax.f32 %v1822, %v1918
  %v1968 = vmax.f32 %v1815, %v1911
  %v1969 = vmax.f32 %v1807, %v1903
  %v1970 = vmax.f32 %v1799, %v1895
  %v1971 = vmax.f32 %v1823, %v1919
  %v1972 = vmax.f32 %v1816, %v1912
  %v1973 = vmax.f32 %v1808, %v1904
  %v1974 = vmax.f32 %v1800, %v1896
  %v1975 = vmax.f32 %v1824, %v1920
  %v1976 = vmax.f32 %v1817, %v1913
  %v1977 = vmax.f32 %v1809, %v1905
  %v1978 = vmax.f32 %v1801, %v1897
  %v1979 = vmax.f32 %v1825, %v1921
  %v1980 = vmax.f32 %v1818, %v1914
  %v1981 = vmax.f32 %v1810, %v1906
  %v1982 = vmax.f32 %v1802, %v1898
  %v1983 = vmax.f32 %v1826, %v1922
  %v1984 = vmax.f32 %v1819, %v1915
  %v1985 = vmax.f32 %v1811, %v1907
  %v1986 = vmax.f32 %v1803, %v1899
  %v1987 = vmax.f32 %v1827, %v1923
  %v1988 = vmax.f32 %v1924, %v1956
  %v1989 = vmax.f32 %v1925, %v1957
  %v1990 = vmax.f32 %v1926, %v1958
  %v1991 = vmax.f32 %v1927, %v1959
  %v1992 = vmax.f32 %v1928, %v1960
  %v1993 = vmax.f32 %v1929, %v1961
  %v1994 = vmax.f32 %v1930, %v1962
  %v1995 = vmax.f32 %v1931, %v1963
  %v1996 = vmax.f32 %v1932, %v1964
  %v1997 = vmax.f32 %v1933, %v1965
  %v1998 = vmax.f32 %v1934, %v1966
  %v1999 = vmax.f32 %v1935, %v1967
  %v2000 = vmax.f32 %v1936, %v1968
  %v2001 = vmax.f32 %v1937, %v1969
  %v2002 = vmax.f32 %v1938, %v1970
  %v2003 = vmax.f32 %v1939, %v1971
  %v2004 = vmax.f32 %v1940, %v1972
  %v2005 = vmax.f32 %v1941, %v1973
  %v2006 = vmax.f32 %v1942, %v1974
  %v2007 = vmax.f32 %v1943, %v1975
  %v2008 = vmax.f32 %v1944, %v1976
  %v2009 = vmax.f32 %v1945, %v1977
  %v2010 = vmax.f32 %v1946, %v1978
  %v2011 = vmax.f32 %v1947, %v1979
  %v2012 = vmax.f32 %v1948, %v1980
  %v2013 = vmax.f32 %v1949, %v1981
  %v2014 = vmax.f32 %v1950, %v1982
  %v2015 = vmax.f32 %v1951, %v1983
  %v2016 = vmax.f32 %v1952, %v1984
  %v2017 = vmax.f32 %v1953, %v1985
  %v2018 = vmax.f32 %v1954, %v1986
  %v2019 = vmax.f32 %v1955, %v1987
  %v2020 = vpack.c.bf16 %v1992, %v1988
  %v2021 = vpack.c.bf16 %v1993, %v1989
  %v2022 = vpack.c.bf16 %v1994, %v1990
  %v2023 = vpack.c.bf16 %v1995, %v1991
  %v2024 = vpack.c.bf16 %v2000, %v1996
  %v2025 = vpack.c.bf16 %v2001, %v1997
  %v2026 = vpack.c.bf16 %v2002, %v1998
  %v2027 = vpack.c.bf16 %v2003, %v1999
  %v2028 = vpack.c.bf16 %v2008, %v2004
  %v2029 = vpack.c.bf16 %v2009, %v2005
  %v2030 = vpack.c.bf16 %v2010, %v2006
  %v2031 = vpack.c.bf16 %v2011, %v2007
  %v2032 = vpack.c.bf16 %v2016, %v2012
  %v2033 = vpack.c.bf16 %v2017, %v2013
  %v2034 = vpack.c.bf16 %v2018, %v2014
  %v2035 = vpack.c.bf16 %v2019, %v2015
  %v2036 = vld [vmem:[%s11] sm:$0xf]
  %v2037 = vld [vmem:[%s11 + $0x4] sm:$0xf]
  %v2038 = vld [vmem:[%s11 + $0x8] sm:$0xf]
  %v2039 = vld [vmem:[%s11 + $0xc] sm:$0xf]
  %v2040 = vld [vmem:[%s11 + $0x10] sm:$0xf]
  %v2041 = vld [vmem:[%s11 + $0x14] sm:$0xf]
  %v2042 = vld [vmem:[%s11 + $0x18] sm:$0xf]
  %v2043 = vld [vmem:[%s11 + $0x1c] sm:$0xf]
  %v2044 = vld [vmem:[%s11 + $0x20] sm:$0xf]
  %v2045 = vld [vmem:[%s11 + $0x24] sm:$0xf]
  %v2046 = vld [vmem:[%s11 + $0x28] sm:$0xf]
  %v2047 = vld [vmem:[%s11 + $0x2c] sm:$0xf]
  %v2048 = vld [vmem:[%s11 + $0x30] sm:$0xf]
  %v2049 = vld [vmem:[%s11 + $0x34] sm:$0xf]
  %v2050 = vld [vmem:[%s11 + $0x38] sm:$0xf]
  %v2051 = vld [vmem:[%s11 + $0x3c] sm:$0xf]
  %v2052 = vld [vmem:[%s11 + $0x40] sm:$0xf]
  %v2053 = vld [vmem:[%s11 + $0x44] sm:$0xf]
  %v2054 = vld [vmem:[%s11 + $0x48] sm:$0xf]
  %v2055 = vld [vmem:[%s11 + $0x4c] sm:$0xf]
  %v2056 = vld [vmem:[%s11 + $0x50] sm:$0xf]
  %v2057 = vld [vmem:[%s11 + $0x54] sm:$0xf]
  %v2058 = vld [vmem:[%s11 + $0x58] sm:$0xf]
  %v2059 = vld [vmem:[%s11 + $0x5c] sm:$0xf]
  %v2060 = vld [vmem:[%s11 + $0x60] sm:$0xf]
  %v2061 = vld [vmem:[%s11 + $0x64] sm:$0xf]
  %v2062 = vld [vmem:[%s11 + $0x68] sm:$0xf]
  %v2063 = vld [vmem:[%s11 + $0x6c] sm:$0xf]
  %v2064 = vld [vmem:[%s11 + $0x70] sm:$0xf]
  %v2065 = vld [vmem:[%s11 + $0x74] sm:$0xf]
  %v2066 = vld [vmem:[%s11 + $0x78] sm:$0xf]
  %v2067 = vld [vmem:[%s11 + $0x7c] sm:$0xf]
  %v2068 = vld [vmem:[%s11 + $0x80] sm:$0xf]
  %v2069 = vld [vmem:[%s11 + $0x84] sm:$0xf]
  %v2070 = vld [vmem:[%s11 + $0x88] sm:$0xf]
  %v2071 = vld [vmem:[%s11 + $0x8c] sm:$0xf]
  %v2072 = vld [vmem:[%s11 + $0x90] sm:$0xf]
  %v2073 = vld [vmem:[%s11 + $0x94] sm:$0xf]
  %v2074 = vld [vmem:[%s11 + $0x98] sm:$0xf]
  %v2075 = vld [vmem:[%s11 + $0x9c] sm:$0xf]
  %v2076 = vld [vmem:[%s11 + $0xa0] sm:$0xf]
  %v2077 = vld [vmem:[%s11 + $0xa4] sm:$0xf]
  %v2078 = vld [vmem:[%s11 + $0xa8] sm:$0xf]
  %v2079 = vld [vmem:[%s11 + $0xac] sm:$0xf]
  %v2080 = vld [vmem:[%s11 + $0xb0] sm:$0xf]
  %v2081 = vld [vmem:[%s11 + $0xb4] sm:$0xf]
  %v2082 = vld [vmem:[%s11 + $0xb8] sm:$0xf]
  %v2083 = vld [vmem:[%s11 + $0xbc] sm:$0xf]
  %v2084 = vld [vmem:[%s11 + $0xc0] sm:$0xf]
  %v2085 = vld [vmem:[%s11 + $0xc4] sm:$0xf]
  %v2086 = vld [vmem:[%s11 + $0xc8] sm:$0xf]
  %v2087 = vld [vmem:[%s11 + $0xcc] sm:$0xf]
  %v2088 = vld [vmem:[%s11 + $0xd0] sm:$0xf]
  %v2089 = vld [vmem:[%s11 + $0xd4] sm:$0xf]
  %v2090 = vld [vmem:[%s11 + $0xd8] sm:$0xf]
  %v2091 = vld [vmem:[%s11 + $0xdc] sm:$0xf]
  %v2092 = vld [vmem:[%s11 + $0xe0] sm:$0xf]
  %v2093 = vld [vmem:[%s11 + $0xe4] sm:$0xf]
  %v2094 = vld [vmem:[%s11 + $0xe8] sm:$0xf]
  %v2095 = vld [vmem:[%s11 + $0xec] sm:$0xf]
  %v2096 = vld [vmem:[%s11 + $0xf0] sm:$0xf]
  %v2097 = vld [vmem:[%s11 + $0xf4] sm:$0xf]
  %v2098 = vld [vmem:[%s11 + $0xf8] sm:$0xf]
  %v2099 = vld [vmem:[%s11 + $0xfc] sm:$0xf]
  %v2164 = vunpack.c.l.b16 %v2036
  %v2165 = vunpack.c.l.b16 %v2037
  %v2166 = vunpack.c.l.b16 %v2038
  %v2167 = vunpack.c.l.b16 %v2039
  %v2168 = vunpack.c.l.b16 %v2040
  %v2169 = vunpack.c.l.b16 %v2041
  %v2170 = vunpack.c.l.b16 %v2042
  %v2171 = vunpack.c.l.b16 %v2043
  %v2172 = vunpack.c.l.b16 %v2044
  %v2173 = vunpack.c.l.b16 %v2045
  %v2174 = vunpack.c.l.b16 %v2046
  %v2175 = vunpack.c.l.b16 %v2047
  %v2176 = vunpack.c.l.b16 %v2048
  %v2177 = vunpack.c.l.b16 %v2049
  %v2178 = vunpack.c.l.b16 %v2050
  %v2179 = vunpack.c.l.b16 %v2051
  %v2180 = vunpack.c.l.b16 %v2052
  %v2181 = vunpack.c.l.b16 %v2053
  %v2182 = vunpack.c.l.b16 %v2054
  %v2183 = vunpack.c.l.b16 %v2055
  %v2184 = vunpack.c.l.b16 %v2056
  %v2185 = vunpack.c.l.b16 %v2057
  %v2186 = vunpack.c.l.b16 %v2058
  %v2187 = vunpack.c.l.b16 %v2059
  %v2188 = vunpack.c.l.b16 %v2060
  %v2189 = vunpack.c.l.b16 %v2061
  %v2190 = vunpack.c.l.b16 %v2062
  %v2191 = vunpack.c.l.b16 %v2063
  %v2192 = vunpack.c.l.b16 %v2064
  %v2193 = vunpack.c.l.b16 %v2065
  %v2194 = vunpack.c.l.b16 %v2066
  %v2195 = vunpack.c.l.b16 %v2067
  %v2196 = vunpack.c.l.b16 %v2068
  %v2197 = vunpack.c.l.b16 %v2069
  %v2198 = vunpack.c.l.b16 %v2070
  %v2199 = vunpack.c.l.b16 %v2071
  %v2200 = vunpack.c.l.b16 %v2072
  %v2201 = vunpack.c.l.b16 %v2073
  %v2202 = vunpack.c.l.b16 %v2074
  %v2203 = vunpack.c.l.b16 %v2075
  %v2204 = vunpack.c.l.b16 %v2076
  %v2205 = vunpack.c.l.b16 %v2077
  %v2206 = vunpack.c.l.b16 %v2078
  %v2207 = vunpack.c.l.b16 %v2079
  %v2208 = vunpack.c.l.b16 %v2080
  %v2209 = vunpack.c.l.b16 %v2081
  %v2210 = vunpack.c.l.b16 %v2082
  %v2211 = vunpack.c.l.b16 %v2083
  %v2212 = vunpack.c.l.b16 %v2084
  %v2213 = vunpack.c.l.b16 %v2085
  %v2214 = vunpack.c.l.b16 %v2086
  %v2215 = vunpack.c.l.b16 %v2087
  %v2216 = vunpack.c.l.b16 %v2088
  %v2217 = vunpack.c.l.b16 %v2089
  %v2218 = vunpack.c.l.b16 %v2090
  %v2219 = vunpack.c.l.b16 %v2091
  %v2220 = vunpack.c.l.b16 %v2092
  %v2221 = vunpack.c.l.b16 %v2093
  %v2222 = vunpack.c.l.b16 %v2094
  %v2223 = vunpack.c.l.b16 %v2095
  %v2224 = vunpack.c.l.b16 %v2096
  %v2225 = vunpack.c.l.b16 %v2097
  %v2226 = vunpack.c.l.b16 %v2098
  %v2227 = vunpack.c.l.b16 %v2099
  %v2228 = vpack.c.b16 %v2165, %v2164
  %v2229 = vpack.c.b16 %v2167, %v2166
  %v2230 = vpack.c.b16 %v2169, %v2168
  %v2231 = vpack.c.b16 %v2171, %v2170
  %v2232 = vpack.c.b16 %v2173, %v2172
  %v2233 = vpack.c.b16 %v2175, %v2174
  %v2234 = vpack.c.b16 %v2177, %v2176
  %v2235 = vpack.c.b16 %v2179, %v2178
  %v2236 = vpack.c.b16 %v2181, %v2180
  %v2237 = vpack.c.b16 %v2183, %v2182
  %v2238 = vpack.c.b16 %v2185, %v2184
  %v2239 = vpack.c.b16 %v2187, %v2186
  %v2240 = vpack.c.b16 %v2189, %v2188
  %v2241 = vpack.c.b16 %v2191, %v2190
  %v2242 = vpack.c.b16 %v2193, %v2192
  %v2243 = vpack.c.b16 %v2195, %v2194
  %v2244 = vpack.c.b16 %v2197, %v2196
  %v2245 = vpack.c.b16 %v2199, %v2198
  %v2246 = vpack.c.b16 %v2201, %v2200
  %v2247 = vpack.c.b16 %v2203, %v2202
  %v2248 = vpack.c.b16 %v2205, %v2204
  %v2249 = vpack.c.b16 %v2207, %v2206
  %v2250 = vpack.c.b16 %v2209, %v2208
  %v2251 = vpack.c.b16 %v2211, %v2210
  %v2252 = vpack.c.b16 %v2213, %v2212
  %v2253 = vpack.c.b16 %v2215, %v2214
  %v2254 = vpack.c.b16 %v2217, %v2216
  %v2255 = vpack.c.b16 %v2219, %v2218
  %v2256 = vpack.c.b16 %v2221, %v2220
  %v2257 = vpack.c.b16 %v2223, %v2222
  %v2258 = vpack.c.b16 %v2225, %v2224
  %v2259 = vpack.c.b16 %v2227, %v2226
  %2292 = vmatprep.subr.bf16.mxu0 0
  %2293 = vmatpush1.bf16.msra.mxu0 %v2235
  %2294 = vmatprep.subr.bf16.mxu0 0
  %2295 = vmatpush1.bf16.msra.mxu0 %v2234
  %2296 = vmatprep.subr.bf16.mxu0 0
  %2297 = vmatpush1.bf16.msra.mxu0 %v2233
  %2298 = vmatprep.subr.bf16.mxu0 0
  %2299 = vmatpush1.bf16.msra.mxu0 %v2232
  %2300 = vmatprep.subr.bf16.mxu0 0
  %2301 = vmatpush1.bf16.msra.mxu0 %v2231
  %2302 = vmatprep.subr.bf16.mxu0 0
  %2303 = vmatpush1.bf16.msra.mxu0 %v2230
  %2304 = vmatprep.subr.bf16.mxu0 0
  %2305 = vmatpush1.bf16.msra.mxu0 %v2229
  %2306 = vmatprep.subr.bf16.mxu0 0
  %2307 = vmatpush1.bf16.msra.mxu0 %v2228
  %2308 = vmatprep.subr.bf16.mxu0 0
  %2309 = vmatpush2.bf16.msra.mxu0 %v2243
  %2310 = vmatprep.subr.bf16.mxu0 0
  %2311 = vmatpush2.bf16.msra.mxu0 %v2242
  %2312 = vmatprep.subr.bf16.mxu0 0
  %2313 = vmatpush2.bf16.msra.mxu0 %v2241
  %2314 = vmatprep.subr.bf16.mxu0 0
  %2315 = vmatpush2.bf16.msra.mxu0 %v2240
  %2316 = vmatprep.subr.bf16.mxu0 0
  %2317 = vmatpush2.bf16.msra.mxu0 %v2239
  %2318 = vmatprep.subr.bf16.mxu0 0
  %2319 = vmatpush2.bf16.msra.mxu0 %v2238
  %2320 = vmatprep.subr.bf16.mxu0 0
  %2321 = vmatpush2.bf16.msra.mxu0 %v2237
  %2322 = vmatprep.subr.bf16.mxu0 0
  %2323 = vmatpush2.bf16.msra.mxu0 %v2236
  %2324 = vmatprep.mubr.bf16.mxu0 %v2021
  %2325 = vmatmul.mubr.bf16.gmra.mxu0 %v2020
  %v2326 = vpop.f32.mrf.mxu0
  %v2327 = vadd.f32 0.0, %v2326
  %v2328 = vpop.f32.mrf.mxu0
  %v2329 = vpop.f32.mrf.mxu0
  %v2330 = vadd.f32 0.0, %v2329
  %v2331 = vpop.f32.mrf.mxu0
  %2332 = vmatprep.mubr.bf16.mxu0 %v2025
  %2333 = vmatmul.mubr.bf16.gmra.mxu0 %v2024
  %v2334 = vpop.f32.mrf.mxu0
  %v2335 = vadd.f32 0.0, %v2334
  %v2336 = vpop.f32.mrf.mxu0
  %v2337 = vpop.f32.mrf.mxu0
  %v2338 = vadd.f32 0.0, %v2337
  %v2339 = vpop.f32.mrf.mxu0
  %2340 = vmatprep.mubr.bf16.mxu0 %v2029
  %2341 = vmatmul.mubr.bf16.gmra.mxu0 %v2028
  %v2342 = vpop.f32.mrf.mxu0
  %v2343 = vadd.f32 0.0, %v2342
  %v2344 = vpop.f32.mrf.mxu0
  %v2345 = vpop.f32.mrf.mxu0
  %v2346 = vadd.f32 0.0, %v2345
  %v2347 = vpop.f32.mrf.mxu0
  %2348 = vmatprep.mubr.bf16.mxu0 %v2033
  %2349 = vmatmul.mubr.bf16.gmra.mxu0 %v2032
  %v2350 = vpop.f32.mrf.mxu0
  %v2351 = vadd.f32 0.0, %v2350
  %v2352 = vpop.f32.mrf.mxu0
  %v2353 = vpop.f32.mrf.mxu0
  %v2354 = vadd.f32 0.0, %v2353
  %v2355 = vpop.f32.mrf.mxu0
  %2356 = vdwg.mxu0
  %2357 = vmatprep.subr.bf16.mxu0 0
  %2358 = vmatpush1.bf16.msra.mxu0 %v2251
  %2359 = vmatprep.subr.bf16.mxu0 0
  %2360 = vmatpush1.bf16.msra.mxu0 %v2250
  %2361 = vmatprep.subr.bf16.mxu0 0
  %2362 = vmatpush1.bf16.msra.mxu0 %v2249
  %2363 = vmatprep.subr.bf16.mxu0 0
  %2364 = vmatpush1.bf16.msra.mxu0 %v2248
  %2365 = vmatprep.subr.bf16.mxu0 0
  %2366 = vmatpush1.bf16.msra.mxu0 %v2247
  %2367 = vmatprep.subr.bf16.mxu0 0
  %2368 = vmatpush1.bf16.msra.mxu0 %v2246
  %2369 = vmatprep.subr.bf16.mxu0 0
  %2370 = vmatpush1.bf16.msra.mxu0 %v2245
  %2371 = vmatprep.subr.bf16.mxu0 0
  %2372 = vmatpush1.bf16.msra.mxu0 %v2244
  %2373 = vmatprep.subr.bf16.mxu0 0
  %2374 = vmatpush2.bf16.msra.mxu0 %v2259
  %2375 = vmatprep.subr.bf16.mxu0 0
  %2376 = vmatpush2.bf16.msra.mxu0 %v2258
  %2377 = vmatprep.subr.bf16.mxu0 0
  %2378 = vmatpush2.bf16.msra.mxu0 %v2257
  %2379 = vmatprep.subr.bf16.mxu0 0
  %2380 = vmatpush2.bf16.msra.mxu0 %v2256
  %2381 = vmatprep.subr.bf16.mxu0 0
  %2382 = vmatpush2.bf16.msra.mxu0 %v2255
  %2383 = vmatprep.subr.bf16.mxu0 0
  %2384 = vmatpush2.bf16.msra.mxu0 %v2254
  %2385 = vmatprep.subr.bf16.mxu0 0
  %2386 = vmatpush2.bf16.msra.mxu0 %v2253
  %2387 = vmatprep.subr.bf16.mxu0 0
  %2388 = vmatpush2.bf16.msra.mxu0 %v2252
  %2389 = vmatprep.mubr.bf16.mxu0 %v2023
  %2390 = vmatmul.mubr.bf16.gmra.mxu0 %v2022
  %v2391 = vpop.f32.mrf.mxu0
  %v2392 = vadd.f32 %v2327, %v2391
  %v2393 = vpop.f32.mrf.mxu0
  %v2394 = vpop.f32.mrf.mxu0
  %v2395 = vadd.f32 %v2330, %v2394
  %v2396 = vpop.f32.mrf.mxu0
  %2397 = vmatprep.mubr.bf16.mxu0 %v2027
  %2398 = vmatmul.mubr.bf16.gmra.mxu0 %v2026
  %v2399 = vpop.f32.mrf.mxu0
  %v2400 = vadd.f32 %v2335, %v2399
  %v2401 = vpop.f32.mrf.mxu0
  %v2402 = vpop.f32.mrf.mxu0
  %v2403 = vadd.f32 %v2338, %v2402
  %v2404 = vpop.f32.mrf.mxu0
  %2405 = vmatprep.mubr.bf16.mxu0 %v2031
  %2406 = vmatmul.mubr.bf16.gmra.mxu0 %v2030
  %v2407 = vpop.f32.mrf.mxu0
  %v2408 = vadd.f32 %v2343, %v2407
  %v2409 = vpop.f32.mrf.mxu0
  %v2410 = vpop.f32.mrf.mxu0
  %v2411 = vadd.f32 %v2346, %v2410
  %v2412 = vpop.f32.mrf.mxu0
  %2413 = vmatprep.mubr.bf16.mxu0 %v2035
  %2414 = vmatmul.mubr.bf16.gmra.mxu0 %v2034
  %v2415 = vpop.f32.mrf.mxu0
  %v2416 = vadd.f32 %v2351, %v2415
  %v2417 = vpop.f32.mrf.mxu0
  %v2418 = vpop.f32.mrf.mxu0
  %v2419 = vadd.f32 %v2354, %v2418
  %v2420 = vpop.f32.mrf.mxu0
  %2421 = vdwg.mxu0
  %2422 = vst [vmem:[%s12] sm:$0xff] %v2392
  %2423 = vst [vmem:[%s12 + $0x8] sm:$0xff] %v2395
  %2424 = vst [vmem:[%s12 + $0x10] sm:$0xff] %v2400
  %2425 = vst [vmem:[%s12 + $0x18] sm:$0xff] %v2403
  %2426 = vst [vmem:[%s12 + $0x20] sm:$0xff] %v2408
  %2427 = vst [vmem:[%s12 + $0x28] sm:$0xff] %v2411
  %2428 = vst [vmem:[%s12 + $0x30] sm:$0xff] %v2416
  %2429 = vst [vmem:[%s12 + $0x38] sm:$0xff] %v2419
  // Predicated region
  $region50: #{down_unit_forward.3} parent=0 // pred_check
    _
  $region51: #{down_unit_forward.3} parent=0 // pred_check_branch
    %2431 = sbr.rel (0) target = $region53
  $region52: #{down_unit_forward.3} parent=0 // pred_region
    _
  $region53: #{down_unit_forward.3} parent=0 // pred_fallthru
    _
  // Predicated region
  $region54: #{down_unit_forward.3} parent=0 // pred_check
    _
  $region55: #{down_unit_forward.3} parent=0 // pred_check_branch
    %2433 = sbr.rel (0) target = $region57
  $region56: #{down_unit_forward.3} parent=0 // pred_region
    _
  $region57: #{down_unit_forward.3} parent=0 // pred_fallthru
    _

</llo_original>
